<compile_context>
chip_gen: v7x
topology: tpu7x:2x2x1
jax: 0.10.0
libtpu: 0.0.40
codegen_flags: <defaults>
</compile_context>

<pallas_src>
import functools
import math

import jax
import jax.numpy as jnp
from jax.experimental import pallas as pl
from jax.experimental.pallas import tpu as pltpu


# ---------------------------------------------------------------------------
# helpers
# ---------------------------------------------------------------------------

def _pick_tile(dim, candidates):
    """Largest candidate tile dividing `dim`; falls back to the full dim
    (full-dim blocks are exempt from the (8,128) divisibility rule)."""
    for c in candidates:
        if dim % c == 0:
            return c
    return dim


def _gelu_tanh(x):
    # TODO(synk): PyTorch nn.GELU() defaults to the exact erf form; the tanh
    # approximation (max abs err ~1e-3) keeps the kernel on VPU/EUP-only ops.
    return 0.5 * x * (1.0 + jnp.tanh(0.7978845608028654 * (x + 0.044715 * x * x * x)))


# ---------------------------------------------------------------------------
# generic fused matmul kernel: y = act(LN?(x) @ w + b) + residual
# (bf16 MXU inputs, f32 accumulator, f32 epilogue)
# ---------------------------------------------------------------------------

def _make_linear_kernel(has_ln, has_bias, has_res, activation, eps):
    def kernel(*refs):
        it = iter(refs)
        x_ref = next(it)
        w_ref = next(it)
        g_ref = beta_ref = bias_ref = res_ref = None
        if has_ln:
            g_ref = next(it)
            beta_ref = next(it)
        if has_bias:
            bias_ref = next(it)
        if has_res:
            res_ref = next(it)
        o_ref = next(it)
        acc_ref = next(it)

        @pl.when(pl.program_id(2) == 0)
        def _init():
            acc_ref[...] = jnp.zeros_like(acc_ref)

        if has_ln:
            # LayerNorm fused as a prologue (requires tk == K, enforced by wrapper).
            xf = x_ref[...].astype(jnp.float32)
            mean = jnp.mean(xf, axis=-1, keepdims=True)
            xc = xf - mean
            var = jnp.mean(xc * xc, axis=-1, keepdims=True)
            xf = xc * jax.lax.rsqrt(var + eps)
            xf = xf * g_ref[...].astype(jnp.float32) + beta_ref[...].astype(jnp.float32)
            x_mx = xf.astype(jnp.bfloat16)
        else:
            x_mx = x_ref[...].astype(jnp.bfloat16)

        acc_ref[...] += jnp.dot(x_mx, w_ref[...].astype(jnp.bfloat16),
                                preferred_element_type=jnp.float32)

        @pl.when(pl.program_id(2) == pl.num_programs(2) - 1)
        def _finalize():
            y = acc_ref[...]
            if has_bias:
                y = y + bias_ref[...].astype(jnp.float32)
            if activation == "gelu":
                y = _gelu_tanh(y)
            if has_res:
                y = y + res_ref[...].astype(jnp.float32)
            o_ref[...] = y.astype(o_ref.dtype)

    return kernel


def linear_pallas(x, w, b=None, *, activation=None, residual=None, ln=None, ln_eps=1e-5):
    """x: (M, K); w: (K, N); b: (1, N)|None; residual: (M, N)|None;
    ln: (gamma(1,K), beta(1,K))|None -> LayerNorm fused before the matmul."""
    M, K = x.shape
    K2, N = w.shape
    assert K == K2
    if b is not None:
        assert b.shape == (1, N)
    if residual is not None:
        assert residual.shape == (M, N)

    tm = _pick_tile(M, (512, 256, 128))
    tn = _pick_tile(N, (1024, 512, 256, 128))
    # The fused LayerNorm reduces over K, so it needs the whole row in one block.
    tk = K if ln is not None else _pick_tile(K, (1024, 512, 256, 128))

    in_specs = [
        pl.BlockSpec((tm, tk), lambda i, j, k: (i, k)),
        pl.BlockSpec((tk, tn), lambda i, j, k: (k, j)),
    ]
    args = [x, w]
    if ln is not None:
        g, beta = ln
        assert g.shape == (1, K) and beta.shape == (1, K)
        in_specs.append(pl.BlockSpec((1, tk), lambda i, j, k: (0, k)))
        in_specs.append(pl.BlockSpec((1, tk), lambda i, j, k: (0, k)))
        args += [g, beta]
    if b is not None:
        in_specs.append(pl.BlockSpec((1, tn), lambda i, j, k: (0, j)))
        args.append(b)
    if residual is not None:
        in_specs.append(pl.BlockSpec((tm, tn), lambda i, j, k: (i, j)))
        args.append(residual)

    kernel = _make_linear_kernel(ln is not None, b is not None,
                                 residual is not None, activation, ln_eps)

    return pl.pallas_call(
        kernel,
        out_shape=jax.ShapeDtypeStruct((M, N), x.dtype),
        grid_spec=pltpu.PrefetchScalarGridSpec(
            num_scalar_prefetch=0,
            grid=(M // tm, N // tn, K // tk),
            in_specs=in_specs,
            out_specs=pl.BlockSpec((tm, tn), lambda i, j, k: (i, j)),
            scratch_shapes=[pltpu.VMEM((tm, tn), jnp.float32)],
        ),
        compiler_params=pltpu.CompilerParams(
            dimension_semantics=("parallel", "parallel", "arbitrary"),
            vmem_limit_bytes=64 * 1024 * 1024),
    )(*args)


# ---------------------------------------------------------------------------
# fused attention: reads q/k/v straight from the (B*N_pad, 3*inner) qkv buffer,
# grid over batch, heads split in-kernel; padded key rows are masked.
# ---------------------------------------------------------------------------

def _attention_kernel(qkv_ref, o_ref, *, heads, dim_head, scale, n_real):
    inner = heads * dim_head
    n_pad = qkv_ref.shape[0]
    key_mask = jax.lax.broadcasted_iota(jnp.int32, (1, n_pad), 1) < n_real
    neg = jnp.float32(-1e30)
    for h in range(heads):  # static unroll over heads (small)
        q = qkv_ref[:, h * dim_head:(h + 1) * dim_head].astype(jnp.bfloat16)
        k = qkv_ref[:, inner + h * dim_head:inner + (h + 1) * dim_head].astype(jnp.bfloat16)
        v = qkv_ref[:, 2 * inner + h * dim_head:2 * inner + (h + 1) * dim_head].astype(jnp.bfloat16)
        # q @ k^T via dot_general (contraction on d) -> no explicit K transpose.
        s = jax.lax.dot_general(q, k, (((1,), (1,)), ((), ())),
                                preferred_element_type=jnp.float32) * scale
        s = jnp.where(key_mask, s, neg)               # mask padded keys
        m = jnp.max(s, axis=-1, keepdims=True)
        p = jnp.exp(s - m)
        denom = jnp.sum(p, axis=-1, keepdims=True)
        p = p * pl.reciprocal(denom, approx=True)     # EUP slot, not a VPU divide
        o = jnp.dot(p.astype(jnp.bfloat16), v, preferred_element_type=jnp.float32)
        o_ref[:, h * dim_head:(h + 1) * dim_head] = o.astype(o_ref.dtype)
    # TODO(synk): for long sequences replace with a KV-tiled flash-style kernel.


def attention_pallas(qkv, *, batch, n_pad, heads, dim_head, n_real, scale):
    M, three_inner = qkv.shape
    inner = heads * dim_head
    assert three_inner == 3 * inner and M == batch * n_pad
    kernel = functools.partial(_attention_kernel, heads=heads, dim_head=dim_head,
                               scale=scale, n_real=n_real)
    return pl.pallas_call(
        kernel,
        out_shape=jax.ShapeDtypeStruct((M, inner), qkv.dtype),
        grid_spec=pltpu.PrefetchScalarGridSpec(
            num_scalar_prefetch=0,
            grid=(batch,),
            in_specs=[pl.BlockSpec((n_pad, 3 * inner), lambda bi: (bi, 0))],
            out_specs=pl.BlockSpec((n_pad, inner), lambda bi: (bi, 0)),
        ),
        compiler_params=pltpu.CompilerParams(
            dimension_semantics=("parallel",),
            vmem_limit_bytes=64 * 1024 * 1024),
        cost_estimate=pl.CostEstimate(
            flops=4 * batch * heads * n_pad * n_pad * dim_head,
            transcendentals=batch * heads * n_pad * n_pad,
            bytes_accessed=(qkv.size + M * inner) * qkv.dtype.itemsize),
    )(qkv)


# ---------------------------------------------------------------------------
# fused embedding: (padded) patch matmul + {CLS row, bias, pos-embed} slab add.
# Grid over batch, one lane-dense store per block.
# ---------------------------------------------------------------------------

def _embed_kernel(p_ref, w_ref, add_ref, o_ref):
    y = jnp.dot(p_ref[0].astype(jnp.bfloat16), w_ref[...].astype(jnp.bfloat16),
                preferred_element_type=jnp.float32)
    o_ref[0] = (y + add_ref[...].astype(jnp.float32)).astype(o_ref.dtype)


def embed_pallas(patches_padded, w, add):
    B, n_pad, patch_dim = patches_padded.shape
    D = w.shape[1]
    assert add.shape == (n_pad, D)
    return pl.pallas_call(
        _embed_kernel,
        out_shape=jax.ShapeDtypeStruct((B, n_pad, D), patches_padded.dtype),
        grid_spec=pltpu.PrefetchScalarGridSpec(
            num_scalar_prefetch=0,
            grid=(B,),
            in_specs=[
                pl.BlockSpec((1, n_pad, patch_dim), lambda bi: (bi, 0, 0)),
                pl.BlockSpec((patch_dim, D), lambda bi: (0, 0)),
                pl.BlockSpec((n_pad, D), lambda bi: (0, 0)),
            ],
            out_specs=pl.BlockSpec((1, n_pad, D), lambda bi: (bi, 0, 0)),
        ),
        compiler_params=pltpu.CompilerParams(dimension_semantics=("parallel",)),
    )(patches_padded, w, add)


# ---------------------------------------------------------------------------
# pure-JAX references (mirror the kernel math: bf16 MXU inputs, f32 epilogue)
# ---------------------------------------------------------------------------

def linear_ref(x, w, b=None, *, activation=None, residual=None, ln=None, ln_eps=1e-5):
    xf = x.astype(jnp.float32)
    if ln is not None:
        g, beta = ln
        mean = jnp.mean(xf, axis=-1, keepdims=True)
        xc = xf - mean
        var = jnp.mean(xc * xc, axis=-1, keepdims=True)
        xf = xc * jax.lax.rsqrt(var + ln_eps) * g.astype(jnp.float32) + beta.astype(jnp.float32)
    y = jnp.dot(xf.astype(jnp.bfloat16), w.astype(jnp.bfloat16),
                preferred_element_type=jnp.float32)
    if b is not None:
        y = y + b.astype(jnp.float32)
    if activation == "gelu":
        y = _gelu_tanh(y)
    if residual is not None:
        y = y + residual.astype(jnp.float32)
    return y.astype(x.dtype)


def attention_ref(qkv, *, batch, n_pad, heads, dim_head, n_real, scale):
    inner = heads * dim_head
    x = qkv.reshape(batch, n_pad, 3, heads, dim_head)
    q = x[:, :, 0].astype(jnp.bfloat16)
    k = x[:, :, 1].astype(jnp.bfloat16)
    v = x[:, :, 2].astype(jnp.bfloat16)
    s = jnp.einsum("bihd,bjhd->bhij", q, k, preferred_element_type=jnp.float32) * scale
    mask = (jnp.arange(n_pad) < n_real)[None, None, None, :]
    s = jnp.where(mask, s, jnp.float32(-1e30))
    p = jax.nn.softmax(s, axis=-1)
    o = jnp.einsum("bhij,bjhd->bihd", p.astype(jnp.bfloat16), v,
                   preferred_element_type=jnp.float32)
    return o.reshape(batch * n_pad, inner).astype(qkv.dtype)


def embed_ref(patches_padded, w, add):
    y = jnp.einsum("bnp,pd->bnd", patches_padded.astype(jnp.bfloat16),
                   w.astype(jnp.bfloat16), preferred_element_type=jnp.float32)
    return (y + add.astype(jnp.float32)[None]).astype(patches_padded.dtype)


PALLAS_OPS = dict(linear=linear_pallas, attention=attention_pallas, embed=embed_pallas)
REF_OPS = dict(linear=linear_ref, attention=attention_ref, embed=embed_ref)


# ---------------------------------------------------------------------------
# full ViT forward (mirrors ViT.forward of the PyTorch module, eval mode)
# ---------------------------------------------------------------------------

def vit_forward(params, cfg, X1, X2, *, ops):
    linear = ops["linear"]
    attention = ops["attention"]
    embed = ops["embed"]

    B = X1.shape[0]

    # --- stem: Conv1d(kernel_size=1) + Linear over the last axis (plain XLA;
    # output lane widths are small / not 128-multiples -> XLA fuses these).
    h = jnp.einsum("bcl,co->bol", X1, params["conv_w"]) + params["conv_b"][0][None, :, None]
    h = jnp.einsum("bcl,lo->bco", h, params["lin_w"]) + params["lin_b"][0][None, None, :]
    X = jnp.concatenate([h, X2], axis=2)                        # (B, C, S)

    C, S = X.shape[1], X.shape[2]
    P = cfg["patch_size"]
    NP = S // P
    D = cfg["dim"]
    H = cfg["heads"]
    dh = cfg["dim_head"]
    N = NP + 1                                                  # +1 CLS token

    # Pad the token axis so B*N_pad is a multiple of 128 (proper tm tiling)
    # and N_pad is a multiple of 8 (attention block sublane dim).
    r = max(8, 128 // math.gcd(B, 128))
    n_pad = ((N + r - 1) // r) * r
    m_pad = B * n_pad

    # einops 'b c (d p) -> b d (p c)'
    patches = X.reshape(B, C, NP, P).transpose(0, 2, 3, 1).reshape(B, NP, P * C)
    # row 0 = CLS slot (zeros into the matmul), trailing rows = zero padding
    patches_padded = jnp.pad(patches, ((0, 0), (1, n_pad - N), (0, 0)))
    # additive slab fused into the embedding matmul:
    #   row 0: cls + pos[0]; rows 1..NP: patch_bias + pos[1:]; pad rows: 0
    pos = params["pos"][0]                                      # (N, D)
    slab = jnp.concatenate([params["cls"].reshape(1, D) + pos[:1],
                            pos[1:] + params["patch_b"]], axis=0)
    slab = jnp.pad(slab, ((0, n_pad - N), (0, 0)))

    x2d = embed(patches_padded, params["patch_w"], slab).reshape(m_pad, D)

    scale = dh ** -0.5
    for lp in params["layers"]:
        skip = x2d                                              # shortcut = identity (dim_in == dim_out)
        qkv = linear(x2d, lp["qkv_w"], ln=(lp["ln1_g"], lp["ln1_b"]))      # LN1 + to_qkv fused (no bias)
        o = attention(qkv, batch=B, n_pad=n_pad, heads=H, dim_head=dh,
                      n_real=N, scale=scale)                    # (m_pad, inner), merge is free
        x2d = linear(o, lp["out_w"], lp["out_b"], residual=skip)           # to_out + residual fused
        skip = x2d
        hmid = linear(x2d, lp["ff1_w"], lp["ff1_b"], activation="gelu",
                      ln=(lp["ln2_g"], lp["ln2_b"]))            # LN2 + FF1 + GELU fused
        x2d = linear(hmid, lp["ff2_w"], lp["ff2_b"], residual=skip)        # FF2 + residual fused

    # --- classifier on the CLS token (tiny -> plain XLA)
    cls_tok = x2d.reshape(B, n_pad, D)[:, 0].astype(jnp.float32)
    mean = jnp.mean(cls_tok, axis=-1, keepdims=True)
    xc = cls_tok - mean
    var = jnp.mean(xc * xc, axis=-1, keepdims=True)
    hn = xc * jax.lax.rsqrt(var + 1e-5) * params["head_ln_g"] + params["head_ln_b"]
    logits = hn @ params["head_w"] + params["head_b"]
    return logits.astype(X1.dtype)


# ---------------------------------------------------------------------------
# parameter init (deterministic stand-in for the PyTorch init)
# ---------------------------------------------------------------------------

def init_params(key, cfg):
    def nrm(k, shape, scale=0.02):
        return scale * jax.random.normal(k, shape, dtype=jnp.float32)

    total = 8 + cfg["depth"] * 11 + 4
    it = iter(jax.random.split(key, total))

    C = cfg["conv_out"]
    patch_dim = C * cfg["patch_size"]
    spectra_size = cfg["lin_out"] + cfg["x2_len"]
    assert spectra_size % cfg["patch_size"] == 0
    num_patches = spectra_size // cfg["patch_size"]
    D = cfg["dim"]
    inner = cfg["heads"] * cfg["dim_head"]

    params = {
        "conv_w": nrm(next(it), (cfg["conv_in"], C), 0.1),
        "conv_b": nrm(next(it), (1, C), 0.1),
        "lin_w": nrm(next(it), (cfg["lin_in"], cfg["lin_out"]), 0.1),
        "lin_b": nrm(next(it), (1, cfg["lin_out"]), 0.1),
        "patch_w": nrm(next(it), (patch_dim, D), 0.1),
        "patch_b": nrm(next(it), (1, D), 0.1),
        "cls": nrm(next(it), (1, 1, D)),
        "pos": nrm(next(it), (1, num_patches + 1, D)),
        "layers": [],
    }
    for _ in range(cfg["depth"]):
        params["layers"].append({
            "ln1_g": 1.0 + nrm(next(it), (1, D)),
            "ln1_b": nrm(next(it), (1, D)),
            "qkv_w": nrm(next(it), (D, 3 * inner), 0.1),
            "out_w": nrm(next(it), (inner, D), 0.1),
            "out_b": nrm(next(it), (1, D), 0.1),
            "ln2_g": 1.0 + nrm(next(it), (1, D)),
            "ln2_b": nrm(next(it), (1, D)),
            "ff1_w": nrm(next(it), (D, cfg["dim_mlp"]), 0.1),
            "ff1_b": nrm(next(it), (1, cfg["dim_mlp"]), 0.1),
            "ff2_w": nrm(next(it), (cfg["dim_mlp"], D), 0.1),
            "ff2_b": nrm(next(it), (1, D), 0.1),
        })
    params["head_ln_g"] = 1.0 + nrm(next(it), (1, D))
    params["head_ln_b"] = nrm(next(it), (1, D))
    params["head_w"] = nrm(next(it), (D, cfg["num_classes"]), 0.1)
    params["head_b"] = nrm(next(it), (1, cfg["num_classes"]), 0.1)
    return params


# ---------------------------------------------------------------------------
# demo / correctness check
# ---------------------------------------------------------------------------

if __name__ == "__main__":
    cfg = dict(
        conv_in=8,      # small stand-in for the 915 Conv1d input channels
        conv_out=4,     # stand-in for 186; becomes the ViT `channel`
        lin_in=12,      # stand-in for 171
        lin_out=8,      # stand-in for 128
        x2_len=8,       # length of X2 along dim 2
        patch_size=4,
        dim=32,
        depth=2,
        heads=2,
        dim_head=16,
        dim_mlp=64,
        num_classes=10,
        batch=2,
    )

    key = jax.random.PRNGKey(0)
    k_param, k_x1, k_x2 = jax.random.split(key, 3)
    params = init_params(k_param, cfg)

    B = cfg["batch"]
    X1 = jax.random.normal(k_x1, (B, cfg["conv_in"], cfg["lin_in"]), dtype=jnp.float32)
    X2 = jax.random.normal(k_x2, (B, cfg["conv_out"], cfg["x2_len"]), dtype=jnp.float32)

    fwd_pallas = jax.jit(lambda p, a, b: vit_forward(p, cfg, a, b, ops=PALLAS_OPS))
    out = jax.block_until_ready(fwd_pallas(params, X1, X2))

    fwd_ref = jax.jit(lambda p, a, b: vit_forward(p, cfg, a, b, ops=REF_OPS))
    ref = jax.block_until_ready(fwd_ref(params, X1, X2))

    assert out.shape == (B, cfg["num_classes"]) and out.dtype == jnp.float32
    max_err = float(jnp.max(jnp.abs(out - ref)))
    assert jnp.allclose(out, ref, atol=2e-2, rtol=2e-2), f"max abs err {max_err}"
    print("KERNEL_OK")
</pallas_src>

<mosaic_0001>
module attributes {stable_mosaic.version = 11 : i64} {
  func.func @_embed_kernel(%arg0: i32, %arg1: memref<1x64x16xf32, #tpu.memory_space<vmem>>, %arg2: memref<16x32xf32, #tpu.memory_space<vmem>>, %arg3: memref<64x32xf32, #tpu.memory_space<vmem>>, %arg4: memref<1x64x32xf32, #tpu.memory_space<vmem>>) attributes {dimension_semantics = [#tpu.dimension_semantics<parallel>], iteration_bounds = array<i64: 2>, scalar_prefetch = 0 : i64, scratch_operands = 0 : i64, tpu.core_type = #tpu.core_type<tc>, window_params = [{transform_indices = @transform_0, window_bounds = array<i64: 1, 64, 16>}, {pipeline_mode = #tpu.pipeline_mode<synchronous>, transform_indices = @transform_1, window_bounds = array<i64: 16, 32>}, {pipeline_mode = #tpu.pipeline_mode<synchronous>, transform_indices = @transform_2, window_bounds = array<i64: 64, 32>}, {transform_indices = @transform_3, window_bounds = array<i64: 1, 64, 32>}]} {
    %c0 = arith.constant 0 : index
    %c0_0 = arith.constant 0 : index
    %c0_1 = arith.constant 0 : index
    %0 = vector.load %arg1[%c0, %c0_0, %c0_1] : memref<1x64x16xf32, #tpu.memory_space<vmem>>, vector<1x64x16xf32>
    %1 = vector.shape_cast %0 : vector<1x64x16xf32> to vector<64x16xf32>
    %2 = arith.truncf %1 : vector<64x16xf32> to vector<64x16xbf16>
    %c0_2 = arith.constant 0 : index
    %c0_3 = arith.constant 0 : index
    %3 = vector.load %arg2[%c0_2, %c0_3] : memref<16x32xf32, #tpu.memory_space<vmem>>, vector<16x32xf32>
    %4 = arith.truncf %3 : vector<16x32xf32> to vector<16x32xbf16>
    %cst = arith.constant dense<0.000000e+00> : vector<64x32xf32>
    %5 = tpu.matmul %2, %4, %cst {dimension_numbers = #tpu.dot_dimension_numbers<[1], [0], [0], [1], [0, 0, 1, 1], [], []>} : vector<64x16xbf16>, vector<16x32xbf16>, vector<64x32xf32> -> vector<64x32xf32>
    %c0_4 = arith.constant 0 : index
    %c0_5 = arith.constant 0 : index
    %6 = vector.load %arg3[%c0_4, %c0_5] : memref<64x32xf32, #tpu.memory_space<vmem>>, vector<64x32xf32>
    %7 = arith.addf %5, %6 : vector<64x32xf32>
    %c0_6 = arith.constant 0 : index
    %c0_7 = arith.constant 0 : index
    %c0_8 = arith.constant 0 : index
    %8 = vector.load %arg4[%c0_6, %c0_7, %c0_8] : memref<1x64x32xf32, #tpu.memory_space<vmem>>, vector<1x64x32xf32>
    %9 = vector.shape_cast %8 : vector<1x64x32xf32> to vector<64x32xf32>
    %10 = vector.shape_cast %7 : vector<64x32xf32> to vector<1x64x32xf32>
    tpu.vector_store %arg4[%c0_6, %c0_7, %c0_8], %10 {strides = array<i32>} : memref<1x64x32xf32, #tpu.memory_space<vmem>>, vector<1x64x32xf32>,
    return
  }
  func.func @transform_0(%arg0: i32) -> (i32, i32, i32) {
    %c0_i32 = arith.constant 0 : i32
    %c0_i32_0 = arith.constant 0 : i32
    %c0_i32_1 = arith.constant 0 : i32
    return %arg0, %c0_i32, %c0_i32_0 : i32, i32, i32
  }
  func.func @transform_1(%arg0: i32) -> (i32, i32) {
    %c0_i32 = arith.constant 0 : i32
    %c0_i32_0 = arith.constant 0 : i32
    %c0_i32_1 = arith.constant 0 : i32
    return %c0_i32, %c0_i32_0 : i32, i32
  }
  func.func @transform_2(%arg0: i32) -> (i32, i32) {
    %c0_i32 = arith.constant 0 : i32
    %c0_i32_0 = arith.constant 0 : i32
    %c0_i32_1 = arith.constant 0 : i32
    return %c0_i32, %c0_i32_0 : i32, i32
  }
  func.func @transform_3(%arg0: i32) -> (i32, i32, i32) {
    %c0_i32 = arith.constant 0 : i32
    %c0_i32_0 = arith.constant 0 : i32
    %c0_i32_1 = arith.constant 0 : i32
    return %arg0, %c0_i32, %c0_i32_0 : i32, i32, i32
  }
}

module attributes {stable_mosaic.version = 11 : i64} {
  func.func @kernel(%arg0: i32, %arg1: i32, %arg2: i32, %arg3: memref<128x32xf32, #tpu.memory_space<vmem>>, %arg4: memref<32x96xf32, #tpu.memory_space<vmem>>, %arg5: memref<1x32xf32, #tpu.memory_space<vmem>>, %arg6: memref<1x32xf32, #tpu.memory_space<vmem>>, %arg7: memref<128x96xf32, #tpu.memory_space<vmem>>, %arg8: memref<128x96xf32, #tpu.memory_space<vmem>>) attributes {dimension_semantics = [#tpu.dimension_semantics<parallel>, #tpu.dimension_semantics<parallel>, #tpu.dimension_semantics<arbitrary>], iteration_bounds = array<i64: 1, 1, 1>, scalar_prefetch = 0 : i64, scratch_operands = 1 : i64, tpu.core_type = #tpu.core_type<tc>, window_params = [{transform_indices = @transform_0, window_bounds = array<i64: 128, 32>}, {transform_indices = @transform_1, window_bounds = array<i64: 32, 96>}, {transform_indices = @transform_2, window_bounds = array<i64: 1, 32>}, {transform_indices = @transform_3, window_bounds = array<i64: 1, 32>}, {transform_indices = @transform_4, window_bounds = array<i64: 128, 96>}]} {
    %c0_i32 = arith.constant 0 : i32
    %0 = arith.cmpi eq, %arg2, %c0_i32 : i32
    %1 = arith.extui %0 : i1 to i32
    %c0_i32_0 = arith.constant 0 : i32
    %2 = arith.cmpi ne, %1, %c0_i32_0 : i32
    scf.if %2 {
      %cst_19 = arith.constant 0.000000e+00 : f32
      %36 = vector.broadcast %cst_19 : f32 to vector<128x96xf32>
      %c0_20 = arith.constant 0 : index
      %c0_21 = arith.constant 0 : index
      %37 = vector.load %arg8[%c0_20, %c0_21] : memref<128x96xf32, #tpu.memory_space<vmem>>, vector<128x96xf32>
      tpu.vector_store %arg8[%c0_20, %c0_21], %36 {strides = array<i32>} : memref<128x96xf32, #tpu.memory_space<vmem>>, vector<128x96xf32>,
    } else {
    }
    %c0 = arith.constant 0 : index
    %c0_1 = arith.constant 0 : index
    %3 = vector.load %arg3[%c0, %c0_1] : memref<128x32xf32, #tpu.memory_space<vmem>>, vector<128x32xf32>
    %cst = arith.constant dense<0.000000e+00> : vector<128xf32>
    %4 = vector.multi_reduction <add>, %3, %cst [1] : vector<128x32xf32> to vector<128xf32>
    %5 = vector.shape_cast %4 : vector<128xf32> to vector<128x1xf32>
    %cst_2 = arith.constant 3.200000e+01 : f32
    %6 = vector.broadcast %cst_2 : f32 to vector<128x1xf32>
    %7 = arith.divf %5, %6 : vector<128x1xf32>
    %8 = vector.broadcast %7 : vector<128x1xf32> to vector<128x32xf32>
    %9 = arith.subf %3, %8 : vector<128x32xf32>
    %10 = arith.mulf %9, %9 : vector<128x32xf32>
    %cst_3 = arith.constant dense<0.000000e+00> : vector<128xf32>
    %11 = vector.multi_reduction <add>, %10, %cst_3 [1] : vector<128x32xf32> to vector<128xf32>
    %12 = vector.shape_cast %11 : vector<128xf32> to vector<128x1xf32>
    %cst_4 = arith.constant 3.200000e+01 : f32
    %13 = vector.broadcast %cst_4 : f32 to vector<128x1xf32>
    %14 = arith.divf %12, %13 : vector<128x1xf32>
    %cst_5 = arith.constant 9.99999974E-6 : f32
    %15 = vector.broadcast %cst_5 : f32 to vector<128x1xf32>
    %16 = arith.addf %14, %15 : vector<128x1xf32>
    %17 = math.rsqrt %16 : vector<128x1xf32>
    %18 = vector.broadcast %17 : vector<128x1xf32> to vector<128x32xf32>
    %19 = arith.mulf %9, %18 : vector<128x32xf32>
    %c0_6 = arith.constant 0 : index
    %c0_7 = arith.constant 0 : index
    %20 = vector.load %arg5[%c0_6, %c0_7] : memref<1x32xf32, #tpu.memory_space<vmem>>, vector<1x32xf32>
    %21 = vector.broadcast %20 : vector<1x32xf32> to vector<128x32xf32>
    %22 = arith.mulf %19, %21 : vector<128x32xf32>
    %c0_8 = arith.constant 0 : index
    %c0_9 = arith.constant 0 : index
    %23 = vector.load %arg6[%c0_8, %c0_9] : memref<1x32xf32, #tpu.memory_space<vmem>>, vector<1x32xf32>
    %24 = vector.broadcast %23 : vector<1x32xf32> to vector<128x32xf32>
    %25 = arith.addf %22, %24 : vector<128x32xf32>
    %26 = arith.truncf %25 : vector<128x32xf32> to vector<128x32xbf16>
    %c0_10 = arith.constant 0 : index
    %c0_11 = arith.constant 0 : index
    %27 = vector.load %arg8[%c0_10, %c0_11] : memref<128x96xf32, #tpu.memory_space<vmem>>, vector<128x96xf32>
    %c0_12 = arith.constant 0 : index
    %c0_13 = arith.constant 0 : index
    %28 = vector.load %arg4[%c0_12, %c0_13] : memref<32x96xf32, #tpu.memory_space<vmem>>, vector<32x96xf32>
    %29 = arith.truncf %28 : vector<32x96xf32> to vector<32x96xbf16>
    %cst_14 = arith.constant dense<0.000000e+00> : vector<128x96xf32>
    %30 = tpu.matmul %26, %29, %cst_14 {dimension_numbers = #tpu.dot_dimension_numbers<[1], [0], [0], [1], [0, 0, 1, 1], [], []>} : vector<128x32xbf16>, vector<32x96xbf16>, vector<128x96xf32> -> vector<128x96xf32>
    %31 = arith.addf %27, %30 : vector<128x96xf32>
    %c0_15 = arith.constant 0 : index
    %c0_16 = arith.constant 0 : index
    %32 = vector.load %arg8[%c0_15, %c0_16] : memref<128x96xf32, #tpu.memory_space<vmem>>, vector<128x96xf32>
    tpu.vector_store %arg8[%c0_15, %c0_16], %31 {strides = array<i32>} : memref<128x96xf32, #tpu.memory_space<vmem>>, vector<128x96xf32>,
    %c0_i32_17 = arith.constant 0 : i32
    %33 = arith.cmpi eq, %arg2, %c0_i32_17 : i32
    %34 = arith.extui %33 : i1 to i32
    %c0_i32_18 = arith.constant 0 : i32
    %35 = arith.cmpi ne, %34, %c0_i32_18 : i32
    scf.if %35 {
      %c0_19 = arith.constant 0 : index
      %c0_20 = arith.constant 0 : index
      %36 = vector.load %arg8[%c0_19, %c0_20] : memref<128x96xf32, #tpu.memory_space<vmem>>, vector<128x96xf32>
      %c0_21 = arith.constant 0 : index
      %c0_22 = arith.constant 0 : index
      %37 = vector.load %arg7[%c0_21, %c0_22] : memref<128x96xf32, #tpu.memory_space<vmem>>, vector<128x96xf32>
      tpu.vector_store %arg7[%c0_21, %c0_22], %36 {strides = array<i32>} : memref<128x96xf32, #tpu.memory_space<vmem>>, vector<128x96xf32>,
    } else {
    }
    return
  }
  func.func @transform_0(%arg0: i32, %arg1: i32, %arg2: i32) -> (i32, i32) {
    %c0_i32 = arith.constant 0 : i32
    return %arg0, %arg2 : i32, i32
  }
  func.func @transform_1(%arg0: i32, %arg1: i32, %arg2: i32) -> (i32, i32) {
    %c0_i32 = arith.constant 0 : i32
    return %arg2, %arg1 : i32, i32
  }
  func.func @transform_2(%arg0: i32, %arg1: i32, %arg2: i32) -> (i32, i32) {
    %c0_i32 = arith.constant 0 : i32
    %c0_i32_0 = arith.constant 0 : i32
    return %c0_i32, %arg2 : i32, i32
  }
  func.func @transform_3(%arg0: i32, %arg1: i32, %arg2: i32) -> (i32, i32) {
    %c0_i32 = arith.constant 0 : i32
    %c0_i32_0 = arith.constant 0 : i32
    return %c0_i32, %arg2 : i32, i32
  }
  func.func @transform_4(%arg0: i32, %arg1: i32, %arg2: i32) -> (i32, i32) {
    %c0_i32 = arith.constant 0 : i32
    return %arg0, %arg1 : i32, i32
  }
}

module attributes {stable_mosaic.version = 11 : i64} {
  func.func @_attention_kernel(%arg0: i32, %arg1: memref<64x96xf32, #tpu.memory_space<vmem>>, %arg2: memref<64x32xf32, #tpu.memory_space<vmem>>) attributes {dimension_semantics = [#tpu.dimension_semantics<parallel>], iteration_bounds = array<i64: 2>, scalar_prefetch = 0 : i64, scratch_operands = 0 : i64, tpu.core_type = #tpu.core_type<tc>, window_params = [{transform_indices = @transform_0, window_bounds = array<i64: 64, 96>}, {transform_indices = @transform_1, window_bounds = array<i64: 64, 32>}]} {
    %0 = tpu.iota {dimensions = array<i32: 1>} : vector<1x64xi32>
    %c5_i32 = arith.constant 5 : i32
    %1 = vector.broadcast %c5_i32 : i32 to vector<1x64xi32>
    %2 = arith.cmpi slt, %0, %1 : vector<1x64xi32>
    %c0 = arith.constant 0 : index
    %c0_0 = arith.constant 0 : index
    %3 = vector.load %arg1[%c0, %c0_0] : memref<64x96xf32, #tpu.memory_space<vmem>>, vector<64x16xf32>
    %4 = arith.truncf %3 : vector<64x16xf32> to vector<64x16xbf16>
    %c0_1 = arith.constant 0 : index
    %c32 = arith.constant 32 : index
    %5 = vector.load %arg1[%c0_1, %c32] : memref<64x96xf32, #tpu.memory_space<vmem>>, vector<64x16xf32>
    %6 = arith.truncf %5 : vector<64x16xf32> to vector<64x16xbf16>
    %c0_2 = arith.constant 0 : index
    %c64 = arith.constant 64 : index
    %7 = vector.load %arg1[%c0_2, %c64] : memref<64x96xf32, #tpu.memory_space<vmem>>, vector<64x16xf32>
    %8 = arith.truncf %7 : vector<64x16xf32> to vector<64x16xbf16>
    %cst = arith.constant dense<0.000000e+00> : vector<64x64xf32>
    %9 = tpu.matmul %4, %6, %cst {dimension_numbers = #tpu.dot_dimension_numbers<[1], [1], [0], [0], [0, 0, 1, 0], [], []>} : vector<64x16xbf16>, vector<64x16xbf16>, vector<64x64xf32> -> vector<64x64xf32>
    %cst_3 = arith.constant 2.500000e-01 : f32
    %10 = vector.broadcast %cst_3 : f32 to vector<64x64xf32>
    %11 = arith.mulf %9, %10 : vector<64x64xf32>
    %cst_4 = arith.constant -1.000000e+30 : f32
    %12 = vector.shape_cast %2 : vector<1x64xi1> to vector<1x64xi1>
    %13 = vector.broadcast %12 : vector<1x64xi1> to vector<64x64xi1>
    %14 = vector.broadcast %cst_4 : f32 to vector<64x64xf32>
    %15 = arith.select %13, %11, %14 : vector<64x64xi1>, vector<64x64xf32>
    %cst_5 = arith.constant dense<0xFF800000> : vector<64xf32>
    %16 = vector.multi_reduction <maximumf>, %15, %cst_5 [1] : vector<64x64xf32> to vector<64xf32>
    %17 = vector.shape_cast %16 : vector<64xf32> to vector<64x1xf32>
    %18 = vector.broadcast %17 : vector<64x1xf32> to vector<64x64xf32>
    %19 = arith.subf %15, %18 : vector<64x64xf32>
    %20 = math.exp %19 : vector<64x64xf32>
    %cst_6 = arith.constant dense<0.000000e+00> : vector<64xf32>
    %21 = vector.multi_reduction <add>, %20, %cst_6 [1] : vector<64x64xf32> to vector<64xf32>
    %22 = vector.shape_cast %21 : vector<64xf32> to vector<64x1xf32>
    %23 = tpu.reciprocal %22 {approx = true} : vector<64x1xf32> -> vector<64x1xf32>
    %24 = vector.broadcast %23 : vector<64x1xf32> to vector<64x64xf32>
    %25 = arith.mulf %20, %24 : vector<64x64xf32>
    %26 = arith.truncf %25 : vector<64x64xf32> to vector<64x64xbf16>
    %cst_7 = arith.constant dense<0.000000e+00> : vector<64x16xf32>
    %27 = tpu.matmul %26, %8, %cst_7 {dimension_numbers = #tpu.dot_dimension_numbers<[1], [0], [0], [1], [0, 0, 1, 1], [], []>} : vector<64x64xbf16>, vector<64x16xbf16>, vector<64x16xf32> -> vector<64x16xf32>
    %c0_8 = arith.constant 0 : index
    %c0_9 = arith.constant 0 : index
    %28 = vector.load %arg2[%c0_8, %c0_9] : memref<64x32xf32, #tpu.memory_space<vmem>>, vector<64x16xf32>
    tpu.vector_store %arg2[%c0_8, %c0_9], %27 {strides = array<i32>} : memref<64x32xf32, #tpu.memory_space<vmem>>, vector<64x16xf32>,
    %c0_10 = arith.constant 0 : index
    %c16 = arith.constant 16 : index
    %29 = vector.load %arg1[%c0_10, %c16] : memref<64x96xf32, #tpu.memory_space<vmem>>, vector<64x16xf32>
    %30 = arith.truncf %29 : vector<64x16xf32> to vector<64x16xbf16>
    %c0_11 = arith.constant 0 : index
    %c48 = arith.constant 48 : index
    %31 = vector.load %arg1[%c0_11, %c48] : memref<64x96xf32, #tpu.memory_space<vmem>>, vector<64x16xf32>
    %32 = arith.truncf %31 : vector<64x16xf32> to vector<64x16xbf16>
    %c0_12 = arith.constant 0 : index
    %c80 = arith.constant 80 : index
    %33 = vector.load %arg1[%c0_12, %c80] : memref<64x96xf32, #tpu.memory_space<vmem>>, vector<64x16xf32>
    %34 = arith.truncf %33 : vector<64x16xf32> to vector<64x16xbf16>
    %cst_13 = arith.constant dense<0.000000e+00> : vector<64x64xf32>
    %35 = tpu.matmul %30, %32, %cst_13 {dimension_numbers = #tpu.dot_dimension_numbers<[1], [1], [0], [0], [0, 0, 1, 0], [], []>} : vector<64x16xbf16>, vector<64x16xbf16>, vector<64x64xf32> -> vector<64x64xf32>
    %cst_14 = arith.constant 2.500000e-01 : f32
    %36 = vector.broadcast %cst_14 : f32 to vector<64x64xf32>
    %37 = arith.mulf %35, %36 : vector<64x64xf32>
    %cst_15 = arith.constant -1.000000e+30 : f32
    %38 = vector.shape_cast %2 : vector<1x64xi1> to vector<1x64xi1>
    %39 = vector.broadcast %38 : vector<1x64xi1> to vector<64x64xi1>
    %40 = vector.broadcast %cst_15 : f32 to vector<64x64xf32>
    %41 = arith.select %39, %37, %40 : vector<64x64xi1>, vector<64x64xf32>
    %cst_16 = arith.constant dense<0xFF800000> : vector<64xf32>
    %42 = vector.multi_reduction <maximumf>, %41, %cst_16 [1] : vector<64x64xf32> to vector<64xf32>
    %43 = vector.shape_cast %42 : vector<64xf32> to vector<64x1xf32>
    %44 = vector.broadcast %43 : vector<64x1xf32> to vector<64x64xf32>
    %45 = arith.subf %41, %44 : vector<64x64xf32>
    %46 = math.exp %45 : vector<64x64xf32>
    %cst_17 = arith.constant dense<0.000000e+00> : vector<64xf32>
    %47 = vector.multi_reduction <add>, %46, %cst_17 [1] : vector<64x64xf32> to vector<64xf32>
    %48 = vector.shape_cast %47 : vector<64xf32> to vector<64x1xf32>
    %49 = tpu.reciprocal %48 {approx = true} : vector<64x1xf32> -> vector<64x1xf32>
    %50 = vector.broadcast %49 : vector<64x1xf32> to vector<64x64xf32>
    %51 = arith.mulf %46, %50 : vector<64x64xf32>
    %52 = arith.truncf %51 : vector<64x64xf32> to vector<64x64xbf16>
    %cst_18 = arith.constant dense<0.000000e+00> : vector<64x16xf32>
    %53 = tpu.matmul %52, %34, %cst_18 {dimension_numbers = #tpu.dot_dimension_numbers<[1], [0], [0], [1], [0, 0, 1, 1], [], []>} : vector<64x64xbf16>, vector<64x16xbf16>, vector<64x16xf32> -> vector<64x16xf32>
    %c0_19 = arith.constant 0 : index
    %c16_20 = arith.constant 16 : index
    %54 = vector.load %arg2[%c0_19, %c16_20] : memref<64x32xf32, #tpu.memory_space<vmem>>, vector<64x16xf32>
    tpu.vector_store %arg2[%c0_19, %c16_20], %53 {strides = array<i32>} : memref<64x32xf32, #tpu.memory_space<vmem>>, vector<64x16xf32>,
    return
  }
  func.func @transform_0(%arg0: i32) -> (i32, i32) {
    %c0_i32 = arith.constant 0 : i32
    %c0_i32_0 = arith.constant 0 : i32
    return %arg0, %c0_i32 : i32, i32
  }
  func.func @transform_1(%arg0: i32) -> (i32, i32) {
    %c0_i32 = arith.constant 0 : i32
    %c0_i32_0 = arith.constant 0 : i32
    return %arg0, %c0_i32 : i32, i32
  }
}

module attributes {stable_mosaic.version = 11 : i64} {
  func.func @kernel(%arg0: i32, %arg1: i32, %arg2: i32, %arg3: memref<128x32xf32, #tpu.memory_space<vmem>>, %arg4: memref<32x32xf32, #tpu.memory_space<vmem>>, %arg5: memref<1x32xf32, #tpu.memory_space<vmem>>, %arg6: memref<128x32xf32, #tpu.memory_space<vmem>>, %arg7: memref<128x32xf32, #tpu.memory_space<vmem>>, %arg8: memref<128x32xf32, #tpu.memory_space<vmem>>) attributes {dimension_semantics = [#tpu.dimension_semantics<parallel>, #tpu.dimension_semantics<parallel>, #tpu.dimension_semantics<arbitrary>], iteration_bounds = array<i64: 1, 1, 1>, scalar_prefetch = 0 : i64, scratch_operands = 1 : i64, tpu.core_type = #tpu.core_type<tc>, window_params = [{transform_indices = @transform_0, window_bounds = array<i64: 128, 32>}, {transform_indices = @transform_1, window_bounds = array<i64: 32, 32>}, {transform_indices = @transform_2, window_bounds = array<i64: 1, 32>}, {transform_indices = @transform_3, window_bounds = array<i64: 128, 32>}, {transform_indices = @transform_4, window_bounds = array<i64: 128, 32>}]} {
    %c0_i32 = arith.constant 0 : i32
    %0 = arith.cmpi eq, %arg2, %c0_i32 : i32
    %1 = arith.extui %0 : i1 to i32
    %c0_i32_0 = arith.constant 0 : i32
    %2 = arith.cmpi ne, %1, %c0_i32_0 : i32
    scf.if %2 {
      %cst_10 = arith.constant 0.000000e+00 : f32
      %14 = vector.broadcast %cst_10 : f32 to vector<128x32xf32>
      %c0_11 = arith.constant 0 : index
      %c0_12 = arith.constant 0 : index
      %15 = vector.load %arg8[%c0_11, %c0_12] : memref<128x32xf32, #tpu.memory_space<vmem>>, vector<128x32xf32>
      tpu.vector_store %arg8[%c0_11, %c0_12], %14 {strides = array<i32>} : memref<128x32xf32, #tpu.memory_space<vmem>>, vector<128x32xf32>,
    } else {
    }
    %c0 = arith.constant 0 : index
    %c0_1 = arith.constant 0 : index
    %3 = vector.load %arg3[%c0, %c0_1] : memref<128x32xf32, #tpu.memory_space<vmem>>, vector<128x32xf32>
    %4 = arith.truncf %3 : vector<128x32xf32> to vector<128x32xbf16>
    %c0_2 = arith.constant 0 : index
    %c0_3 = arith.constant 0 : index
    %5 = vector.load %arg8[%c0_2, %c0_3] : memref<128x32xf32, #tpu.memory_space<vmem>>, vector<128x32xf32>
    %c0_4 = arith.constant 0 : index
    %c0_5 = arith.constant 0 : index
    %6 = vector.load %arg4[%c0_4, %c0_5] : memref<32x32xf32, #tpu.memory_space<vmem>>, vector<32x32xf32>
    %7 = arith.truncf %6 : vector<32x32xf32> to vector<32x32xbf16>
    %cst = arith.constant dense<0.000000e+00> : vector<128x32xf32>
    %8 = tpu.matmul %4, %7, %cst {dimension_numbers = #tpu.dot_dimension_numbers<[1], [0], [0], [1], [0, 0, 1, 1], [], []>} : vector<128x32xbf16>, vector<32x32xbf16>, vector<128x32xf32> -> vector<128x32xf32>
    %9 = arith.addf %5, %8 : vector<128x32xf32>
    %c0_6 = arith.constant 0 : index
    %c0_7 = arith.constant 0 : index
    %10 = vector.load %arg8[%c0_6, %c0_7] : memref<128x32xf32, #tpu.memory_space<vmem>>, vector<128x32xf32>
    tpu.vector_store %arg8[%c0_6, %c0_7], %9 {strides = array<i32>} : memref<128x32xf32, #tpu.memory_space<vmem>>, vector<128x32xf32>,
    %c0_i32_8 = arith.constant 0 : i32
    %11 = arith.cmpi eq, %arg2, %c0_i32_8 : i32
    %12 = arith.extui %11 : i1 to i32
    %c0_i32_9 = arith.constant 0 : i32
    %13 = arith.cmpi ne, %12, %c0_i32_9 : i32
    scf.if %13 {
      %c0_10 = arith.constant 0 : index
      %c0_11 = arith.constant 0 : index
      %14 = vector.load %arg8[%c0_10, %c0_11] : memref<128x32xf32, #tpu.memory_space<vmem>>, vector<128x32xf32>
      %c0_12 = arith.constant 0 : index
      %c0_13 = arith.constant 0 : index
      %15 = vector.load %arg5[%c0_12, %c0_13] : memref<1x32xf32, #tpu.memory_space<vmem>>, vector<1x32xf32>
      %16 = vector.broadcast %15 : vector<1x32xf32> to vector<128x32xf32>
      %17 = arith.addf %14, %16 : vector<128x32xf32>
      %c0_14 = arith.constant 0 : index
      %c0_15 = arith.constant 0 : index
      %18 = vector.load %arg6[%c0_14, %c0_15] : memref<128x32xf32, #tpu.memory_space<vmem>>, vector<128x32xf32>
      %19 = arith.addf %17, %18 : vector<128x32xf32>
      %c0_16 = arith.constant 0 : index
      %c0_17 = arith.constant 0 : index
      %20 = vector.load %arg7[%c0_16, %c0_17] : memref<128x32xf32, #tpu.memory_space<vmem>>, vector<128x32xf32>
      tpu.vector_store %arg7[%c0_16, %c0_17], %19 {strides = array<i32>} : memref<128x32xf32, #tpu.memory_space<vmem>>, vector<128x32xf32>,
    } else {
    }
    return
  }
  func.func @transform_0(%arg0: i32, %arg1: i32, %arg2: i32) -> (i32, i32) {
    %c0_i32 = arith.constant 0 : i32
    return %arg0, %arg2 : i32, i32
  }
  func.func @transform_1(%arg0: i32, %arg1: i32, %arg2: i32) -> (i32, i32) {
    %c0_i32 = arith.constant 0 : i32
    return %arg2, %arg1 : i32, i32
  }
  func.func @transform_2(%arg0: i32, %arg1: i32, %arg2: i32) -> (i32, i32) {
    %c0_i32 = arith.constant 0 : i32
    %c0_i32_0 = arith.constant 0 : i32
    return %c0_i32, %arg1 : i32, i32
  }
  func.func @transform_3(%arg0: i32, %arg1: i32, %arg2: i32) -> (i32, i32) {
    %c0_i32 = arith.constant 0 : i32
    return %arg0, %arg1 : i32, i32
  }
  func.func @transform_4(%arg0: i32, %arg1: i32, %arg2: i32) -> (i32, i32) {
    %c0_i32 = arith.constant 0 : i32
    return %arg0, %arg1 : i32, i32
  }
}

module attributes {stable_mosaic.version = 11 : i64} {
  func.func @kernel(%arg0: i32, %arg1: i32, %arg2: i32, %arg3: memref<128x32xf32, #tpu.memory_space<vmem>>, %arg4: memref<32x64xf32, #tpu.memory_space<vmem>>, %arg5: memref<1x32xf32, #tpu.memory_space<vmem>>, %arg6: memref<1x32xf32, #tpu.memory_space<vmem>>, %arg7: memref<1x64xf32, #tpu.memory_space<vmem>>, %arg8: memref<128x64xf32, #tpu.memory_space<vmem>>, %arg9: memref<128x64xf32, #tpu.memory_space<vmem>>) attributes {dimension_semantics = [#tpu.dimension_semantics<parallel>, #tpu.dimension_semantics<parallel>, #tpu.dimension_semantics<arbitrary>], iteration_bounds = array<i64: 1, 1, 1>, scalar_prefetch = 0 : i64, scratch_operands = 1 : i64, tpu.core_type = #tpu.core_type<tc>, window_params = [{transform_indices = @transform_0, window_bounds = array<i64: 128, 32>}, {transform_indices = @transform_1, window_bounds = array<i64: 32, 64>}, {transform_indices = @transform_2, window_bounds = array<i64: 1, 32>}, {transform_indices = @transform_3, window_bounds = array<i64: 1, 32>}, {transform_indices = @transform_4, window_bounds = array<i64: 1, 64>}, {transform_indices = @transform_5, window_bounds = array<i64: 128, 64>}]} {
    %c0_i32 = arith.constant 0 : i32
    %0 = arith.cmpi eq, %arg2, %c0_i32 : i32
    %1 = arith.extui %0 : i1 to i32
    %c0_i32_0 = arith.constant 0 : i32
    %2 = arith.cmpi ne, %1, %c0_i32_0 : i32
    scf.if %2 {
      %cst_19 = arith.constant 0.000000e+00 : f32
      %36 = vector.broadcast %cst_19 : f32 to vector<128x64xf32>
      %c0_20 = arith.constant 0 : index
      %c0_21 = arith.constant 0 : index
      %37 = vector.load %arg9[%c0_20, %c0_21] : memref<128x64xf32, #tpu.memory_space<vmem>>, vector<128x64xf32>
      tpu.vector_store %arg9[%c0_20, %c0_21], %36 {strides = array<i32>} : memref<128x64xf32, #tpu.memory_space<vmem>>, vector<128x64xf32>,
    } else {
    }
    %c0 = arith.constant 0 : index
    %c0_1 = arith.constant 0 : index
    %3 = vector.load %arg3[%c0, %c0_1] : memref<128x32xf32, #tpu.memory_space<vmem>>, vector<128x32xf32>
    %cst = arith.constant dense<0.000000e+00> : vector<128xf32>
    %4 = vector.multi_reduction <add>, %3, %cst [1] : vector<128x32xf32> to vector<128xf32>
    %5 = vector.shape_cast %4 : vector<128xf32> to vector<128x1xf32>
    %cst_2 = arith.constant 3.200000e+01 : f32
    %6 = vector.broadcast %cst_2 : f32 to vector<128x1xf32>
    %7 = arith.divf %5, %6 : vector<128x1xf32>
    %8 = vector.broadcast %7 : vector<128x1xf32> to vector<128x32xf32>
    %9 = arith.subf %3, %8 : vector<128x32xf32>
    %10 = arith.mulf %9, %9 : vector<128x32xf32>
    %cst_3 = arith.constant dense<0.000000e+00> : vector<128xf32>
    %11 = vector.multi_reduction <add>, %10, %cst_3 [1] : vector<128x32xf32> to vector<128xf32>
    %12 = vector.shape_cast %11 : vector<128xf32> to vector<128x1xf32>
    %cst_4 = arith.constant 3.200000e+01 : f32
    %13 = vector.broadcast %cst_4 : f32 to vector<128x1xf32>
    %14 = arith.divf %12, %13 : vector<128x1xf32>
    %cst_5 = arith.constant 9.99999974E-6 : f32
    %15 = vector.broadcast %cst_5 : f32 to vector<128x1xf32>
    %16 = arith.addf %14, %15 : vector<128x1xf32>
    %17 = math.rsqrt %16 : vector<128x1xf32>
    %18 = vector.broadcast %17 : vector<128x1xf32> to vector<128x32xf32>
    %19 = arith.mulf %9, %18 : vector<128x32xf32>
    %c0_6 = arith.constant 0 : index
    %c0_7 = arith.constant 0 : index
    %20 = vector.load %arg5[%c0_6, %c0_7] : memref<1x32xf32, #tpu.memory_space<vmem>>, vector<1x32xf32>
    %21 = vector.broadcast %20 : vector<1x32xf32> to vector<128x32xf32>
    %22 = arith.mulf %19, %21 : vector<128x32xf32>
    %c0_8 = arith.constant 0 : index
    %c0_9 = arith.constant 0 : index
    %23 = vector.load %arg6[%c0_8, %c0_9] : memref<1x32xf32, #tpu.memory_space<vmem>>, vector<1x32xf32>
    %24 = vector.broadcast %23 : vector<1x32xf32> to vector<128x32xf32>
    %25 = arith.addf %22, %24 : vector<128x32xf32>
    %26 = arith.truncf %25 : vector<128x32xf32> to vector<128x32xbf16>
    %c0_10 = arith.constant 0 : index
    %c0_11 = arith.constant 0 : index
    %27 = vector.load %arg9[%c0_10, %c0_11] : memref<128x64xf32, #tpu.memory_space<vmem>>, vector<128x64xf32>
    %c0_12 = arith.constant 0 : index
    %c0_13 = arith.constant 0 : index
    %28 = vector.load %arg4[%c0_12, %c0_13] : memref<32x64xf32, #tpu.memory_space<vmem>>, vector<32x64xf32>
    %29 = arith.truncf %28 : vector<32x64xf32> to vector<32x64xbf16>
    %cst_14 = arith.constant dense<0.000000e+00> : vector<128x64xf32>
    %30 = tpu.matmul %26, %29, %cst_14 {dimension_numbers = #tpu.dot_dimension_numbers<[1], [0], [0], [1], [0, 0, 1, 1], [], []>} : vector<128x32xbf16>, vector<32x64xbf16>, vector<128x64xf32> -> vector<128x64xf32>
    %31 = arith.addf %27, %30 : vector<128x64xf32>
    %c0_15 = arith.constant 0 : index
    %c0_16 = arith.constant 0 : index
    %32 = vector.load %arg9[%c0_15, %c0_16] : memref<128x64xf32, #tpu.memory_space<vmem>>, vector<128x64xf32>
    tpu.vector_store %arg9[%c0_15, %c0_16], %31 {strides = array<i32>} : memref<128x64xf32, #tpu.memory_space<vmem>>, vector<128x64xf32>,
    %c0_i32_17 = arith.constant 0 : i32
    %33 = arith.cmpi eq, %arg2, %c0_i32_17 : i32
    %34 = arith.extui %33 : i1 to i32
    %c0_i32_18 = arith.constant 0 : i32
    %35 = arith.cmpi ne, %34, %c0_i32_18 : i32
    scf.if %35 {
      %c0_19 = arith.constant 0 : index
      %c0_20 = arith.constant 0 : index
      %36 = vector.load %arg9[%c0_19, %c0_20] : memref<128x64xf32, #tpu.memory_space<vmem>>, vector<128x64xf32>
      %c0_21 = arith.constant 0 : index
      %c0_22 = arith.constant 0 : index
      %37 = vector.load %arg7[%c0_21, %c0_22] : memref<1x64xf32, #tpu.memory_space<vmem>>, vector<1x64xf32>
      %38 = vector.broadcast %37 : vector<1x64xf32> to vector<128x64xf32>
      %39 = arith.addf %36, %38 : vector<128x64xf32>
      %cst_23 = arith.constant 5.000000e-01 : f32
      %40 = vector.broadcast %cst_23 : f32 to vector<128x64xf32>
      %41 = arith.mulf %40, %39 : vector<128x64xf32>
      %cst_24 = arith.constant 4.471500e-02 : f32
      %42 = vector.broadcast %cst_24 : f32 to vector<128x64xf32>
      %43 = arith.mulf %42, %39 : vector<128x64xf32>
      %44 = arith.mulf %43, %39 : vector<128x64xf32>
      %45 = arith.mulf %44, %39 : vector<128x64xf32>
      %46 = arith.addf %39, %45 : vector<128x64xf32>
      %cst_25 = arith.constant 0.797884583 : f32
      %47 = vector.broadcast %cst_25 : f32 to vector<128x64xf32>
      %48 = arith.mulf %47, %46 : vector<128x64xf32>
      %49 = math.tanh %48 : vector<128x64xf32>
      %cst_26 = arith.constant 1.000000e+00 : f32
      %50 = vector.broadcast %cst_26 : f32 to vector<128x64xf32>
      %51 = arith.addf %50, %49 : vector<128x64xf32>
      %52 = arith.mulf %41, %51 : vector<128x64xf32>
      %c0_27 = arith.constant 0 : index
      %c0_28 = arith.constant 0 : index
      %53 = vector.load %arg8[%c0_27, %c0_28] : memref<128x64xf32, #tpu.memory_space<vmem>>, vector<128x64xf32>
      tpu.vector_store %arg8[%c0_27, %c0_28], %52 {strides = array<i32>} : memref<128x64xf32, #tpu.memory_space<vmem>>, vector<128x64xf32>,
    } else {
    }
    return
  }
  func.func @transform_0(%arg0: i32, %arg1: i32, %arg2: i32) -> (i32, i32) {
    %c0_i32 = arith.constant 0 : i32
    return %arg0, %arg2 : i32, i32
  }
  func.func @transform_1(%arg0: i32, %arg1: i32, %arg2: i32) -> (i32, i32) {
    %c0_i32 = arith.constant 0 : i32
    return %arg2, %arg1 : i32, i32
  }
  func.func @transform_2(%arg0: i32, %arg1: i32, %arg2: i32) -> (i32, i32) {
    %c0_i32 = arith.constant 0 : i32
    %c0_i32_0 = arith.constant 0 : i32
    return %c0_i32, %arg2 : i32, i32
  }
  func.func @transform_3(%arg0: i32, %arg1: i32, %arg2: i32) -> (i32, i32) {
    %c0_i32 = arith.constant 0 : i32
    %c0_i32_0 = arith.constant 0 : i32
    return %c0_i32, %arg2 : i32, i32
  }
  func.func @transform_4(%arg0: i32, %arg1: i32, %arg2: i32) -> (i32, i32) {
    %c0_i32 = arith.constant 0 : i32
    %c0_i32_0 = arith.constant 0 : i32
    return %c0_i32, %arg1 : i32, i32
  }
  func.func @transform_5(%arg0: i32, %arg1: i32, %arg2: i32) -> (i32, i32) {
    %c0_i32 = arith.constant 0 : i32
    return %arg0, %arg1 : i32, i32
  }
}

module attributes {stable_mosaic.version = 11 : i64} {
  func.func @kernel(%arg0: i32, %arg1: i32, %arg2: i32, %arg3: memref<128x64xf32, #tpu.memory_space<vmem>>, %arg4: memref<64x32xf32, #tpu.memory_space<vmem>>, %arg5: memref<1x32xf32, #tpu.memory_space<vmem>>, %arg6: memref<128x32xf32, #tpu.memory_space<vmem>>, %arg7: memref<128x32xf32, #tpu.memory_space<vmem>>, %arg8: memref<128x32xf32, #tpu.memory_space<vmem>>) attributes {dimension_semantics = [#tpu.dimension_semantics<parallel>, #tpu.dimension_semantics<parallel>, #tpu.dimension_semantics<arbitrary>], iteration_bounds = array<i64: 1, 1, 1>, scalar_prefetch = 0 : i64, scratch_operands = 1 : i64, tpu.core_type = #tpu.core_type<tc>, window_params = [{transform_indices = @transform_0, window_bounds = array<i64: 128, 64>}, {transform_indices = @transform_1, window_bounds = array<i64: 64, 32>}, {transform_indices = @transform_2, window_bounds = array<i64: 1, 32>}, {transform_indices = @transform_3, window_bounds = array<i64: 128, 32>}, {transform_indices = @transform_4, window_bounds = array<i64: 128, 32>}]} {
    %c0_i32 = arith.constant 0 : i32
    %0 = arith.cmpi eq, %arg2, %c0_i32 : i32
    %1 = arith.extui %0 : i1 to i32
    %c0_i32_0 = arith.constant 0 : i32
    %2 = arith.cmpi ne, %1, %c0_i32_0 : i32
    scf.if %2 {
      %cst_10 = arith.constant 0.000000e+00 : f32
      %14 = vector.broadcast %cst_10 : f32 to vector<128x32xf32>
      %c0_11 = arith.constant 0 : index
      %c0_12 = arith.constant 0 : index
      %15 = vector.load %arg8[%c0_11, %c0_12] : memref<128x32xf32, #tpu.memory_space<vmem>>, vector<128x32xf32>
      tpu.vector_store %arg8[%c0_11, %c0_12], %14 {strides = array<i32>} : memref<128x32xf32, #tpu.memory_space<vmem>>, vector<128x32xf32>,
    } else {
    }
    %c0 = arith.constant 0 : index
    %c0_1 = arith.constant 0 : index
    %3 = vector.load %arg3[%c0, %c0_1] : memref<128x64xf32, #tpu.memory_space<vmem>>, vector<128x64xf32>
    %4 = arith.truncf %3 : vector<128x64xf32> to vector<128x64xbf16>
    %c0_2 = arith.constant 0 : index
    %c0_3 = arith.constant 0 : index
    %5 = vector.load %arg8[%c0_2, %c0_3] : memref<128x32xf32, #tpu.memory_space<vmem>>, vector<128x32xf32>
    %c0_4 = arith.constant 0 : index
    %c0_5 = arith.constant 0 : index
    %6 = vector.load %arg4[%c0_4, %c0_5] : memref<64x32xf32, #tpu.memory_space<vmem>>, vector<64x32xf32>
    %7 = arith.truncf %6 : vector<64x32xf32> to vector<64x32xbf16>
    %cst = arith.constant dense<0.000000e+00> : vector<128x32xf32>
    %8 = tpu.matmul %4, %7, %cst {dimension_numbers = #tpu.dot_dimension_numbers<[1], [0], [0], [1], [0, 0, 1, 1], [], []>} : vector<128x64xbf16>, vector<64x32xbf16>, vector<128x32xf32> -> vector<128x32xf32>
    %9 = arith.addf %5, %8 : vector<128x32xf32>
    %c0_6 = arith.constant 0 : index
    %c0_7 = arith.constant 0 : index
    %10 = vector.load %arg8[%c0_6, %c0_7] : memref<128x32xf32, #tpu.memory_space<vmem>>, vector<128x32xf32>
    tpu.vector_store %arg8[%c0_6, %c0_7], %9 {strides = array<i32>} : memref<128x32xf32, #tpu.memory_space<vmem>>, vector<128x32xf32>,
    %c0_i32_8 = arith.constant 0 : i32
    %11 = arith.cmpi eq, %arg2, %c0_i32_8 : i32
    %12 = arith.extui %11 : i1 to i32
    %c0_i32_9 = arith.constant 0 : i32
    %13 = arith.cmpi ne, %12, %c0_i32_9 : i32
    scf.if %13 {
      %c0_10 = arith.constant 0 : index
      %c0_11 = arith.constant 0 : index
      %14 = vector.load %arg8[%c0_10, %c0_11] : memref<128x32xf32, #tpu.memory_space<vmem>>, vector<128x32xf32>
      %c0_12 = arith.constant 0 : index
      %c0_13 = arith.constant 0 : index
      %15 = vector.load %arg5[%c0_12, %c0_13] : memref<1x32xf32, #tpu.memory_space<vmem>>, vector<1x32xf32>
      %16 = vector.broadcast %15 : vector<1x32xf32> to vector<128x32xf32>
      %17 = arith.addf %14, %16 : vector<128x32xf32>
      %c0_14 = arith.constant 0 : index
      %c0_15 = arith.constant 0 : index
      %18 = vector.load %arg6[%c0_14, %c0_15] : memref<128x32xf32, #tpu.memory_space<vmem>>, vector<128x32xf32>
      %19 = arith.addf %17, %18 : vector<128x32xf32>
      %c0_16 = arith.constant 0 : index
      %c0_17 = arith.constant 0 : index
      %20 = vector.load %arg7[%c0_16, %c0_17] : memref<128x32xf32, #tpu.memory_space<vmem>>, vector<128x32xf32>
      tpu.vector_store %arg7[%c0_16, %c0_17], %19 {strides = array<i32>} : memref<128x32xf32, #tpu.memory_space<vmem>>, vector<128x32xf32>,
    } else {
    }
    return
  }
  func.func @transform_0(%arg0: i32, %arg1: i32, %arg2: i32) -> (i32, i32) {
    %c0_i32 = arith.constant 0 : i32
    return %arg0, %arg2 : i32, i32
  }
  func.func @transform_1(%arg0: i32, %arg1: i32, %arg2: i32) -> (i32, i32) {
    %c0_i32 = arith.constant 0 : i32
    return %arg2, %arg1 : i32, i32
  }
  func.func @transform_2(%arg0: i32, %arg1: i32, %arg2: i32) -> (i32, i32) {
    %c0_i32 = arith.constant 0 : i32
    %c0_i32_0 = arith.constant 0 : i32
    return %c0_i32, %arg1 : i32, i32
  }
  func.func @transform_3(%arg0: i32, %arg1: i32, %arg2: i32) -> (i32, i32) {
    %c0_i32 = arith.constant 0 : i32
    return %arg0, %arg1 : i32, i32
  }
  func.func @transform_4(%arg0: i32, %arg1: i32, %arg2: i32) -> (i32, i32) {
    %c0_i32 = arith.constant 0 : i32
    return %arg0, %arg1 : i32, i32
  }
}

</mosaic_0001>

<llo_original>
// kernel: _lambda_.11
$region0: #{_lambda_.11}
  #allocation0 [shape = 'u32[]', space=smem, size = 0x4, offset = 0x4, fixed_abs, tag = 'smem constant byte address 0x4 - core index']
  #allocation1 [shape = 'u32[144,128]{1,0:T(1,128)}', space=vmem, size = 0x12000, scoped, tag = 'internal scratch']
  %s0 = inlined_call_operand.vmem [shape: f32[2,64,16], index: 0, kind: input, shape index: {}]
  %s1 = inlined_call_operand.vmem [shape: f32[16,32], index: 1, kind: input, shape index: {}]
  %s2 = inlined_call_operand.vmem [shape: f32[64,32], index: 2, kind: input, shape index: {}]
  %s3 = inlined_call_operand.hbm [shape: f32[2,64,32], index: 3, kind: output, shape index: {}]
  %s4 = sld [smem:[#allocation0]]
  $region45: #{_lambda_.11} parent=0
    _
  %s6 = ssub.s32 1, %s4
  %s7 = scalar_select 0, %s6, %s4
  $region1: #{_lambda_.11} parent=0
    #allocation2 [shape = 'u8[65536]{0}', space=vmem, size = 0x10000, scoped, tag = 'output window, operand 0']
    #allocation3 [shape = 's32[2]{0}', space=sflag, size = 0x8, scoped, tag = 'scoped memory for _lambda_.11']
    %8 = vsyncpa [#allocation3], 0
    %s9 = scalar_lea.sflag [#allocation3], 1
    %10 = vsyncpa %s9, 0
    loop: start=0, step=1, limit=4
    $region2: #{_lambda_.11} parent=1 // loop_pre_header
      _
    $region3: #{_lambda_.11} parent=1 // loop_header
      %s12 = sphi 0, %s16
      %p13 = scmp.ge.s32.totalorder %s12, 4
      %s22 = sphi 0, %s24
      %s25 = sphi 0, %s22
      %s26 = sphi 0, %s25
      %s42 = sphi 0, %s26
      %s46 = sphi 0, %s46
      %s48 = sphi 0, %s46
      %s49 = sphi 0, %s48
      %s63 = sphi 0, %s49
      %s67 = sphi 0, %s67
      %s69 = sphi 0, %s67
      %s70 = sphi 0, %s69
      %s84 = sphi 0, %s70
      %s90 = sphi 0, %s92
      %s93 = sphi 0, %s90
      %s94 = sphi 0, %s93
      %s110 = sphi 0, %s94
    $region4: #{_lambda_.11} parent=1 // loop_header_branch
      %15 = sbr.rel (%p13) target = $region8
    $region5: #{_lambda_.11} parent=1 // loop_body
      %s17 = ssub.s32 %s12, 1
      %s18 = ssub.s32 %s12, 2
      %s19 = sadd.s32 %s12, 1
      %s20 = ssub.s32 %s12, %s19
      %p21 = scmp.eq.s32.totalorder %s20, 0
      %s23 = sadd.s32 %s22, 1
      %s24 = scalar_select %p21, %s22, %s23
      %p27 = pneg %p21
      %p28 = scmp.eq.s32.totalorder %s12, 1
      %p29 = por %p27, %p28
      %p30 = scmp.ne.s32.totalorder %s22, %s25
      %p31 = scmp.eq.s32.totalorder %s12, 0
      %p32 = por %p30, %p31
      %p33 = scmp.ne.s32.totalorder %s22, %s25
      %p34 = scmp.eq.s32.totalorder %s17, 1
      %p35 = por %p33, %p34
      %p36 = scmp.ne.s32.totalorder %s25, %s26
      %p37 = scmp.eq.s32.totalorder %s17, 0
      %p38 = por %p36, %p37
      %p39 = scmp.ne.s32.totalorder %s25, %s26
      %p40 = scmp.eq.s32.totalorder %s18, 1
      %p41 = por %p39, %p40
      %p43 = scmp.ne.s32.totalorder %s26, %s42
      %p44 = scmp.eq.s32.totalorder %s18, 0
      %p45 = por %p43, %p44
      %s47 = sadd.s32 %s46, 1
      %p50 = scmp.eq.s32.totalorder %s12, 1
      %p51 = scmp.ne.s32.totalorder %s46, %s48
      %p52 = scmp.eq.s32.totalorder %s12, 0
      %p53 = por %p51, %p52
      %p54 = scmp.ne.s32.totalorder %s46, %s48
      %p55 = scmp.eq.s32.totalorder %s17, 1
      %p56 = por %p54, %p55
      %p57 = scmp.ne.s32.totalorder %s48, %s49
      %p58 = scmp.eq.s32.totalorder %s17, 0
      %p59 = por %p57, %p58
      %p60 = scmp.ne.s32.totalorder %s48, %s49
      %p61 = scmp.eq.s32.totalorder %s18, 1
      %p62 = por %p60, %p61
      %p64 = scmp.ne.s32.totalorder %s49, %s63
      %p65 = scmp.eq.s32.totalorder %s18, 0
      %p66 = por %p64, %p65
      %s68 = sadd.s32 %s67, 1
      %p71 = scmp.eq.s32.totalorder %s12, 1
      %p72 = scmp.ne.s32.totalorder %s67, %s69
      %p73 = scmp.eq.s32.totalorder %s12, 0
      %p74 = por %p72, %p73
      %p75 = scmp.ne.s32.totalorder %s67, %s69
      %p76 = scmp.eq.s32.totalorder %s17, 1
      %p77 = por %p75, %p76
      %p78 = scmp.ne.s32.totalorder %s69, %s70
      %p79 = scmp.eq.s32.totalorder %s17, 0
      %p80 = por %p78, %p79
      %p81 = scmp.ne.s32.totalorder %s69, %s70
      %p82 = scmp.eq.s32.totalorder %s18, 1
      %p83 = por %p81, %p82
      %p85 = scmp.ne.s32.totalorder %s70, %s84
      %p86 = scmp.eq.s32.totalorder %s18, 0
      %p87 = por %p85, %p86
      %s88 = ssub.s32 %s12, %s19
      %p89 = scmp.eq.s32.totalorder %s88, 0
      %s91 = sadd.s32 %s90, 1
      %s92 = scalar_select %p89, %s90, %s91
      %p95 = pneg %p89
      %p96 = scmp.eq.s32.totalorder %s12, 1
      %p97 = por %p95, %p96
      %p98 = scmp.ne.s32.totalorder %s90, %s93
      %p99 = scmp.eq.s32.totalorder %s12, 0
      %p100 = por %p98, %p99
      %p101 = scmp.ne.s32.totalorder %s90, %s93
      %p102 = scmp.eq.s32.totalorder %s17, 1
      %p103 = por %p101, %p102
      %p104 = scmp.ne.s32.totalorder %s93, %s94
      %p105 = scmp.eq.s32.totalorder %s17, 0
      %p106 = por %p104, %p105
      %p107 = scmp.ne.s32.totalorder %s93, %s94
      %p108 = scmp.eq.s32.totalorder %s18, 1
      %p109 = por %p107, %p108
      %p111 = scmp.ne.s32.totalorder %s94, %s110
      %p112 = scmp.eq.s32.totalorder %s18, 0
      %p113 = por %p111, %p112
      %p114 = scmp.le.s32.totalorder 1, %s12
      %p115 = scmp.lt.s32.totalorder %s12, 3
      %p116 = pnand %p114, %p115
      %p117 = pneg %p116
      // Predicated region
      $region9: #{_lambda_.11} parent=5 // pred_check
        _
      $region10: #{_lambda_.11} parent=5 // pred_check_branch
        %119 = sbr.rel (%p116) target = $region12
      $region11: #{_lambda_.11} parent=5 // pred_region
        %s120 = ssub.s32 %s12, 1
        // Predicated region
        $region13: #{_lambda_.11} parent=11 // pred_check
          %p121 = pneg %p59
        $region14: #{_lambda_.11} parent=11 // pred_check_branch
          %123 = sbr.rel (%p121) target = $region16
        $region15: #{_lambda_.11} parent=11 // pred_region
          _
        $region16: #{_lambda_.11} parent=11 // pred_fallthru
          _
        // Predicated region
        $region17: #{_lambda_.11} parent=11 // pred_check
          %p124 = pneg %p80
        $region18: #{_lambda_.11} parent=11 // pred_check_branch
          %126 = sbr.rel (%p124) target = $region20
        $region19: #{_lambda_.11} parent=11 // pred_region
          _
        $region20: #{_lambda_.11} parent=11 // pred_fallthru
          _
      $region12: #{_lambda_.11} parent=5 // pred_fallthru
        _
      %p127 = scmp.lt.s32.totalorder %s12, 2
      // Predicated region
      $region21: #{_lambda_.11} parent=5 // pred_check
        %p128 = pneg %p127
      $region22: #{_lambda_.11} parent=5 // pred_check_branch
        %130 = sbr.rel (%p128) target = $region24
      $region23: #{_lambda_.11} parent=5 // pred_region
        // Predicated region
        $region25: #{_lambda_.11} parent=23 // pred_check
          %p131 = pneg %p32
        $region26: #{_lambda_.11} parent=23 // pred_check_branch
          %133 = sbr.rel (%p131) target = $region28
        $region27: #{_lambda_.11} parent=23 // pred_region
          %p134 = scmp.lt.s32.totalorder %s12, 1
          %s135 = scalar_select %p134, %s12, 1
          %s136 = smul.addr %s135, 8
          %s137 = smul.addr %s136, 8
          %s138 = scalar_lea.vmem %s0, %s137
        $region28: #{_lambda_.11} parent=23 // pred_fallthru
          _
      $region24: #{_lambda_.11} parent=5 // pred_fallthru
        _
      %p139 = scmp.le.s32.totalorder 1, %s12
      %p140 = scmp.lt.s32.totalorder %s12, 3
      %p141 = pnand %p139, %p140
      %p142 = pneg %p141
      // Predicated region
      $region29: #{_lambda_.11} parent=5 // pred_check
        _
      $region30: #{_lambda_.11} parent=5 // pred_check_branch
        %144 = sbr.rel (%p141) target = $region32
      $region31: #{_lambda_.11} parent=5 // pred_region
        %s145 = ssub.s32 %s12, 1
        %p146 = scmp.lt.s32.totalorder %s17, 1
        %s147 = scalar_select %p146, %s17, 1
        %s148 = smul.addr %s147, 8
        %s149 = smul.addr %s148, 8
        %s150 = scalar_lea.vmem %s0, %s149
        %p151 = pneg %p38
        %p152 = pneg %p35
        %p153 = pneg %p59
        %p154 = pneg %p56
        %p155 = pneg %p80
        %p156 = pneg %p77
        %p157 = pneg %p106
        %p158 = pneg %p103
        %s159 = sand.u32 %s93, 1
        %s160 = scalar_lea.sflag [#allocation3], %s159
        %s161 = sand.u32 %s93, 1
        %s162 = smul.addr %s161, 64
        %s163 = scalar_lea.vmem [#allocation2], %s162
        %p164 = scmp.lt.s32.totalorder %s17, 1
        %s165 = scalar_select %p164, %s17, 1
        %s166 = smul.addr %s165, 8
        %s167 = smul.addr %s166, 8
        %s168 = scalar_lea.vmem %s0, %s167
        %v170 = vld [vmem:[%s168] sm:$0xff]
        %v171 = vld [vmem:[%s168 + $0x8] sm:$0xff]
        %v172 = vld [vmem:[%s168 + $0x10] sm:$0xff]
        %v173 = vld [vmem:[%s168 + $0x18] sm:$0xff]
        %v174 = vld [vmem:[%s168 + $0x20] sm:$0xff]
        %v175 = vld [vmem:[%s168 + $0x28] sm:$0xff]
        %v176 = vld [vmem:[%s168 + $0x30] sm:$0xff]
        %v177 = vld [vmem:[%s168 + $0x38] sm:$0xff]
        %v178 = vpack.c.bf16 %v171, %v170
        %v179 = vpack.c.bf16 %v173, %v172
        %v180 = vpack.c.bf16 %v175, %v174
        %v181 = vpack.c.bf16 %v177, %v176
        %v182 = vld [vmem:[%s1] sm:$0xff]
        %v183 = vld [vmem:[%s1 + $0x8] sm:$0xff]
        %v184 = vpack.c.bf16 %v183, %v182
        %v185 = vld [vmem:[%s2] sm:$0xff]
        %v186 = vld [vmem:[%s2 + $0x8] sm:$0xff]
        %v187 = vld [vmem:[%s2 + $0x10] sm:$0xff]
        %v188 = vld [vmem:[%s2 + $0x18] sm:$0xff]
        %v189 = vld [vmem:[%s2 + $0x20] sm:$0xff]
        %v190 = vld [vmem:[%s2 + $0x28] sm:$0xff]
        %v191 = vld [vmem:[%s2 + $0x30] sm:$0xff]
        %v192 = vld [vmem:[%s2 + $0x38] sm:$0xff]
        %vm193 = vcmask 130048
        %v195 = vsel %vm193, %v178, 0
        %v198 = vsel %vm193, %v179, 0
        %v201 = vsel %vm193, %v180, 0
        %v204 = vsel %vm193, %v181, 0
        %206 = vmatprep.subr.bf16.mxu0 0
        %207 = vmatpush1.bf16.msra.mxu0 %v184
        %208 = vmatprep.subr.bf16.mxu0 0
        %209 = vmatpush1.bf16.msra.mxu0 0
        %210 = vmatprep.subr.bf16.mxu0 0
        %211 = vmatpush1.bf16.msra.mxu0 0
        %212 = vmatprep.subr.bf16.mxu0 0
        %213 = vmatpush1.bf16.msra.mxu0 0
        %214 = vmatprep.subr.bf16.mxu0 0
        %215 = vmatpush1.bf16.msra.mxu0 0
        %216 = vmatprep.subr.bf16.mxu0 0
        %217 = vmatpush1.bf16.msra.mxu0 0
        %218 = vmatprep.subr.bf16.mxu0 0
        %219 = vmatpush1.bf16.msra.mxu0 0
        %220 = vmatprep.subr.bf16.mxu0 0
        %221 = vmatpush1.bf16.msra.mxu0 0
        %222 = vmatprep.subr.bf16.mxu0 0
        %223 = vmatpush1.bf16.msra.mxu0 0
        %224 = vmatprep.subr.bf16.mxu0 0
        %225 = vmatpush1.bf16.msra.mxu0 0
        %226 = vmatprep.subr.bf16.mxu0 0
        %227 = vmatpush1.bf16.msra.mxu0 0
        %228 = vmatprep.subr.bf16.mxu0 0
        %229 = vmatpush1.bf16.msra.mxu0 0
        %230 = vmatprep.subr.bf16.mxu0 0
        %231 = vmatpush1.bf16.msra.mxu0 0
        %232 = vmatprep.subr.bf16.mxu0 0
        %233 = vmatpush1.bf16.msra.mxu0 0
        %234 = vmatprep.subr.bf16.mxu0 0
        %235 = vmatpush1.bf16.msra.mxu0 0
        %236 = vmatprep.subr.bf16.mxu0 0
        %237 = vmatpush1.bf16.msra.mxu0 0
        %238 = vmatprep.mubr.bf16.mxu0 0
        %239 = vmatmul.mubr.bf16.gmra.mrb[0].mxu0 %v195
        %v240 = vpop.f32.mrb[0].mxu0
        %v241 = vadd.f32 %v185, %v240
        %v242 = vpop.f32.mrb[0].mxu0
        %v243 = vpop.f32.mrb[0].mxu0
        %v244 = vadd.f32 %v186, %v243
        %v245 = vpop.f32.mrb[0].mxu0
        %246 = vmatprep.mubr.bf16.mxu0 0
        %247 = vmatmul.mubr.bf16.gmra.mrb[0].mxu0 %v198
        %v248 = vpop.f32.mrb[0].mxu0
        %v249 = vadd.f32 %v187, %v248
        %v250 = vpop.f32.mrb[0].mxu0
        %v251 = vpop.f32.mrb[0].mxu0
        %v252 = vadd.f32 %v188, %v251
        %v253 = vpop.f32.mrb[0].mxu0
        %254 = vmatprep.mubr.bf16.mxu0 0
        %255 = vmatmul.mubr.bf16.gmra.mrb[0].mxu0 %v201
        %v256 = vpop.f32.mrb[0].mxu0
        %v257 = vadd.f32 %v189, %v256
        %v258 = vpop.f32.mrb[0].mxu0
        %v259 = vpop.f32.mrb[0].mxu0
        %v260 = vadd.f32 %v190, %v259
        %v261 = vpop.f32.mrb[0].mxu0
        %262 = vmatprep.mubr.bf16.mxu0 0
        %263 = vmatmul.mubr.bf16.gmra.mrb[0].mxu0 %v204
        %v264 = vpop.f32.mrb[0].mxu0
        %v265 = vadd.f32 %v191, %v264
        %v266 = vpop.f32.mrb[0].mxu0
        %v267 = vpop.f32.mrb[0].mxu0
        %v268 = vadd.f32 %v192, %v267
        %v269 = vpop.f32.mrb[0].mxu0
        %270 = vdwg.mxu0
        %vm271 = vcmask 261120
        %272 = vst.msk [vmem:[%s163] sm:$0xff] %vm271, %v241
        %273 = vst.msk [vmem:[%s163 + $0x8] sm:$0xff] %vm271, %v244
        %274 = vst.msk [vmem:[%s163 + $0x10] sm:$0xff] %vm271, %v249
        %275 = vst.msk [vmem:[%s163 + $0x18] sm:$0xff] %vm271, %v252
        %276 = vst.msk [vmem:[%s163 + $0x20] sm:$0xff] %vm271, %v257
        %277 = vst.msk [vmem:[%s163 + $0x28] sm:$0xff] %vm271, %v260
        %278 = vst.msk [vmem:[%s163 + $0x30] sm:$0xff] %vm271, %v265
        %279 = vst.msk [vmem:[%s163 + $0x38] sm:$0xff] %vm271, %v268
        %s280 = sand.u32 %s93, 1
        %s281 = scalar_lea.sflag [#allocation3], %s280
        %s282 = sand.u32 %s93, 1
        %s283 = smul.addr %s282, 64
        %s284 = scalar_lea.vmem [#allocation2], %s283
        // Predicated region
        $region33: #{_lambda_.11} parent=31 // pred_check
          %p285 = pneg %p103
        $region34: #{_lambda_.11} parent=31 // pred_check_branch
          %287 = sbr.rel (%p285) target = $region36
        $region35: #{_lambda_.11} parent=31 // pred_region
          %s289 = ssub.s32 1024, 1024
          %290 = vsyncadd %s281, %s289
          %s291 = smul.addr %s17, 8
          %s292 = smul.addr %s291, 128
          %s293 = scalar_lea.hbm %s3, %s292
          %s294 = sshll.u32 %s284, 4
          %s295 = int_to_ptr.vmem [resolvable:$true] %s294
          %300 = dma.vmem_to_hbm [thread:$0]  %s295, 1024, %s293, %s281, 128, 128, 8
        $region36: #{_lambda_.11} parent=31 // pred_fallthru
          _
      $region32: #{_lambda_.11} parent=5 // pred_fallthru
        _
      %p301 = scmp.le.s32.totalorder 2, %s12
      // Predicated region
      $region37: #{_lambda_.11} parent=5 // pred_check
        %p302 = pneg %p301
      $region38: #{_lambda_.11} parent=5 // pred_check_branch
        %304 = sbr.rel (%p302) target = $region40
      $region39: #{_lambda_.11} parent=5 // pred_region
        %s305 = ssub.s32 %s12, 2
        // Predicated region
        $region41: #{_lambda_.11} parent=39 // pred_check
          %p306 = pneg %p109
        $region42: #{_lambda_.11} parent=39 // pred_check_branch
          %308 = sbr.rel (%p306) target = $region44
        $region43: #{_lambda_.11} parent=39 // pred_region
          %s309 = sand.u32 %s94, 1
          %s310 = scalar_lea.sflag [#allocation3], %s309
          %s311 = sand.u32 %s94, 1
          %s312 = smul.addr %s311, 64
          %s313 = scalar_lea.vmem [#allocation2], %s312
          %314 = dma.done %s310, 1024
        $region44: #{_lambda_.11} parent=39 // pred_fallthru
          _
      $region40: #{_lambda_.11} parent=5 // pred_fallthru
        _
    $region6: #{_lambda_.11} parent=1 // loop_footer
      %s16 = sadd.s32 1, %s12
    $region7: #{_lambda_.11} parent=1 // loop_footer_branch
      %11 = sbr.rel target = $region3
    $region8: #{_lambda_.11} parent=1 // loop_exit
      _
    %315 = vsyncpa [#allocation3], 1
    %s316 = scalar_lea.sflag [#allocation3], 1
    %317 = vsyncpa %s316, 1

// kernel: _lambda_.14
$region0: #{_lambda_.14}
  #allocation0 [shape = 'u32[]', space=smem, size = 0x4, offset = 0x4, fixed_abs, tag = 'smem constant byte address 0x4 - core index']
  #allocation1 [shape = 'u32[144,128]{1,0:T(1,128)}', space=vmem, size = 0x12000, scoped, tag = 'internal scratch']
  #allocation2 [shape = 'f32[128,32]{1,0:T(8,128)}', space=vmem, size = 0x10000, scoped, tag = 'scratch operand']
  %s0 = inlined_call_operand.hbm [shape: f32[128,32], index: 0, kind: input, shape index: {}]
  %s1 = inlined_call_operand.hbm [shape: f32[32,32], index: 1, kind: input, shape index: {}]
  %s2 = inlined_call_operand.hbm [shape: f32[1,32], index: 2, kind: input, shape index: {}]
  %s3 = inlined_call_operand.hbm [shape: f32[128,32], index: 3, kind: input, shape index: {}]
  %s4 = inlined_call_operand.hbm [shape: f32[128,32], index: 4, kind: output, shape index: {}]
  %s5 = sld [smem:[#allocation0]]
  $region50: #{_lambda_.14} parent=0
    _
  %s7 = ssub.s32 1, %s5
  %s8 = scalar_select 0, %s7, %s5
  $region1: #{_lambda_.14} parent=0
    #allocation3 [shape = 'u8[65536]{0}', space=vmem, size = 0x10000, scoped, tag = 'input window, operand 0, single buffered']
    #allocation4 [shape = 's32[1]{0}', space=sflag, size = 0x4, scoped, tag = 'scoped memory for _lambda_.14']
    #allocation5 [shape = 's32[1]{0}', space=sflag, size = 0x4, scoped, tag = 'scoped memory for _lambda_.14']
    #allocation6 [shape = 'u8[16384]{0}', space=vmem, size = 0x4000, scoped, tag = 'input window, operand 1, single buffered']
    #allocation7 [shape = 's32[1]{0}', space=sflag, size = 0x4, scoped, tag = 'scoped memory for _lambda_.14']
    #allocation8 [shape = 'u8[512]{0}', space=vmem, size = 0x400, scoped, tag = 'input window, operand 2, single buffered']
    #allocation9 [shape = 'u8[65536]{0}', space=vmem, size = 0x10000, scoped, tag = 'input window, operand 3, single buffered']
    #allocation10 [shape = 's32[1]{0}', space=sflag, size = 0x4, scoped, tag = 'scoped memory for _lambda_.14']
    #allocation11 [shape = 'u8[65536]{0}', space=vmem, size = 0x10000, scoped, tag = 'output window, operand 0, single buffered']
    %9 = vsyncpa [#allocation4], 0
    %10 = vsyncpa [#allocation7], 0
    %11 = vsyncpa [#allocation10], 0
    %12 = vsyncpa [#allocation5], 0
    // Predicated region
    $region2: #{_lambda_.14} parent=1 // pred_check
      _
    $region3: #{_lambda_.14} parent=1 // pred_check_branch
      %14 = sbr.rel (0) target = $region5
    $region4: #{_lambda_.14} parent=1 // pred_region
      %s16 = ssub.s32 2048, 2048
      %17 = vsyncadd [#allocation4], %s16
      %s18 = sshll.u32 [#allocation3], 4
      %s19 = int_to_ptr.vmem [resolvable:$true] %s18
      %24 = dma.hbm_to_vmem [thread:$0]  %s0, 2048, %s19, [#allocation4], 128, 128, 8
    $region5: #{_lambda_.14} parent=1 // pred_fallthru
      _
    // Predicated region
    $region6: #{_lambda_.14} parent=1 // pred_check
      _
    $region7: #{_lambda_.14} parent=1 // pred_check_branch
      %26 = sbr.rel (0) target = $region9
    $region8: #{_lambda_.14} parent=1 // pred_region
      %s28 = ssub.s32 512, 512
      %29 = vsyncadd [#allocation7], %s28
      %s30 = sshll.u32 [#allocation6], 4
      %s31 = int_to_ptr.vmem [resolvable:$true] %s30
      %36 = dma.hbm_to_vmem [thread:$0]  %s1, 512, %s31, [#allocation7], 128, 128, 8
    $region9: #{_lambda_.14} parent=1 // pred_fallthru
      _
    // Predicated region
    $region10: #{_lambda_.14} parent=1 // pred_check
      _
    $region11: #{_lambda_.14} parent=1 // pred_check_branch
      %38 = sbr.rel (0) target = $region13
    $region12: #{_lambda_.14} parent=1 // pred_region
      %s40 = ssub.s32 16, 16
      %41 = vsyncadd [#allocation7], %s40
      %s43 = sshll.u32 [#allocation8], 4
      %s44 = int_to_ptr.vmem [resolvable:$true] %s43
      %46 = dma.hbm_to_vmem [thread:$0]  %s2, 16, %s44, [#allocation7]
    $region13: #{_lambda_.14} parent=1 // pred_fallthru
      _
    // Predicated region
    $region14: #{_lambda_.14} parent=1 // pred_check
      _
    $region15: #{_lambda_.14} parent=1 // pred_check_branch
      %48 = sbr.rel (0) target = $region17
    $region16: #{_lambda_.14} parent=1 // pred_region
      %s50 = ssub.s32 2048, 2048
      %51 = vsyncadd [#allocation10], %s50
      %s52 = sshll.u32 [#allocation9], 4
      %s53 = int_to_ptr.vmem [resolvable:$true] %s52
      %58 = dma.hbm_to_vmem [thread:$0]  %s3, 2048, %s53, [#allocation10], 128, 128, 8
    $region17: #{_lambda_.14} parent=1 // pred_fallthru
      _
    // Predicated region
    $region18: #{_lambda_.14} parent=1 // pred_check
      _
    $region19: #{_lambda_.14} parent=1 // pred_check_branch
      %60 = sbr.rel (0) target = $region21
    $region20: #{_lambda_.14} parent=1 // pred_region
      %61 = dma.done [#allocation4], 2048
    $region21: #{_lambda_.14} parent=1 // pred_fallthru
      _
    // Predicated region
    $region22: #{_lambda_.14} parent=1 // pred_check
      _
    $region23: #{_lambda_.14} parent=1 // pred_check_branch
      %63 = sbr.rel (0) target = $region25
    $region24: #{_lambda_.14} parent=1 // pred_region
      %64 = dma.done [#allocation7], 512
    $region25: #{_lambda_.14} parent=1 // pred_fallthru
      _
    // Predicated region
    $region26: #{_lambda_.14} parent=1 // pred_check
      _
    $region27: #{_lambda_.14} parent=1 // pred_check_branch
      %66 = sbr.rel (0) target = $region29
    $region28: #{_lambda_.14} parent=1 // pred_region
      %67 = dma.done [#allocation7], 16
    $region29: #{_lambda_.14} parent=1 // pred_fallthru
      _
    // Predicated region
    $region30: #{_lambda_.14} parent=1 // pred_check
      _
    $region31: #{_lambda_.14} parent=1 // pred_check_branch
      %69 = sbr.rel (0) target = $region33
    $region32: #{_lambda_.14} parent=1 // pred_region
      %70 = dma.done [#allocation10], 2048
    $region33: #{_lambda_.14} parent=1 // pred_fallthru
      _
    %p72 = scmp.eq.s32.totalorder 0, 0
    // Predicated region
    $region34: #{_lambda_.14} parent=1 // pred_check
      %p73 = pneg %p72
    $region35: #{_lambda_.14} parent=1 // pred_check_branch
      %75 = sbr.rel (%p73) target = $region37
    $region36: #{_lambda_.14} parent=1 // pred_region
      %vm76 = vcmask 261120
      %77 = vst.msk [vmem:[#allocation2] sm:$0xff] %vm76, 0.0
      %78 = vst.msk [vmem:[#allocation2 + $0x8] sm:$0xff] %vm76, 0.0
      %79 = vst.msk [vmem:[#allocation2 + $0x10] sm:$0xff] %vm76, 0.0
      %80 = vst.msk [vmem:[#allocation2 + $0x18] sm:$0xff] %vm76, 0.0
      %81 = vst.msk [vmem:[#allocation2 + $0x20] sm:$0xff] %vm76, 0.0
      %82 = vst.msk [vmem:[#allocation2 + $0x28] sm:$0xff] %vm76, 0.0
      %83 = vst.msk [vmem:[#allocation2 + $0x30] sm:$0xff] %vm76, 0.0
      %84 = vst.msk [vmem:[#allocation2 + $0x38] sm:$0xff] %vm76, 0.0
      %85 = vst.msk [vmem:[#allocation2 + $0x40] sm:$0xff] %vm76, 0.0
      %86 = vst.msk [vmem:[#allocation2 + $0x48] sm:$0xff] %vm76, 0.0
      %87 = vst.msk [vmem:[#allocation2 + $0x50] sm:$0xff] %vm76, 0.0
      %88 = vst.msk [vmem:[#allocation2 + $0x58] sm:$0xff] %vm76, 0.0
      %89 = vst.msk [vmem:[#allocation2 + $0x60] sm:$0xff] %vm76, 0.0
      %90 = vst.msk [vmem:[#allocation2 + $0x68] sm:$0xff] %vm76, 0.0
      %91 = vst.msk [vmem:[#allocation2 + $0x70] sm:$0xff] %vm76, 0.0
      %92 = vst.msk [vmem:[#allocation2 + $0x78] sm:$0xff] %vm76, 0.0
    $region37: #{_lambda_.14} parent=1 // pred_fallthru
      _
    %v93 = vld [vmem:[#allocation3] sm:$0xff]
    %v94 = vld [vmem:[#allocation3 + $0x8] sm:$0xff]
    %v95 = vld [vmem:[#allocation3 + $0x10] sm:$0xff]
    %v96 = vld [vmem:[#allocation3 + $0x18] sm:$0xff]
    %v97 = vld [vmem:[#allocation3 + $0x20] sm:$0xff]
    %v98 = vld [vmem:[#allocation3 + $0x28] sm:$0xff]
    %v99 = vld [vmem:[#allocation3 + $0x30] sm:$0xff]
    %v100 = vld [vmem:[#allocation3 + $0x38] sm:$0xff]
    %v101 = vld [vmem:[#allocation3 + $0x40] sm:$0xff]
    %v102 = vld [vmem:[#allocation3 + $0x48] sm:$0xff]
    %v103 = vld [vmem:[#allocation3 + $0x50] sm:$0xff]
    %v104 = vld [vmem:[#allocation3 + $0x58] sm:$0xff]
    %v105 = vld [vmem:[#allocation3 + $0x60] sm:$0xff]
    %v106 = vld [vmem:[#allocation3 + $0x68] sm:$0xff]
    %v107 = vld [vmem:[#allocation3 + $0x70] sm:$0xff]
    %v108 = vld [vmem:[#allocation3 + $0x78] sm:$0xff]
    %v109 = vpack.c.bf16 %v94, %v93
    %v110 = vpack.c.bf16 %v96, %v95
    %v111 = vpack.c.bf16 %v98, %v97
    %v112 = vpack.c.bf16 %v100, %v99
    %v113 = vpack.c.bf16 %v102, %v101
    %v114 = vpack.c.bf16 %v104, %v103
    %v115 = vpack.c.bf16 %v106, %v105
    %v116 = vpack.c.bf16 %v108, %v107
    %v117 = vld [vmem:[#allocation2] sm:$0xff]
    %v118 = vld [vmem:[#allocation2 + $0x8] sm:$0xff]
    %v119 = vld [vmem:[#allocation2 + $0x10] sm:$0xff]
    %v120 = vld [vmem:[#allocation2 + $0x18] sm:$0xff]
    %v121 = vld [vmem:[#allocation2 + $0x20] sm:$0xff]
    %v122 = vld [vmem:[#allocation2 + $0x28] sm:$0xff]
    %v123 = vld [vmem:[#allocation2 + $0x30] sm:$0xff]
    %v124 = vld [vmem:[#allocation2 + $0x38] sm:$0xff]
    %v125 = vld [vmem:[#allocation2 + $0x40] sm:$0xff]
    %v126 = vld [vmem:[#allocation2 + $0x48] sm:$0xff]
    %v127 = vld [vmem:[#allocation2 + $0x50] sm:$0xff]
    %v128 = vld [vmem:[#allocation2 + $0x58] sm:$0xff]
    %v129 = vld [vmem:[#allocation2 + $0x60] sm:$0xff]
    %v130 = vld [vmem:[#allocation2 + $0x68] sm:$0xff]
    %v131 = vld [vmem:[#allocation2 + $0x70] sm:$0xff]
    %v132 = vld [vmem:[#allocation2 + $0x78] sm:$0xff]
    %v133 = vld [vmem:[#allocation6] sm:$0xff]
    %v134 = vld [vmem:[#allocation6 + $0x8] sm:$0xff]
    %v135 = vld [vmem:[#allocation6 + $0x10] sm:$0xff]
    %v136 = vld [vmem:[#allocation6 + $0x18] sm:$0xff]
    %v137 = vpack.c.bf16 %v134, %v133
    %v138 = vpack.c.bf16 %v136, %v135
    %vm139 = vcmask 261120
    %v141 = vsel %vm139, %v109, 0
    %v144 = vsel %vm139, %v110, 0
    %v147 = vsel %vm139, %v111, 0
    %v150 = vsel %vm139, %v112, 0
    %v153 = vsel %vm139, %v113, 0
    %v156 = vsel %vm139, %v114, 0
    %v159 = vsel %vm139, %v115, 0
    %v162 = vsel %vm139, %v116, 0
    %164 = vmatprep.subr.bf16.mxu0 0
    %165 = vmatpush1.bf16.msra.mxu0 %v137
    %166 = vmatprep.subr.bf16.mxu0 0
    %167 = vmatpush1.bf16.msra.mxu0 %v138
    %168 = vmatprep.subr.bf16.mxu0 0
    %169 = vmatpush1.bf16.msra.mxu0 0
    %170 = vmatprep.subr.bf16.mxu0 0
    %171 = vmatpush1.bf16.msra.mxu0 0
    %172 = vmatprep.subr.bf16.mxu0 0
    %173 = vmatpush1.bf16.msra.mxu0 0
    %174 = vmatprep.subr.bf16.mxu0 0
    %175 = vmatpush1.bf16.msra.mxu0 0
    %176 = vmatprep.subr.bf16.mxu0 0
    %177 = vmatpush1.bf16.msra.mxu0 0
    %178 = vmatprep.subr.bf16.mxu0 0
    %179 = vmatpush1.bf16.msra.mxu0 0
    %180 = vmatprep.subr.bf16.mxu0 0
    %181 = vmatpush1.bf16.msra.mxu0 0
    %182 = vmatprep.subr.bf16.mxu0 0
    %183 = vmatpush1.bf16.msra.mxu0 0
    %184 = vmatprep.subr.bf16.mxu0 0
    %185 = vmatpush1.bf16.msra.mxu0 0
    %186 = vmatprep.subr.bf16.mxu0 0
    %187 = vmatpush1.bf16.msra.mxu0 0
    %188 = vmatprep.subr.bf16.mxu0 0
    %189 = vmatpush1.bf16.msra.mxu0 0
    %190 = vmatprep.subr.bf16.mxu0 0
    %191 = vmatpush1.bf16.msra.mxu0 0
    %192 = vmatprep.subr.bf16.mxu0 0
    %193 = vmatpush1.bf16.msra.mxu0 0
    %194 = vmatprep.subr.bf16.mxu0 0
    %195 = vmatpush1.bf16.msra.mxu0 0
    %196 = vmatprep.mubr.bf16.mxu0 0
    %197 = vmatmul.mubr.bf16.gmra.mrb[0].mxu0 %v141
    %v198 = vpop.f32.mrb[0].mxu0
    %v199 = vadd.f32 0.0, %v198
    %v200 = vpop.f32.mrb[0].mxu0
    %v201 = vpop.f32.mrb[0].mxu0
    %v202 = vadd.f32 0.0, %v201
    %v203 = vpop.f32.mrb[0].mxu0
    %204 = vmatprep.mubr.bf16.mxu0 0
    %205 = vmatmul.mubr.bf16.gmra.mrb[0].mxu0 %v144
    %v206 = vpop.f32.mrb[0].mxu0
    %v207 = vadd.f32 0.0, %v206
    %v208 = vpop.f32.mrb[0].mxu0
    %v209 = vpop.f32.mrb[0].mxu0
    %v210 = vadd.f32 0.0, %v209
    %v211 = vpop.f32.mrb[0].mxu0
    %212 = vmatprep.mubr.bf16.mxu0 0
    %213 = vmatmul.mubr.bf16.gmra.mrb[0].mxu0 %v147
    %v214 = vpop.f32.mrb[0].mxu0
    %v215 = vadd.f32 0.0, %v214
    %v216 = vpop.f32.mrb[0].mxu0
    %v217 = vpop.f32.mrb[0].mxu0
    %v218 = vadd.f32 0.0, %v217
    %v219 = vpop.f32.mrb[0].mxu0
    %220 = vmatprep.mubr.bf16.mxu0 0
    %221 = vmatmul.mubr.bf16.gmra.mrb[0].mxu0 %v150
    %v222 = vpop.f32.mrb[0].mxu0
    %v223 = vadd.f32 0.0, %v222
    %v224 = vpop.f32.mrb[0].mxu0
    %v225 = vpop.f32.mrb[0].mxu0
    %v226 = vadd.f32 0.0, %v225
    %v227 = vpop.f32.mrb[0].mxu0
    %228 = vmatprep.mubr.bf16.mxu0 0
    %229 = vmatmul.mubr.bf16.gmra.mrb[0].mxu0 %v153
    %v230 = vpop.f32.mrb[0].mxu0
    %v231 = vadd.f32 0.0, %v230
    %v232 = vpop.f32.mrb[0].mxu0
    %v233 = vpop.f32.mrb[0].mxu0
    %v234 = vadd.f32 0.0, %v233
    %v235 = vpop.f32.mrb[0].mxu0
    %236 = vmatprep.mubr.bf16.mxu0 0
    %237 = vmatmul.mubr.bf16.gmra.mrb[0].mxu0 %v156
    %v238 = vpop.f32.mrb[0].mxu0
    %v239 = vadd.f32 0.0, %v238
    %v240 = vpop.f32.mrb[0].mxu0
    %v241 = vpop.f32.mrb[0].mxu0
    %v242 = vadd.f32 0.0, %v241
    %v243 = vpop.f32.mrb[0].mxu0
    %244 = vmatprep.mubr.bf16.mxu0 0
    %245 = vmatmul.mubr.bf16.gmra.mrb[0].mxu0 %v159
    %v246 = vpop.f32.mrb[0].mxu0
    %v247 = vadd.f32 0.0, %v246
    %v248 = vpop.f32.mrb[0].mxu0
    %v249 = vpop.f32.mrb[0].mxu0
    %v250 = vadd.f32 0.0, %v249
    %v251 = vpop.f32.mrb[0].mxu0
    %252 = vmatprep.mubr.bf16.mxu0 0
    %253 = vmatmul.mubr.bf16.gmra.mrb[0].mxu0 %v162
    %v254 = vpop.f32.mrb[0].mxu0
    %v255 = vadd.f32 0.0, %v254
    %v256 = vpop.f32.mrb[0].mxu0
    %v257 = vpop.f32.mrb[0].mxu0
    %v258 = vadd.f32 0.0, %v257
    %v259 = vpop.f32.mrb[0].mxu0
    %260 = vdwg.mxu0
    %v261 = vadd.f32 %v117, %v199
    %v262 = vadd.f32 %v118, %v202
    %v263 = vadd.f32 %v119, %v207
    %v264 = vadd.f32 %v120, %v210
    %v265 = vadd.f32 %v121, %v215
    %v266 = vadd.f32 %v122, %v218
    %v267 = vadd.f32 %v123, %v223
    %v268 = vadd.f32 %v124, %v226
    %v269 = vadd.f32 %v125, %v231
    %v270 = vadd.f32 %v126, %v234
    %v271 = vadd.f32 %v127, %v239
    %v272 = vadd.f32 %v128, %v242
    %v273 = vadd.f32 %v129, %v247
    %v274 = vadd.f32 %v130, %v250
    %v275 = vadd.f32 %v131, %v255
    %v276 = vadd.f32 %v132, %v258
    %277 = vst.msk [vmem:[#allocation2] sm:$0xff] %vm139, %v261
    %278 = vst.msk [vmem:[#allocation2 + $0x8] sm:$0xff] %vm139, %v262
    %279 = vst.msk [vmem:[#allocation2 + $0x10] sm:$0xff] %vm139, %v263
    %280 = vst.msk [vmem:[#allocation2 + $0x18] sm:$0xff] %vm139, %v264
    %281 = vst.msk [vmem:[#allocation2 + $0x20] sm:$0xff] %vm139, %v265
    %282 = vst.msk [vmem:[#allocation2 + $0x28] sm:$0xff] %vm139, %v266
    %283 = vst.msk [vmem:[#allocation2 + $0x30] sm:$0xff] %vm139, %v267
    %284 = vst.msk [vmem:[#allocation2 + $0x38] sm:$0xff] %vm139, %v268
    %285 = vst.msk [vmem:[#allocation2 + $0x40] sm:$0xff] %vm139, %v269
    %286 = vst.msk [vmem:[#allocation2 + $0x48] sm:$0xff] %vm139, %v270
    %287 = vst.msk [vmem:[#allocation2 + $0x50] sm:$0xff] %vm139, %v271
    %288 = vst.msk [vmem:[#allocation2 + $0x58] sm:$0xff] %vm139, %v272
    %289 = vst.msk [vmem:[#allocation2 + $0x60] sm:$0xff] %vm139, %v273
    %290 = vst.msk [vmem:[#allocation2 + $0x68] sm:$0xff] %vm139, %v274
    %291 = vst.msk [vmem:[#allocation2 + $0x70] sm:$0xff] %vm139, %v275
    %292 = vst.msk [vmem:[#allocation2 + $0x78] sm:$0xff] %vm139, %v276
    // Predicated region
    $region38: #{_lambda_.14} parent=1 // pred_check
      %p293 = pneg %p72
    $region39: #{_lambda_.14} parent=1 // pred_check_branch
      %295 = sbr.rel (%p293) target = $region41
    $region40: #{_lambda_.14} parent=1 // pred_region
      %v296 = vld [vmem:[#allocation2] sm:$0xff]
      %v297 = vld [vmem:[#allocation2 + $0x8] sm:$0xff]
      %v298 = vld [vmem:[#allocation2 + $0x10] sm:$0xff]
      %v299 = vld [vmem:[#allocation2 + $0x18] sm:$0xff]
      %v300 = vld [vmem:[#allocation2 + $0x20] sm:$0xff]
      %v301 = vld [vmem:[#allocation2 + $0x28] sm:$0xff]
      %v302 = vld [vmem:[#allocation2 + $0x30] sm:$0xff]
      %v303 = vld [vmem:[#allocation2 + $0x38] sm:$0xff]
      %v304 = vld [vmem:[#allocation2 + $0x40] sm:$0xff]
      %v305 = vld [vmem:[#allocation2 + $0x48] sm:$0xff]
      %v306 = vld [vmem:[#allocation2 + $0x50] sm:$0xff]
      %v307 = vld [vmem:[#allocation2 + $0x58] sm:$0xff]
      %v308 = vld [vmem:[#allocation2 + $0x60] sm:$0xff]
      %v309 = vld [vmem:[#allocation2 + $0x68] sm:$0xff]
      %v310 = vld [vmem:[#allocation2 + $0x70] sm:$0xff]
      %v311 = vld [vmem:[#allocation2 + $0x78] sm:$0xff]
      %v312 = vld [vmem:[#allocation8] sm:$0x1]
      %v314 = vlaneseq
      %v315 = vshrl.u32 %v314, 7
      %v316 = vsub.s32 0, %v315
      %v317 = vrot.slane %v312, %v316
      %v319 = vadd.f32 %v296, %v317
      %v320 = vadd.f32 %v297, %v317
      %v321 = vadd.f32 %v298, %v317
      %v322 = vadd.f32 %v299, %v317
      %v323 = vadd.f32 %v300, %v317
      %v324 = vadd.f32 %v301, %v317
      %v325 = vadd.f32 %v302, %v317
      %v326 = vadd.f32 %v303, %v317
      %v327 = vadd.f32 %v304, %v317
      %v328 = vadd.f32 %v305, %v317
      %v329 = vadd.f32 %v306, %v317
      %v330 = vadd.f32 %v307, %v317
      %v331 = vadd.f32 %v308, %v317
      %v332 = vadd.f32 %v309, %v317
      %v333 = vadd.f32 %v310, %v317
      %v334 = vadd.f32 %v311, %v317
      %v335 = vld [vmem:[#allocation9] sm:$0xff]
      %v336 = vld [vmem:[#allocation9 + $0x8] sm:$0xff]
      %v337 = vld [vmem:[#allocation9 + $0x10] sm:$0xff]
      %v338 = vld [vmem:[#allocation9 + $0x18] sm:$0xff]
      %v339 = vld [vmem:[#allocation9 + $0x20] sm:$0xff]
      %v340 = vld [vmem:[#allocation9 + $0x28] sm:$0xff]
      %v341 = vld [vmem:[#allocation9 + $0x30] sm:$0xff]
      %v342 = vld [vmem:[#allocation9 + $0x38] sm:$0xff]
      %v343 = vld [vmem:[#allocation9 + $0x40] sm:$0xff]
      %v344 = vld [vmem:[#allocation9 + $0x48] sm:$0xff]
      %v345 = vld [vmem:[#allocation9 + $0x50] sm:$0xff]
      %v346 = vld [vmem:[#allocation9 + $0x58] sm:$0xff]
      %v347 = vld [vmem:[#allocation9 + $0x60] sm:$0xff]
      %v348 = vld [vmem:[#allocation9 + $0x68] sm:$0xff]
      %v349 = vld [vmem:[#allocation9 + $0x70] sm:$0xff]
      %v350 = vld [vmem:[#allocation9 + $0x78] sm:$0xff]
      %v351 = vadd.f32 %v319, %v335
      %v352 = vadd.f32 %v320, %v336
      %v353 = vadd.f32 %v321, %v337
      %v354 = vadd.f32 %v322, %v338
      %v355 = vadd.f32 %v323, %v339
      %v356 = vadd.f32 %v324, %v340
      %v357 = vadd.f32 %v325, %v341
      %v358 = vadd.f32 %v326, %v342
      %v359 = vadd.f32 %v327, %v343
      %v360 = vadd.f32 %v328, %v344
      %v361 = vadd.f32 %v329, %v345
      %v362 = vadd.f32 %v330, %v346
      %v363 = vadd.f32 %v331, %v347
      %v364 = vadd.f32 %v332, %v348
      %v365 = vadd.f32 %v333, %v349
      %v366 = vadd.f32 %v334, %v350
      %367 = vst.msk [vmem:[#allocation11] sm:$0xff] %vm139, %v351
      %368 = vst.msk [vmem:[#allocation11 + $0x8] sm:$0xff] %vm139, %v352
      %369 = vst.msk [vmem:[#allocation11 + $0x10] sm:$0xff] %vm139, %v353
      %370 = vst.msk [vmem:[#allocation11 + $0x18] sm:$0xff] %vm139, %v354
      %371 = vst.msk [vmem:[#allocation11 + $0x20] sm:$0xff] %vm139, %v355
      %372 = vst.msk [vmem:[#allocation11 + $0x28] sm:$0xff] %vm139, %v356
      %373 = vst.msk [vmem:[#allocation11 + $0x30] sm:$0xff] %vm139, %v357
      %374 = vst.msk [vmem:[#allocation11 + $0x38] sm:$0xff] %vm139, %v358
      %375 = vst.msk [vmem:[#allocation11 + $0x40] sm:$0xff] %vm139, %v359
      %376 = vst.msk [vmem:[#allocation11 + $0x48] sm:$0xff] %vm139, %v360
      %377 = vst.msk [vmem:[#allocation11 + $0x50] sm:$0xff] %vm139, %v361
      %378 = vst.msk [vmem:[#allocation11 + $0x58] sm:$0xff] %vm139, %v362
      %379 = vst.msk [vmem:[#allocation11 + $0x60] sm:$0xff] %vm139, %v363
      %380 = vst.msk [vmem:[#allocation11 + $0x68] sm:$0xff] %vm139, %v364
      %381 = vst.msk [vmem:[#allocation11 + $0x70] sm:$0xff] %vm139, %v365
      %382 = vst.msk [vmem:[#allocation11 + $0x78] sm:$0xff] %vm139, %v366
    $region41: #{_lambda_.14} parent=1 // pred_fallthru
      _
    // Predicated region
    $region42: #{_lambda_.14} parent=1 // pred_check
      _
    $region43: #{_lambda_.14} parent=1 // pred_check_branch
      %384 = sbr.rel (0) target = $region45
    $region44: #{_lambda_.14} parent=1 // pred_region
      %s386 = ssub.s32 2048, 2048
      %387 = vsyncadd [#allocation5], %s386
      %s388 = sshll.u32 [#allocation11], 4
      %s389 = int_to_ptr.vmem [resolvable:$true] %s388
      %394 = dma.vmem_to_hbm [thread:$0]  %s389, 2048, %s4, [#allocation5], 128, 128, 8
    $region45: #{_lambda_.14} parent=1 // pred_fallthru
      _
    // Predicated region
    $region46: #{_lambda_.14} parent=1 // pred_check
      _
    $region47: #{_lambda_.14} parent=1 // pred_check_branch
      %396 = sbr.rel (0) target = $region49
    $region48: #{_lambda_.14} parent=1 // pred_region
      %397 = dma.done [#allocation5], 2048
    $region49: #{_lambda_.14} parent=1 // pred_fallthru
      _
    %398 = vsyncpa [#allocation4], 1
    %399 = vsyncpa [#allocation7], 1
    %400 = vsyncpa [#allocation10], 1
    %401 = vsyncpa [#allocation5], 1

// kernel: _lambda_.13
$region0: #{_lambda_.13}
  #allocation0 [shape = 'u32[]', space=smem, size = 0x4, offset = 0x4, fixed_abs, tag = 'smem constant byte address 0x4 - core index']
  #allocation1 [shape = 'u32[144,128]{1,0:T(1,128)}', space=vmem, size = 0x12000, scoped, tag = 'internal scratch']
  %s0 = inlined_call_operand.hbm [shape: f32[128,96], index: 0, kind: input, shape index: {}]
  %s1 = inlined_call_operand.hbm [shape: f32[128,32], index: 1, kind: output, shape index: {}]
  %s2 = sld [smem:[#allocation0]]
  $region41: #{_lambda_.13} parent=0
    _
  %s4 = ssub.s32 1, %s2
  %s5 = scalar_select 0, %s4, %s2
  $region1: #{_lambda_.13} parent=0
    #allocation2 [shape = 'u8[65536]{0}', space=vmem, size = 0x10000, scoped, tag = 'input window, operand 0']
    #allocation3 [shape = 's32[2]{0}', space=sflag, size = 0x8, scoped, tag = 'scoped memory for _lambda_.13']
    #allocation4 [shape = 's32[2]{0}', space=sflag, size = 0x8, scoped, tag = 'scoped memory for _lambda_.13']
    #allocation5 [shape = 'u8[65536]{0}', space=vmem, size = 0x10000, scoped, tag = 'output window, operand 0']
    %6 = vsyncpa [#allocation3], 0
    %s7 = scalar_lea.sflag [#allocation3], 1
    %8 = vsyncpa %s7, 0
    %9 = vsyncpa [#allocation4], 0
    %s10 = scalar_lea.sflag [#allocation4], 1
    %11 = vsyncpa %s10, 0
    loop: start=0, step=1, limit=4
    $region2: #{_lambda_.13} parent=1 // loop_pre_header
      _
    $region3: #{_lambda_.13} parent=1 // loop_header
      %s13 = sphi 0, %s17
      %p14 = scmp.ge.s32.totalorder %s13, 4
      %s23 = sphi 0, %s25
      %s26 = sphi 0, %s23
      %s27 = sphi 0, %s26
      %s43 = sphi 0, %s27
      %s49 = sphi 0, %s51
      %s52 = sphi 0, %s49
      %s53 = sphi 0, %s52
      %s69 = sphi 0, %s53
    $region4: #{_lambda_.13} parent=1 // loop_header_branch
      %16 = sbr.rel (%p14) target = $region8
    $region5: #{_lambda_.13} parent=1 // loop_body
      %s18 = ssub.s32 %s13, 1
      %s19 = ssub.s32 %s13, 2
      %s20 = sadd.s32 %s13, 1
      %s21 = ssub.s32 %s13, %s20
      %p22 = scmp.eq.s32.totalorder %s21, 0
      %s24 = sadd.s32 %s23, 1
      %s25 = scalar_select %p22, %s23, %s24
      %p28 = pneg %p22
      %p29 = scmp.eq.s32.totalorder %s13, 1
      %p30 = por %p28, %p29
      %p31 = scmp.ne.s32.totalorder %s23, %s26
      %p32 = scmp.eq.s32.totalorder %s13, 0
      %p33 = por %p31, %p32
      %p34 = scmp.ne.s32.totalorder %s23, %s26
      %p35 = scmp.eq.s32.totalorder %s18, 1
      %p36 = por %p34, %p35
      %p37 = scmp.ne.s32.totalorder %s26, %s27
      %p38 = scmp.eq.s32.totalorder %s18, 0
      %p39 = por %p37, %p38
      %p40 = scmp.ne.s32.totalorder %s26, %s27
      %p41 = scmp.eq.s32.totalorder %s19, 1
      %p42 = por %p40, %p41
      %p44 = scmp.ne.s32.totalorder %s27, %s43
      %p45 = scmp.eq.s32.totalorder %s19, 0
      %p46 = por %p44, %p45
      %s47 = ssub.s32 %s13, %s20
      %p48 = scmp.eq.s32.totalorder %s47, 0
      %s50 = sadd.s32 %s49, 1
      %s51 = scalar_select %p48, %s49, %s50
      %p54 = pneg %p48
      %p55 = scmp.eq.s32.totalorder %s13, 1
      %p56 = por %p54, %p55
      %p57 = scmp.ne.s32.totalorder %s49, %s52
      %p58 = scmp.eq.s32.totalorder %s13, 0
      %p59 = por %p57, %p58
      %p60 = scmp.ne.s32.totalorder %s49, %s52
      %p61 = scmp.eq.s32.totalorder %s18, 1
      %p62 = por %p60, %p61
      %p63 = scmp.ne.s32.totalorder %s52, %s53
      %p64 = scmp.eq.s32.totalorder %s18, 0
      %p65 = por %p63, %p64
      %p66 = scmp.ne.s32.totalorder %s52, %s53
      %p67 = scmp.eq.s32.totalorder %s19, 1
      %p68 = por %p66, %p67
      %p70 = scmp.ne.s32.totalorder %s53, %s69
      %p71 = scmp.eq.s32.totalorder %s19, 0
      %p72 = por %p70, %p71
      %p73 = scmp.le.s32.totalorder 1, %s13
      %p74 = scmp.lt.s32.totalorder %s13, 3
      %p75 = pnand %p73, %p74
      %p76 = pneg %p75
      // Predicated region
      $region9: #{_lambda_.13} parent=5 // pred_check
        _
      $region10: #{_lambda_.13} parent=5 // pred_check_branch
        %78 = sbr.rel (%p75) target = $region12
      $region11: #{_lambda_.13} parent=5 // pred_region
        %s79 = ssub.s32 %s13, 1
      $region12: #{_lambda_.13} parent=5 // pred_fallthru
        _
      %p80 = scmp.lt.s32.totalorder %s13, 2
      // Predicated region
      $region13: #{_lambda_.13} parent=5 // pred_check
        %p81 = pneg %p80
      $region14: #{_lambda_.13} parent=5 // pred_check_branch
        %83 = sbr.rel (%p81) target = $region16
      $region15: #{_lambda_.13} parent=5 // pred_region
        // Predicated region
        $region17: #{_lambda_.13} parent=15 // pred_check
          %p84 = pneg %p33
        $region18: #{_lambda_.13} parent=15 // pred_check_branch
          %86 = sbr.rel (%p84) target = $region20
        $region19: #{_lambda_.13} parent=15 // pred_region
          %s87 = sand.u32 %s23, 1
          %s88 = scalar_lea.sflag [#allocation3], %s87
          %s89 = sand.u32 %s23, 1
          %s90 = smul.addr %s89, 64
          %s91 = scalar_lea.vmem [#allocation2], %s90
          %s92 = smul.u32 8, %s13
          %s94 = ssub.s32 1024, 1024
          %95 = vsyncadd %s88, %s94
          %s96 = smul.addr %s92, 128
          %s97 = scalar_lea.hbm %s0, %s96
          %s98 = sshll.u32 %s91, 4
          %s99 = int_to_ptr.vmem [resolvable:$true] %s98
          %104 = dma.hbm_to_vmem [thread:$0]  %s97, 1024, %s99, %s88, 128, 128, 8
        $region20: #{_lambda_.13} parent=15 // pred_fallthru
          _
      $region16: #{_lambda_.13} parent=5 // pred_fallthru
        _
      %p105 = scmp.le.s32.totalorder 1, %s13
      %p106 = scmp.lt.s32.totalorder %s13, 3
      %p107 = pnand %p105, %p106
      %p108 = pneg %p107
      // Predicated region
      $region21: #{_lambda_.13} parent=5 // pred_check
        _
      $region22: #{_lambda_.13} parent=5 // pred_check_branch
        %110 = sbr.rel (%p107) target = $region24
      $region23: #{_lambda_.13} parent=5 // pred_region
        %s111 = ssub.s32 %s13, 1
        %s112 = sand.u32 %s26, 1
        %s113 = scalar_lea.sflag [#allocation3], %s112
        %s114 = sand.u32 %s26, 1
        %s115 = smul.addr %s114, 64
        %s116 = scalar_lea.vmem [#allocation2], %s115
        // Predicated region
        $region25: #{_lambda_.13} parent=23 // pred_check
          %p117 = pneg %p39
        $region26: #{_lambda_.13} parent=23 // pred_check_branch
          %119 = sbr.rel (%p117) target = $region28
        $region27: #{_lambda_.13} parent=23 // pred_region
          %120 = dma.done %s113, 1024
        $region28: #{_lambda_.13} parent=23 // pred_fallthru
          _
        %s121 = sand.u32 %s26, 1
        %s122 = scalar_lea.sflag [#allocation3], %s121
        %s123 = sand.u32 %s26, 1
        %s124 = smul.addr %s123, 64
        %s125 = scalar_lea.vmem [#allocation2], %s124
        %p126 = pneg %p39
        %p127 = pneg %p36
        %p128 = pneg %p65
        %p129 = pneg %p62
        %s130 = sand.u32 %s52, 1
        %s131 = scalar_lea.sflag [#allocation4], %s130
        %s132 = sand.u32 %s52, 1
        %s133 = smul.addr %s132, 64
        %s134 = scalar_lea.vmem [#allocation5], %s133
        %s135 = smul.u32 8, %s18
        %s136 = smul.u32 8, %s18
        %v138 = vlaneseq
        %v139 = vand.u32 %v138, 127
        %vm140 = vcmp.lt.s32.totalorder %v139, 5
        %v141 = vld [vmem:[%s116] sm:$0xff]
        %v142 = vld [vmem:[%s116 + $0x8] sm:$0xff]
        %v143 = vld [vmem:[%s116 + $0x10] sm:$0xff]
        %v144 = vld [vmem:[%s116 + $0x18] sm:$0xff]
        %v145 = vld [vmem:[%s116 + $0x20] sm:$0xff]
        %v146 = vld [vmem:[%s116 + $0x28] sm:$0xff]
        %v147 = vld [vmem:[%s116 + $0x30] sm:$0xff]
        %v148 = vld [vmem:[%s116 + $0x38] sm:$0xff]
        %v149 = vpack.c.bf16 %v142, %v141
        %v150 = vpack.c.bf16 %v144, %v143
        %v151 = vpack.c.bf16 %v146, %v145
        %v152 = vpack.c.bf16 %v148, %v147
        %157 = vrot.lane.b32.xlu0 %v149, 96
        %v158 = vpop.permute.xlu0 %157
        %159 = vrot.lane.b32.xlu0 %v150, 96
        %v160 = vpop.permute.xlu0 %159
        %161 = vrot.lane.b32.xlu0 %v151, 96
        %v162 = vpop.permute.xlu0 %161
        %163 = vrot.lane.b32.xlu0 %v152, 96
        %v164 = vpop.permute.xlu0 %163
        %vm165 = vcmask 130048
        %v167 = vsel %vm165, %v149, 0
        %v170 = vsel %vm165, %v150, 0
        %v173 = vsel %vm165, %v151, 0
        %v176 = vsel %vm165, %v152, 0
        %v179 = vsel %vm165, %v158, 0
        %v182 = vsel %vm165, %v160, 0
        %v185 = vsel %vm165, %v162, 0
        %v188 = vsel %vm165, %v164, 0
        %190 = vmatprep.subr.bf16.mxu0 0
        %191 = vmatpush1.bf16.xpose.msra.mxu0 %v179
        %192 = vmatprep.subr.bf16.mxu0 0
        %193 = vmatpush1.bf16.xpose.msra.mxu0 %v182
        %194 = vmatprep.subr.bf16.mxu0 0
        %195 = vmatpush1.bf16.xpose.msra.mxu0 %v185
        %196 = vmatprep.subr.bf16.mxu0 0
        %197 = vmatpush1.bf16.xpose.msra.mxu0 %v188
        %198 = vmatprep.subr.bf16.mxu0 0
        %199 = vmatpush1.bf16.xpose.msra.mxu0 0
        %200 = vmatprep.subr.bf16.mxu0 0
        %201 = vmatpush1.bf16.xpose.msra.mxu0 0
        %202 = vmatprep.subr.bf16.mxu0 0
        %203 = vmatpush1.bf16.xpose.msra.mxu0 0
        %204 = vmatprep.subr.bf16.mxu0 0
        %205 = vmatpush1.bf16.xpose.msra.mxu0 0
        %206 = vmatprep.subr.bf16.mxu0 0
        %207 = vmatpush1.bf16.xpose.msra.mxu0 0
        %208 = vmatprep.subr.bf16.mxu0 0
        %209 = vmatpush1.bf16.xpose.msra.mxu0 0
        %210 = vmatprep.subr.bf16.mxu0 0
        %211 = vmatpush1.bf16.xpose.msra.mxu0 0
        %212 = vmatprep.subr.bf16.mxu0 0
        %213 = vmatpush1.bf16.xpose.msra.mxu0 0
        %214 = vmatprep.subr.bf16.mxu0 0
        %215 = vmatpush1.bf16.xpose.msra.mxu0 0
        %216 = vmatprep.subr.bf16.mxu0 0
        %217 = vmatpush1.bf16.xpose.msra.mxu0 0
        %218 = vmatprep.subr.bf16.mxu0 0
        %219 = vmatpush1.bf16.xpose.msra.mxu0 0
        %220 = vmatprep.subr.bf16.mxu0 0
        %221 = vmatpush1.bf16.xpose.msra.mxu0 0
        %222 = vmatprep.mubr.bf16.mxu0 0
        %223 = vmatmul.mubr.bf16.gmra.mrb[0].mxu0 %v167
        %v224 = vpop.f32.mrb[0].mxu0
        %v225 = vadd.f32 0.0, %v224
        %v226 = vpop.f32.mrb[0].mxu0
        %v227 = vpop.f32.mrb[0].mxu0
        %v228 = vadd.f32 0.0, %v227
        %v229 = vpop.f32.mrb[0].mxu0
        %230 = vmatprep.mubr.bf16.mxu0 0
        %231 = vmatmul.mubr.bf16.gmra.mrb[0].mxu0 %v170
        %v232 = vpop.f32.mrb[0].mxu0
        %v233 = vadd.f32 0.0, %v232
        %v234 = vpop.f32.mrb[0].mxu0
        %v235 = vpop.f32.mrb[0].mxu0
        %v236 = vadd.f32 0.0, %v235
        %v237 = vpop.f32.mrb[0].mxu0
        %238 = vmatprep.mubr.bf16.mxu0 0
        %239 = vmatmul.mubr.bf16.gmra.mrb[0].mxu0 %v173
        %v240 = vpop.f32.mrb[0].mxu0
        %v241 = vadd.f32 0.0, %v240
        %v242 = vpop.f32.mrb[0].mxu0
        %v243 = vpop.f32.mrb[0].mxu0
        %v244 = vadd.f32 0.0, %v243
        %v245 = vpop.f32.mrb[0].mxu0
        %246 = vmatprep.mubr.bf16.mxu0 0
        %247 = vmatmul.mubr.bf16.gmra.mrb[0].mxu0 %v176
        %v248 = vpop.f32.mrb[0].mxu0
        %v249 = vadd.f32 0.0, %v248
        %v250 = vpop.f32.mrb[0].mxu0
        %v251 = vpop.f32.mrb[0].mxu0
        %v252 = vadd.f32 0.0, %v251
        %v253 = vpop.f32.mrb[0].mxu0
        %254 = vdwg.mxu0
        %v255 = vmul.f32 %v225, 0.25
        %v256 = vmul.f32 %v228, 0.25
        %v257 = vmul.f32 %v233, 0.25
        %v258 = vmul.f32 %v236, 0.25
        %v259 = vmul.f32 %v241, 0.25
        %v260 = vmul.f32 %v244, 0.25
        %v261 = vmul.f32 %v249, 0.25
        %v262 = vmul.f32 %v252, 0.25
        %v263 = vsel %vm140, 1, 0
        %vm264 = vcmp.eq.s32.totalorder %v263, 1
        %v265 = vsel %vm264, %v255, -1e+30
        %v266 = vsel %vm264, %v256, -1e+30
        %v267 = vsel %vm264, %v257, -1e+30
        %v268 = vsel %vm264, %v258, -1e+30
        %v269 = vsel %vm264, %v259, -1e+30
        %v270 = vsel %vm264, %v260, -1e+30
        %v271 = vsel %vm264, %v261, -1e+30
        %v272 = vsel %vm264, %v262, -1e+30
        %vm273 = vcmask 523264
        %v274 = vsel %vm273, %v265, -inf
        %275 = vmax.xlane.f32.xlu0 %v274
        %v276 = vpop.xlane.xlu0 %275
        %v277 = vsel %vm273, %v266, -inf
        %278 = vmax.xlane.f32.xlu0 %v277
        %v279 = vpop.xlane.xlu0 %278
        %v280 = vsel %vm273, %v267, -inf
        %281 = vmax.xlane.f32.xlu0 %v280
        %v282 = vpop.xlane.xlu0 %281
        %v283 = vsel %vm273, %v268, -inf
        %284 = vmax.xlane.f32.xlu0 %v283
        %v285 = vpop.xlane.xlu0 %284
        %v286 = vsel %vm273, %v269, -inf
        %287 = vmax.xlane.f32.xlu0 %v286
        %v288 = vpop.xlane.xlu0 %287
        %v289 = vsel %vm273, %v270, -inf
        %290 = vmax.xlane.f32.xlu0 %v289
        %v291 = vpop.xlane.xlu0 %290
        %v292 = vsel %vm273, %v271, -inf
        %293 = vmax.xlane.f32.xlu0 %v292
        %v294 = vpop.xlane.xlu0 %293
        %v295 = vsel %vm273, %v272, -inf
        %296 = vmax.xlane.f32.xlu0 %v295
        %v297 = vpop.xlane.xlu0 %296
        %v298 = vsub.f32 %v265, %v276
        %v299 = vsub.f32 %v266, %v279
        %v300 = vsub.f32 %v267, %v282
        %v301 = vsub.f32 %v268, %v285
        %v302 = vsub.f32 %v269, %v288
        %v303 = vsub.f32 %v270, %v291
        %v304 = vsub.f32 %v271, %v294
        %v305 = vsub.f32 %v272, %v297
        %v306 = vmul.f32 %v298, 1.442695
        %v307 = vpow.pop %v306
        %v308 = vmul.f32 %v299, 1.442695
        %v309 = vpow.pop %v308
        %v310 = vmul.f32 %v300, 1.442695
        %v311 = vpow.pop %v310
        %v312 = vmul.f32 %v301, 1.442695
        %v313 = vpow.pop %v312
        %v314 = vmul.f32 %v302, 1.442695
        %v315 = vpow.pop %v314
        %v316 = vmul.f32 %v303, 1.442695
        %v317 = vpow.pop %v316
        %v318 = vmul.f32 %v304, 1.442695
        %v319 = vpow.pop %v318
        %v320 = vmul.f32 %v305, 1.442695
        %v321 = vpow.pop %v320
        %v322 = vsel %vm273, %v307, 0.0
        %323 = vadd.xlane.f32.xlu0 %v322
        %v324 = vpop.xlane.xlu0 %323
        %v325 = vsel %vm273, %v309, 0.0
        %326 = vadd.xlane.f32.xlu0 %v325
        %v327 = vpop.xlane.xlu0 %326
        %v328 = vsel %vm273, %v311, 0.0
        %329 = vadd.xlane.f32.xlu0 %v328
        %v330 = vpop.xlane.xlu0 %329
        %v331 = vsel %vm273, %v313, 0.0
        %332 = vadd.xlane.f32.xlu0 %v331
        %v333 = vpop.xlane.xlu0 %332
        %v334 = vsel %vm273, %v315, 0.0
        %335 = vadd.xlane.f32.xlu0 %v334
        %v336 = vpop.xlane.xlu0 %335
        %v337 = vsel %vm273, %v317, 0.0
        %338 = vadd.xlane.f32.xlu0 %v337
        %v339 = vpop.xlane.xlu0 %338
        %v340 = vsel %vm273, %v319, 0.0
        %341 = vadd.xlane.f32.xlu0 %v340
        %v342 = vpop.xlane.xlu0 %341
        %v343 = vsel %vm273, %v321, 0.0
        %344 = vadd.xlane.f32.xlu0 %v343
        %v345 = vpop.xlane.xlu0 %344
        %v346 = vrcp.pop %v324
        %v347 = vrcp.pop %v327
        %v348 = vrcp.pop %v330
        %v349 = vrcp.pop %v333
        %v350 = vrcp.pop %v336
        %v351 = vrcp.pop %v339
        %v352 = vrcp.pop %v342
        %v353 = vrcp.pop %v345
        %v354 = vmul.f32 %v307, %v346
        %v355 = vmul.f32 %v309, %v347
        %v356 = vmul.f32 %v311, %v348
        %v357 = vmul.f32 %v313, %v349
        %v358 = vmul.f32 %v315, %v350
        %v359 = vmul.f32 %v317, %v351
        %v360 = vmul.f32 %v319, %v352
        %v361 = vmul.f32 %v321, %v353
        %v362 = vpack.c.bf16 %v355, %v354
        %v363 = vpack.c.bf16 %v357, %v356
        %v364 = vpack.c.bf16 %v359, %v358
        %v365 = vpack.c.bf16 %v361, %v360
        %366 = vrot.lane.b32.xlu0 %v149, 64
        %v367 = vpop.permute.xlu0 %366
        %368 = vrot.lane.b32.xlu0 %v150, 64
        %v369 = vpop.permute.xlu0 %368
        %370 = vrot.lane.b32.xlu0 %v151, 64
        %v371 = vpop.permute.xlu0 %370
        %372 = vrot.lane.b32.xlu0 %v152, 64
        %v373 = vpop.permute.xlu0 %372
        %v379 = vsel %vm273, %v362, 0
        %v382 = vsel %vm273, %v363, 0
        %v385 = vsel %vm273, %v364, 0
        %v388 = vsel %vm273, %v365, 0
        %390 = vmatprep.subr.bf16.mxu0 0
        %391 = vmatpush1.bf16.msra.mxu0 %v367
        %392 = vmatprep.subr.bf16.mxu0 0
        %393 = vmatpush1.bf16.msra.mxu0 %v369
        %394 = vmatprep.subr.bf16.mxu0 0
        %395 = vmatpush1.bf16.msra.mxu0 %v371
        %396 = vmatprep.subr.bf16.mxu0 0
        %397 = vmatpush1.bf16.msra.mxu0 %v373
        %398 = vmatprep.subr.bf16.mxu0 0
        %399 = vmatpush1.bf16.msra.mxu0 0
        %400 = vmatprep.subr.bf16.mxu0 0
        %401 = vmatpush1.bf16.msra.mxu0 0
        %402 = vmatprep.subr.bf16.mxu0 0
        %403 = vmatpush1.bf16.msra.mxu0 0
        %404 = vmatprep.subr.bf16.mxu0 0
        %405 = vmatpush1.bf16.msra.mxu0 0
        %406 = vmatprep.subr.bf16.mxu0 0
        %407 = vmatpush1.bf16.msra.mxu0 0
        %408 = vmatprep.subr.bf16.mxu0 0
        %409 = vmatpush1.bf16.msra.mxu0 0
        %410 = vmatprep.subr.bf16.mxu0 0
        %411 = vmatpush1.bf16.msra.mxu0 0
        %412 = vmatprep.subr.bf16.mxu0 0
        %413 = vmatpush1.bf16.msra.mxu0 0
        %414 = vmatprep.subr.bf16.mxu0 0
        %415 = vmatpush1.bf16.msra.mxu0 0
        %416 = vmatprep.subr.bf16.mxu0 0
        %417 = vmatpush1.bf16.msra.mxu0 0
        %418 = vmatprep.subr.bf16.mxu0 0
        %419 = vmatpush1.bf16.msra.mxu0 0
        %420 = vmatprep.subr.bf16.mxu0 0
        %421 = vmatpush1.bf16.msra.mxu0 0
        %422 = vmatprep.mubr.bf16.mxu0 0
        %423 = vmatmul.mubr.bf16.gmra.mrb[0].mxu0 %v379
        %v424 = vpop.f32.mrb[0].mxu0
        %v425 = vadd.f32 0.0, %v424
        %v426 = vpop.f32.mrb[0].mxu0
        %v427 = vpop.f32.mrb[0].mxu0
        %v428 = vadd.f32 0.0, %v427
        %v429 = vpop.f32.mrb[0].mxu0
        %430 = vmatprep.mubr.bf16.mxu0 0
        %431 = vmatmul.mubr.bf16.gmra.mrb[0].mxu0 %v382
        %v432 = vpop.f32.mrb[0].mxu0
        %v433 = vadd.f32 0.0, %v432
        %v434 = vpop.f32.mrb[0].mxu0
        %v435 = vpop.f32.mrb[0].mxu0
        %v436 = vadd.f32 0.0, %v435
        %v437 = vpop.f32.mrb[0].mxu0
        %438 = vmatprep.mubr.bf16.mxu0 0
        %439 = vmatmul.mubr.bf16.gmra.mrb[0].mxu0 %v385
        %v440 = vpop.f32.mrb[0].mxu0
        %v441 = vadd.f32 0.0, %v440
        %v442 = vpop.f32.mrb[0].mxu0
        %v443 = vpop.f32.mrb[0].mxu0
        %v444 = vadd.f32 0.0, %v443
        %v445 = vpop.f32.mrb[0].mxu0
        %446 = vmatprep.mubr.bf16.mxu0 0
        %447 = vmatmul.mubr.bf16.gmra.mrb[0].mxu0 %v388
        %v448 = vpop.f32.mrb[0].mxu0
        %v449 = vadd.f32 0.0, %v448
        %v450 = vpop.f32.mrb[0].mxu0
        %v451 = vpop.f32.mrb[0].mxu0
        %v452 = vadd.f32 0.0, %v451
        %v453 = vpop.f32.mrb[0].mxu0
        %454 = vdwg.mxu0
        %455 = vst.msk [vmem:[%s134] sm:$0xff] %vm165, %v425
        %456 = vst.msk [vmem:[%s134 + $0x8] sm:$0xff] %vm165, %v428
        %457 = vst.msk [vmem:[%s134 + $0x10] sm:$0xff] %vm165, %v433
        %458 = vst.msk [vmem:[%s134 + $0x18] sm:$0xff] %vm165, %v436
        %459 = vst.msk [vmem:[%s134 + $0x20] sm:$0xff] %vm165, %v441
        %460 = vst.msk [vmem:[%s134 + $0x28] sm:$0xff] %vm165, %v444
        %461 = vst.msk [vmem:[%s134 + $0x30] sm:$0xff] %vm165, %v449
        %462 = vst.msk [vmem:[%s134 + $0x38] sm:$0xff] %vm165, %v452
        %v463 = vld [vmem:[%s116] sm:$0xff]
        %v464 = vld [vmem:[%s116 + $0x8] sm:$0xff]
        %v465 = vld [vmem:[%s116 + $0x10] sm:$0xff]
        %v466 = vld [vmem:[%s116 + $0x18] sm:$0xff]
        %v467 = vld [vmem:[%s116 + $0x20] sm:$0xff]
        %v468 = vld [vmem:[%s116 + $0x28] sm:$0xff]
        %v469 = vld [vmem:[%s116 + $0x30] sm:$0xff]
        %v470 = vld [vmem:[%s116 + $0x38] sm:$0xff]
        %v471 = vpack.c.bf16 %v464, %v463
        %v472 = vpack.c.bf16 %v466, %v465
        %v473 = vpack.c.bf16 %v468, %v467
        %v474 = vpack.c.bf16 %v470, %v469
        %479 = vrot.lane.b32.xlu0 %v471, 112
        %v480 = vpop.permute.xlu0 %479
        %481 = vrot.lane.b32.xlu0 %v472, 112
        %v482 = vpop.permute.xlu0 %481
        %483 = vrot.lane.b32.xlu0 %v473, 112
        %v484 = vpop.permute.xlu0 %483
        %485 = vrot.lane.b32.xlu0 %v474, 112
        %v486 = vpop.permute.xlu0 %485
        %487 = vrot.lane.b32.xlu0 %v471, 80
        %v488 = vpop.permute.xlu0 %487
        %489 = vrot.lane.b32.xlu0 %v472, 80
        %v490 = vpop.permute.xlu0 %489
        %491 = vrot.lane.b32.xlu0 %v473, 80
        %v492 = vpop.permute.xlu0 %491
        %493 = vrot.lane.b32.xlu0 %v474, 80
        %v494 = vpop.permute.xlu0 %493
        %v496 = vsel %vm165, %v480, 0
        %v499 = vsel %vm165, %v482, 0
        %v502 = vsel %vm165, %v484, 0
        %v505 = vsel %vm165, %v486, 0
        %v508 = vsel %vm165, %v488, 0
        %v511 = vsel %vm165, %v490, 0
        %v514 = vsel %vm165, %v492, 0
        %v517 = vsel %vm165, %v494, 0
        %519 = vmatprep.subr.bf16.mxu0 0
        %520 = vmatpush1.bf16.xpose.msra.mxu0 %v508
        %521 = vmatprep.subr.bf16.mxu0 0
        %522 = vmatpush1.bf16.xpose.msra.mxu0 %v511
        %523 = vmatprep.subr.bf16.mxu0 0
        %524 = vmatpush1.bf16.xpose.msra.mxu0 %v514
        %525 = vmatprep.subr.bf16.mxu0 0
        %526 = vmatpush1.bf16.xpose.msra.mxu0 %v517
        %527 = vmatprep.subr.bf16.mxu0 0
        %528 = vmatpush1.bf16.xpose.msra.mxu0 0
        %529 = vmatprep.subr.bf16.mxu0 0
        %530 = vmatpush1.bf16.xpose.msra.mxu0 0
        %531 = vmatprep.subr.bf16.mxu0 0
        %532 = vmatpush1.bf16.xpose.msra.mxu0 0
        %533 = vmatprep.subr.bf16.mxu0 0
        %534 = vmatpush1.bf16.xpose.msra.mxu0 0
        %535 = vmatprep.subr.bf16.mxu0 0
        %536 = vmatpush1.bf16.xpose.msra.mxu0 0
        %537 = vmatprep.subr.bf16.mxu0 0
        %538 = vmatpush1.bf16.xpose.msra.mxu0 0
        %539 = vmatprep.subr.bf16.mxu0 0
        %540 = vmatpush1.bf16.xpose.msra.mxu0 0
        %541 = vmatprep.subr.bf16.mxu0 0
        %542 = vmatpush1.bf16.xpose.msra.mxu0 0
        %543 = vmatprep.subr.bf16.mxu0 0
        %544 = vmatpush1.bf16.xpose.msra.mxu0 0
        %545 = vmatprep.subr.bf16.mxu0 0
        %546 = vmatpush1.bf16.xpose.msra.mxu0 0
        %547 = vmatprep.subr.bf16.mxu0 0
        %548 = vmatpush1.bf16.xpose.msra.mxu0 0
        %549 = vmatprep.subr.bf16.mxu0 0
        %550 = vmatpush1.bf16.xpose.msra.mxu0 0
        %551 = vmatprep.mubr.bf16.mxu0 0
        %552 = vmatmul.mubr.bf16.gmra.mrb[0].mxu0 %v496
        %v553 = vpop.f32.mrb[0].mxu0
        %v554 = vadd.f32 0.0, %v553
        %v555 = vpop.f32.mrb[0].mxu0
        %v556 = vpop.f32.mrb[0].mxu0
        %v557 = vadd.f32 0.0, %v556
        %v558 = vpop.f32.mrb[0].mxu0
        %559 = vmatprep.mubr.bf16.mxu0 0
        %560 = vmatmul.mubr.bf16.gmra.mrb[0].mxu0 %v499
        %v561 = vpop.f32.mrb[0].mxu0
        %v562 = vadd.f32 0.0, %v561
        %v563 = vpop.f32.mrb[0].mxu0
        %v564 = vpop.f32.mrb[0].mxu0
        %v565 = vadd.f32 0.0, %v564
        %v566 = vpop.f32.mrb[0].mxu0
        %567 = vmatprep.mubr.bf16.mxu0 0
        %568 = vmatmul.mubr.bf16.gmra.mrb[0].mxu0 %v502
        %v569 = vpop.f32.mrb[0].mxu0
        %v570 = vadd.f32 0.0, %v569
        %v571 = vpop.f32.mrb[0].mxu0
        %v572 = vpop.f32.mrb[0].mxu0
        %v573 = vadd.f32 0.0, %v572
        %v574 = vpop.f32.mrb[0].mxu0
        %575 = vmatprep.mubr.bf16.mxu0 0
        %576 = vmatmul.mubr.bf16.gmra.mrb[0].mxu0 %v505
        %v577 = vpop.f32.mrb[0].mxu0
        %v578 = vadd.f32 0.0, %v577
        %v579 = vpop.f32.mrb[0].mxu0
        %v580 = vpop.f32.mrb[0].mxu0
        %v581 = vadd.f32 0.0, %v580
        %v582 = vpop.f32.mrb[0].mxu0
        %583 = vdwg.mxu0
        %v584 = vmul.f32 %v554, 0.25
        %v585 = vmul.f32 %v557, 0.25
        %v586 = vmul.f32 %v562, 0.25
        %v587 = vmul.f32 %v565, 0.25
        %v588 = vmul.f32 %v570, 0.25
        %v589 = vmul.f32 %v573, 0.25
        %v590 = vmul.f32 %v578, 0.25
        %v591 = vmul.f32 %v581, 0.25
        %v592 = vsel %vm264, %v584, -1e+30
        %v593 = vsel %vm264, %v585, -1e+30
        %v594 = vsel %vm264, %v586, -1e+30
        %v595 = vsel %vm264, %v587, -1e+30
        %v596 = vsel %vm264, %v588, -1e+30
        %v597 = vsel %vm264, %v589, -1e+30
        %v598 = vsel %vm264, %v590, -1e+30
        %v599 = vsel %vm264, %v591, -1e+30
        %v600 = vsel %vm273, %v592, -inf
        %601 = vmax.xlane.f32.xlu0 %v600
        %v602 = vpop.xlane.xlu0 %601
        %v603 = vsel %vm273, %v593, -inf
        %604 = vmax.xlane.f32.xlu0 %v603
        %v605 = vpop.xlane.xlu0 %604
        %v606 = vsel %vm273, %v594, -inf
        %607 = vmax.xlane.f32.xlu0 %v606
        %v608 = vpop.xlane.xlu0 %607
        %v609 = vsel %vm273, %v595, -inf
        %610 = vmax.xlane.f32.xlu0 %v609
        %v611 = vpop.xlane.xlu0 %610
        %v612 = vsel %vm273, %v596, -inf
        %613 = vmax.xlane.f32.xlu0 %v612
        %v614 = vpop.xlane.xlu0 %613
        %v615 = vsel %vm273, %v597, -inf
        %616 = vmax.xlane.f32.xlu0 %v615
        %v617 = vpop.xlane.xlu0 %616
        %v618 = vsel %vm273, %v598, -inf
        %619 = vmax.xlane.f32.xlu0 %v618
        %v620 = vpop.xlane.xlu0 %619
        %v621 = vsel %vm273, %v599, -inf
        %622 = vmax.xlane.f32.xlu0 %v621
        %v623 = vpop.xlane.xlu0 %622
        %v624 = vsub.f32 %v592, %v602
        %v625 = vsub.f32 %v593, %v605
        %v626 = vsub.f32 %v594, %v608
        %v627 = vsub.f32 %v595, %v611
        %v628 = vsub.f32 %v596, %v614
        %v629 = vsub.f32 %v597, %v617
        %v630 = vsub.f32 %v598, %v620
        %v631 = vsub.f32 %v599, %v623
        %v632 = vmul.f32 %v624, 1.442695
        %v633 = vpow.pop %v632
        %v634 = vmul.f32 %v625, 1.442695
        %v635 = vpow.pop %v634
        %v636 = vmul.f32 %v626, 1.442695
        %v637 = vpow.pop %v636
        %v638 = vmul.f32 %v627, 1.442695
        %v639 = vpow.pop %v638
        %v640 = vmul.f32 %v628, 1.442695
        %v641 = vpow.pop %v640
        %v642 = vmul.f32 %v629, 1.442695
        %v643 = vpow.pop %v642
        %v644 = vmul.f32 %v630, 1.442695
        %v645 = vpow.pop %v644
        %v646 = vmul.f32 %v631, 1.442695
        %v647 = vpow.pop %v646
        %v648 = vsel %vm273, %v633, 0.0
        %649 = vadd.xlane.f32.xlu0 %v648
        %v650 = vpop.xlane.xlu0 %649
        %v651 = vsel %vm273, %v635, 0.0
        %652 = vadd.xlane.f32.xlu0 %v651
        %v653 = vpop.xlane.xlu0 %652
        %v654 = vsel %vm273, %v637, 0.0
        %655 = vadd.xlane.f32.xlu0 %v654
        %v656 = vpop.xlane.xlu0 %655
        %v657 = vsel %vm273, %v639, 0.0
        %658 = vadd.xlane.f32.xlu0 %v657
        %v659 = vpop.xlane.xlu0 %658
        %v660 = vsel %vm273, %v641, 0.0
        %661 = vadd.xlane.f32.xlu0 %v660
        %v662 = vpop.xlane.xlu0 %661
        %v663 = vsel %vm273, %v643, 0.0
        %664 = vadd.xlane.f32.xlu0 %v663
        %v665 = vpop.xlane.xlu0 %664
        %v666 = vsel %vm273, %v645, 0.0
        %667 = vadd.xlane.f32.xlu0 %v666
        %v668 = vpop.xlane.xlu0 %667
        %v669 = vsel %vm273, %v647, 0.0
        %670 = vadd.xlane.f32.xlu0 %v669
        %v671 = vpop.xlane.xlu0 %670
        %v672 = vrcp.pop %v650
        %v673 = vrcp.pop %v653
        %v674 = vrcp.pop %v656
        %v675 = vrcp.pop %v659
        %v676 = vrcp.pop %v662
        %v677 = vrcp.pop %v665
        %v678 = vrcp.pop %v668
        %v679 = vrcp.pop %v671
        %v680 = vmul.f32 %v633, %v672
        %v681 = vmul.f32 %v635, %v673
        %v682 = vmul.f32 %v637, %v674
        %v683 = vmul.f32 %v639, %v675
        %v684 = vmul.f32 %v641, %v676
        %v685 = vmul.f32 %v643, %v677
        %v686 = vmul.f32 %v645, %v678
        %v687 = vmul.f32 %v647, %v679
        %v688 = vpack.c.bf16 %v681, %v680
        %v689 = vpack.c.bf16 %v683, %v682
        %v690 = vpack.c.bf16 %v685, %v684
        %v691 = vpack.c.bf16 %v687, %v686
        %692 = vrot.lane.b32.xlu0 %v471, 48
        %v693 = vpop.permute.xlu0 %692
        %694 = vrot.lane.b32.xlu0 %v472, 48
        %v695 = vpop.permute.xlu0 %694
        %696 = vrot.lane.b32.xlu0 %v473, 48
        %v697 = vpop.permute.xlu0 %696
        %698 = vrot.lane.b32.xlu0 %v474, 48
        %v699 = vpop.permute.xlu0 %698
        %v705 = vsel %vm273, %v688, 0
        %v708 = vsel %vm273, %v689, 0
        %v711 = vsel %vm273, %v690, 0
        %v714 = vsel %vm273, %v691, 0
        %716 = vmatprep.subr.bf16.mxu0 0
        %717 = vmatpush1.bf16.msra.mxu0 %v693
        %718 = vmatprep.subr.bf16.mxu0 0
        %719 = vmatpush1.bf16.msra.mxu0 %v695
        %720 = vmatprep.subr.bf16.mxu0 0
        %721 = vmatpush1.bf16.msra.mxu0 %v697
        %722 = vmatprep.subr.bf16.mxu0 0
        %723 = vmatpush1.bf16.msra.mxu0 %v699
        %724 = vmatprep.subr.bf16.mxu0 0
        %725 = vmatpush1.bf16.msra.mxu0 0
        %726 = vmatprep.subr.bf16.mxu0 0
        %727 = vmatpush1.bf16.msra.mxu0 0
        %728 = vmatprep.subr.bf16.mxu0 0
        %729 = vmatpush1.bf16.msra.mxu0 0
        %730 = vmatprep.subr.bf16.mxu0 0
        %731 = vmatpush1.bf16.msra.mxu0 0
        %732 = vmatprep.subr.bf16.mxu0 0
        %733 = vmatpush1.bf16.msra.mxu0 0
        %734 = vmatprep.subr.bf16.mxu0 0
        %735 = vmatpush1.bf16.msra.mxu0 0
        %736 = vmatprep.subr.bf16.mxu0 0
        %737 = vmatpush1.bf16.msra.mxu0 0
        %738 = vmatprep.subr.bf16.mxu0 0
        %739 = vmatpush1.bf16.msra.mxu0 0
        %740 = vmatprep.subr.bf16.mxu0 0
        %741 = vmatpush1.bf16.msra.mxu0 0
        %742 = vmatprep.subr.bf16.mxu0 0
        %743 = vmatpush1.bf16.msra.mxu0 0
        %744 = vmatprep.subr.bf16.mxu0 0
        %745 = vmatpush1.bf16.msra.mxu0 0
        %746 = vmatprep.subr.bf16.mxu0 0
        %747 = vmatpush1.bf16.msra.mxu0 0
        %748 = vmatprep.mubr.bf16.mxu0 0
        %749 = vmatmul.mubr.bf16.gmra.mrb[0].mxu0 %v705
        %v750 = vpop.f32.mrb[0].mxu0
        %v751 = vadd.f32 0.0, %v750
        %v752 = vpop.f32.mrb[0].mxu0
        %v753 = vpop.f32.mrb[0].mxu0
        %v754 = vadd.f32 0.0, %v753
        %v755 = vpop.f32.mrb[0].mxu0
        %756 = vmatprep.mubr.bf16.mxu0 0
        %757 = vmatmul.mubr.bf16.gmra.mrb[0].mxu0 %v708
        %v758 = vpop.f32.mrb[0].mxu0
        %v759 = vadd.f32 0.0, %v758
        %v760 = vpop.f32.mrb[0].mxu0
        %v761 = vpop.f32.mrb[0].mxu0
        %v762 = vadd.f32 0.0, %v761
        %v763 = vpop.f32.mrb[0].mxu0
        %764 = vmatprep.mubr.bf16.mxu0 0
        %765 = vmatmul.mubr.bf16.gmra.mrb[0].mxu0 %v711
        %v766 = vpop.f32.mrb[0].mxu0
        %v767 = vadd.f32 0.0, %v766
        %v768 = vpop.f32.mrb[0].mxu0
        %v769 = vpop.f32.mrb[0].mxu0
        %v770 = vadd.f32 0.0, %v769
        %v771 = vpop.f32.mrb[0].mxu0
        %772 = vmatprep.mubr.bf16.mxu0 0
        %773 = vmatmul.mubr.bf16.gmra.mrb[0].mxu0 %v714
        %v774 = vpop.f32.mrb[0].mxu0
        %v775 = vadd.f32 0.0, %v774
        %v776 = vpop.f32.mrb[0].mxu0
        %v777 = vpop.f32.mrb[0].mxu0
        %v778 = vadd.f32 0.0, %v777
        %v779 = vpop.f32.mrb[0].mxu0
        %780 = vdwg.mxu0
        %789 = vrot.lane.b32.xlu0 %v751, 16
        %v790 = vpop.permute.xlu0 %789
        %791 = vrot.lane.b32.xlu0 %v754, 16
        %v792 = vpop.permute.xlu0 %791
        %793 = vrot.lane.b32.xlu0 %v759, 16
        %v794 = vpop.permute.xlu0 %793
        %795 = vrot.lane.b32.xlu0 %v762, 16
        %v796 = vpop.permute.xlu0 %795
        %797 = vrot.lane.b32.xlu0 %v767, 16
        %v798 = vpop.permute.xlu0 %797
        %799 = vrot.lane.b32.xlu0 %v770, 16
        %v800 = vpop.permute.xlu0 %799
        %801 = vrot.lane.b32.xlu0 %v775, 16
        %v802 = vpop.permute.xlu0 %801
        %803 = vrot.lane.b32.xlu0 %v778, 16
        %v804 = vpop.permute.xlu0 %803
        %vm813 = vcmask 261248
        %814 = vst.msk [vmem:[%s134] sm:$0xff] %vm813, %v790
        %815 = vst.msk [vmem:[%s134 + $0x8] sm:$0xff] %vm813, %v792
        %816 = vst.msk [vmem:[%s134 + $0x10] sm:$0xff] %vm813, %v794
        %817 = vst.msk [vmem:[%s134 + $0x18] sm:$0xff] %vm813, %v796
        %818 = vst.msk [vmem:[%s134 + $0x20] sm:$0xff] %vm813, %v798
        %819 = vst.msk [vmem:[%s134 + $0x28] sm:$0xff] %vm813, %v800
        %820 = vst.msk [vmem:[%s134 + $0x30] sm:$0xff] %vm813, %v802
        %821 = vst.msk [vmem:[%s134 + $0x38] sm:$0xff] %vm813, %v804
        %s822 = sand.u32 %s52, 1
        %s823 = scalar_lea.sflag [#allocation4], %s822
        %s824 = sand.u32 %s52, 1
        %s825 = smul.addr %s824, 64
        %s826 = scalar_lea.vmem [#allocation5], %s825
        // Predicated region
        $region29: #{_lambda_.13} parent=23 // pred_check
          %p827 = pneg %p62
        $region30: #{_lambda_.13} parent=23 // pred_check_branch
          %829 = sbr.rel (%p827) target = $region32
        $region31: #{_lambda_.13} parent=23 // pred_region
          %s830 = smul.u32 8, %s18
          %s832 = ssub.s32 1024, 1024
          %833 = vsyncadd %s823, %s832
          %s834 = smul.addr %s830, 128
          %s835 = scalar_lea.hbm %s1, %s834
          %s836 = sshll.u32 %s826, 4
          %s837 = int_to_ptr.vmem [resolvable:$true] %s836
          %842 = dma.vmem_to_hbm [thread:$0]  %s837, 1024, %s835, %s823, 128, 128, 8
        $region32: #{_lambda_.13} parent=23 // pred_fallthru
          _
      $region24: #{_lambda_.13} parent=5 // pred_fallthru
        _
      %p843 = scmp.le.s32.totalorder 2, %s13
      // Predicated region
      $region33: #{_lambda_.13} parent=5 // pred_check
        %p844 = pneg %p843
      $region34: #{_lambda_.13} parent=5 // pred_check_branch
        %846 = sbr.rel (%p844) target = $region36
      $region35: #{_lambda_.13} parent=5 // pred_region
        %s847 = ssub.s32 %s13, 2
        // Predicated region
        $region37: #{_lambda_.13} parent=35 // pred_check
          %p848 = pneg %p68
        $region38: #{_lambda_.13} parent=35 // pred_check_branch
          %850 = sbr.rel (%p848) target = $region40
        $region39: #{_lambda_.13} parent=35 // pred_region
          %s851 = sand.u32 %s53, 1
          %s852 = scalar_lea.sflag [#allocation4], %s851
          %s853 = sand.u32 %s53, 1
          %s854 = smul.addr %s853, 64
          %s855 = scalar_lea.vmem [#allocation5], %s854
          %856 = dma.done %s852, 1024
        $region40: #{_lambda_.13} parent=35 // pred_fallthru
          _
      $region36: #{_lambda_.13} parent=5 // pred_fallthru
        _
    $region6: #{_lambda_.13} parent=1 // loop_footer
      %s17 = sadd.s32 1, %s13
    $region7: #{_lambda_.13} parent=1 // loop_footer_branch
      %12 = sbr.rel target = $region3
    $region8: #{_lambda_.13} parent=1 // loop_exit
      _
    %857 = vsyncpa [#allocation3], 1
    %s858 = scalar_lea.sflag [#allocation3], 1
    %859 = vsyncpa %s858, 1
    %860 = vsyncpa [#allocation4], 1
    %s861 = scalar_lea.sflag [#allocation4], 1
    %862 = vsyncpa %s861, 1

// kernel: _lambda_.12
$region0: #{_lambda_.12}
  #allocation0 [shape = 'u32[]', space=smem, size = 0x4, offset = 0x4, fixed_abs, tag = 'smem constant byte address 0x4 - core index']
  #allocation1 [shape = 'u32[144,128]{1,0:T(1,128)}', space=vmem, size = 0x12000, scoped, tag = 'internal scratch']
  #allocation2 [shape = 'f32[128,96]{1,0:T(8,128)}', space=vmem, size = 0x10000, scoped, tag = 'scratch operand']
  %s0 = inlined_call_operand.hbm [shape: f32[128,32], index: 0, kind: input, shape index: {}]
  %s1 = inlined_call_operand.hbm [shape: f32[32,96], index: 1, kind: input, shape index: {}]
  %s2 = inlined_call_operand.hbm [shape: f32[1,32], index: 2, kind: input, shape index: {}]
  %s3 = inlined_call_operand.hbm [shape: f32[1,32], index: 3, kind: input, shape index: {}]
  %s4 = inlined_call_operand.hbm [shape: f32[128,96], index: 4, kind: output, shape index: {}]
  %s5 = sld [smem:[#allocation0]]
  $region50: #{_lambda_.12} parent=0
    _
  %s7 = ssub.s32 1, %s5
  %s8 = scalar_select 0, %s7, %s5
  $region1: #{_lambda_.12} parent=0
    #allocation3 [shape = 'u8[65536]{0}', space=vmem, size = 0x10000, scoped, tag = 'input window, operand 0, single buffered']
    #allocation4 [shape = 's32[1]{0}', space=sflag, size = 0x4, scoped, tag = 'scoped memory for _lambda_.12']
    #allocation5 [shape = 's32[1]{0}', space=sflag, size = 0x4, scoped, tag = 'scoped memory for _lambda_.12']
    #allocation6 [shape = 'u8[16384]{0}', space=vmem, size = 0x4000, scoped, tag = 'input window, operand 1, single buffered']
    #allocation7 [shape = 's32[1]{0}', space=sflag, size = 0x4, scoped, tag = 'scoped memory for _lambda_.12']
    #allocation8 [shape = 'u8[512]{0}', space=vmem, size = 0x400, scoped, tag = 'input window, operand 2, single buffered']
    #allocation9 [shape = 'u8[512]{0}', space=vmem, size = 0x400, scoped, tag = 'input window, operand 3, single buffered']
    #allocation10 [shape = 's32[1]{0}', space=sflag, size = 0x4, scoped, tag = 'scoped memory for _lambda_.12']
    #allocation11 [shape = 'u8[65536]{0}', space=vmem, size = 0x10000, scoped, tag = 'output window, operand 0, single buffered']
    %9 = vsyncpa [#allocation4], 0
    %10 = vsyncpa [#allocation7], 0
    %11 = vsyncpa [#allocation10], 0
    %12 = vsyncpa [#allocation5], 0
    // Predicated region
    $region2: #{_lambda_.12} parent=1 // pred_check
      _
    $region3: #{_lambda_.12} parent=1 // pred_check_branch
      %14 = sbr.rel (0) target = $region5
    $region4: #{_lambda_.12} parent=1 // pred_region
      %s16 = ssub.s32 2048, 2048
      %17 = vsyncadd [#allocation4], %s16
      %s18 = sshll.u32 [#allocation3], 4
      %s19 = int_to_ptr.vmem [resolvable:$true] %s18
      %24 = dma.hbm_to_vmem [thread:$0]  %s0, 2048, %s19, [#allocation4], 128, 128, 8
    $region5: #{_lambda_.12} parent=1 // pred_fallthru
      _
    // Predicated region
    $region6: #{_lambda_.12} parent=1 // pred_check
      _
    $region7: #{_lambda_.12} parent=1 // pred_check_branch
      %26 = sbr.rel (0) target = $region9
    $region8: #{_lambda_.12} parent=1 // pred_region
      %s28 = ssub.s32 512, 512
      %29 = vsyncadd [#allocation7], %s28
      %s30 = sshll.u32 [#allocation6], 4
      %s31 = int_to_ptr.vmem [resolvable:$true] %s30
      %36 = dma.hbm_to_vmem [thread:$0]  %s1, 512, %s31, [#allocation7], 128, 128, 8
    $region9: #{_lambda_.12} parent=1 // pred_fallthru
      _
    // Predicated region
    $region10: #{_lambda_.12} parent=1 // pred_check
      _
    $region11: #{_lambda_.12} parent=1 // pred_check_branch
      %38 = sbr.rel (0) target = $region13
    $region12: #{_lambda_.12} parent=1 // pred_region
      %s40 = ssub.s32 16, 16
      %41 = vsyncadd [#allocation7], %s40
      %s43 = sshll.u32 [#allocation8], 4
      %s44 = int_to_ptr.vmem [resolvable:$true] %s43
      %46 = dma.hbm_to_vmem [thread:$0]  %s2, 16, %s44, [#allocation7]
    $region13: #{_lambda_.12} parent=1 // pred_fallthru
      _
    // Predicated region
    $region14: #{_lambda_.12} parent=1 // pred_check
      _
    $region15: #{_lambda_.12} parent=1 // pred_check_branch
      %48 = sbr.rel (0) target = $region17
    $region16: #{_lambda_.12} parent=1 // pred_region
      %s50 = ssub.s32 16, 16
      %51 = vsyncadd [#allocation10], %s50
      %s53 = sshll.u32 [#allocation9], 4
      %s54 = int_to_ptr.vmem [resolvable:$true] %s53
      %56 = dma.hbm_to_vmem [thread:$0]  %s3, 16, %s54, [#allocation10]
    $region17: #{_lambda_.12} parent=1 // pred_fallthru
      _
    // Predicated region
    $region18: #{_lambda_.12} parent=1 // pred_check
      _
    $region19: #{_lambda_.12} parent=1 // pred_check_branch
      %58 = sbr.rel (0) target = $region21
    $region20: #{_lambda_.12} parent=1 // pred_region
      %59 = dma.done [#allocation4], 2048
    $region21: #{_lambda_.12} parent=1 // pred_fallthru
      _
    // Predicated region
    $region22: #{_lambda_.12} parent=1 // pred_check
      _
    $region23: #{_lambda_.12} parent=1 // pred_check_branch
      %61 = sbr.rel (0) target = $region25
    $region24: #{_lambda_.12} parent=1 // pred_region
      %62 = dma.done [#allocation7], 512
    $region25: #{_lambda_.12} parent=1 // pred_fallthru
      _
    // Predicated region
    $region26: #{_lambda_.12} parent=1 // pred_check
      _
    $region27: #{_lambda_.12} parent=1 // pred_check_branch
      %64 = sbr.rel (0) target = $region29
    $region28: #{_lambda_.12} parent=1 // pred_region
      %65 = dma.done [#allocation7], 16
    $region29: #{_lambda_.12} parent=1 // pred_fallthru
      _
    // Predicated region
    $region30: #{_lambda_.12} parent=1 // pred_check
      _
    $region31: #{_lambda_.12} parent=1 // pred_check_branch
      %67 = sbr.rel (0) target = $region33
    $region32: #{_lambda_.12} parent=1 // pred_region
      %68 = dma.done [#allocation10], 16
    $region33: #{_lambda_.12} parent=1 // pred_fallthru
      _
    %p70 = scmp.eq.s32.totalorder 0, 0
    // Predicated region
    $region34: #{_lambda_.12} parent=1 // pred_check
      %p71 = pneg %p70
    $region35: #{_lambda_.12} parent=1 // pred_check_branch
      %73 = sbr.rel (%p71) target = $region37
    $region36: #{_lambda_.12} parent=1 // pred_region
      %vm74 = vcmask 785408
      %75 = vst.msk [vmem:[#allocation2] sm:$0xff] %vm74, 0.0
      %76 = vst.msk [vmem:[#allocation2 + $0x8] sm:$0xff] %vm74, 0.0
      %77 = vst.msk [vmem:[#allocation2 + $0x10] sm:$0xff] %vm74, 0.0
      %78 = vst.msk [vmem:[#allocation2 + $0x18] sm:$0xff] %vm74, 0.0
      %79 = vst.msk [vmem:[#allocation2 + $0x20] sm:$0xff] %vm74, 0.0
      %80 = vst.msk [vmem:[#allocation2 + $0x28] sm:$0xff] %vm74, 0.0
      %81 = vst.msk [vmem:[#allocation2 + $0x30] sm:$0xff] %vm74, 0.0
      %82 = vst.msk [vmem:[#allocation2 + $0x38] sm:$0xff] %vm74, 0.0
      %83 = vst.msk [vmem:[#allocation2 + $0x40] sm:$0xff] %vm74, 0.0
      %84 = vst.msk [vmem:[#allocation2 + $0x48] sm:$0xff] %vm74, 0.0
      %85 = vst.msk [vmem:[#allocation2 + $0x50] sm:$0xff] %vm74, 0.0
      %86 = vst.msk [vmem:[#allocation2 + $0x58] sm:$0xff] %vm74, 0.0
      %87 = vst.msk [vmem:[#allocation2 + $0x60] sm:$0xff] %vm74, 0.0
      %88 = vst.msk [vmem:[#allocation2 + $0x68] sm:$0xff] %vm74, 0.0
      %89 = vst.msk [vmem:[#allocation2 + $0x70] sm:$0xff] %vm74, 0.0
      %90 = vst.msk [vmem:[#allocation2 + $0x78] sm:$0xff] %vm74, 0.0
    $region37: #{_lambda_.12} parent=1 // pred_fallthru
      _
    %v91 = vld [vmem:[#allocation3] sm:$0xff]
    %v92 = vld [vmem:[#allocation3 + $0x8] sm:$0xff]
    %v93 = vld [vmem:[#allocation3 + $0x10] sm:$0xff]
    %v94 = vld [vmem:[#allocation3 + $0x18] sm:$0xff]
    %v95 = vld [vmem:[#allocation3 + $0x20] sm:$0xff]
    %v96 = vld [vmem:[#allocation3 + $0x28] sm:$0xff]
    %v97 = vld [vmem:[#allocation3 + $0x30] sm:$0xff]
    %v98 = vld [vmem:[#allocation3 + $0x38] sm:$0xff]
    %v99 = vld [vmem:[#allocation3 + $0x40] sm:$0xff]
    %v100 = vld [vmem:[#allocation3 + $0x48] sm:$0xff]
    %v101 = vld [vmem:[#allocation3 + $0x50] sm:$0xff]
    %v102 = vld [vmem:[#allocation3 + $0x58] sm:$0xff]
    %v103 = vld [vmem:[#allocation3 + $0x60] sm:$0xff]
    %v104 = vld [vmem:[#allocation3 + $0x68] sm:$0xff]
    %v105 = vld [vmem:[#allocation3 + $0x70] sm:$0xff]
    %v106 = vld [vmem:[#allocation3 + $0x78] sm:$0xff]
    %vm107 = vcmask 261120
    %v108 = vsel %vm107, %v91, 0.0
    %109 = vadd.xlane.f32.xlu0 %v108
    %v110 = vpop.xlane.xlu0 %109
    %v111 = vsel %vm107, %v92, 0.0
    %112 = vadd.xlane.f32.xlu0 %v111
    %v113 = vpop.xlane.xlu0 %112
    %v114 = vsel %vm107, %v93, 0.0
    %115 = vadd.xlane.f32.xlu0 %v114
    %v116 = vpop.xlane.xlu0 %115
    %v117 = vsel %vm107, %v94, 0.0
    %118 = vadd.xlane.f32.xlu0 %v117
    %v119 = vpop.xlane.xlu0 %118
    %v120 = vsel %vm107, %v95, 0.0
    %121 = vadd.xlane.f32.xlu0 %v120
    %v122 = vpop.xlane.xlu0 %121
    %v123 = vsel %vm107, %v96, 0.0
    %124 = vadd.xlane.f32.xlu0 %v123
    %v125 = vpop.xlane.xlu0 %124
    %v126 = vsel %vm107, %v97, 0.0
    %127 = vadd.xlane.f32.xlu0 %v126
    %v128 = vpop.xlane.xlu0 %127
    %v129 = vsel %vm107, %v98, 0.0
    %130 = vadd.xlane.f32.xlu0 %v129
    %v131 = vpop.xlane.xlu0 %130
    %v132 = vsel %vm107, %v99, 0.0
    %133 = vadd.xlane.f32.xlu0 %v132
    %v134 = vpop.xlane.xlu0 %133
    %v135 = vsel %vm107, %v100, 0.0
    %136 = vadd.xlane.f32.xlu0 %v135
    %v137 = vpop.xlane.xlu0 %136
    %v138 = vsel %vm107, %v101, 0.0
    %139 = vadd.xlane.f32.xlu0 %v138
    %v140 = vpop.xlane.xlu0 %139
    %v141 = vsel %vm107, %v102, 0.0
    %142 = vadd.xlane.f32.xlu0 %v141
    %v143 = vpop.xlane.xlu0 %142
    %v144 = vsel %vm107, %v103, 0.0
    %145 = vadd.xlane.f32.xlu0 %v144
    %v146 = vpop.xlane.xlu0 %145
    %v147 = vsel %vm107, %v104, 0.0
    %148 = vadd.xlane.f32.xlu0 %v147
    %v149 = vpop.xlane.xlu0 %148
    %v150 = vsel %vm107, %v105, 0.0
    %151 = vadd.xlane.f32.xlu0 %v150
    %v152 = vpop.xlane.xlu0 %151
    %v153 = vsel %vm107, %v106, 0.0
    %154 = vadd.xlane.f32.xlu0 %v153
    %v155 = vpop.xlane.xlu0 %154
    %v156 = vrcp.pop 32.0
    %v157 = vmul.f32 %v110, %v156
    %v158 = vmul.f32 %v113, %v156
    %v159 = vmul.f32 %v116, %v156
    %v160 = vmul.f32 %v119, %v156
    %v161 = vmul.f32 %v122, %v156
    %v162 = vmul.f32 %v125, %v156
    %v163 = vmul.f32 %v128, %v156
    %v164 = vmul.f32 %v131, %v156
    %v165 = vmul.f32 %v134, %v156
    %v166 = vmul.f32 %v137, %v156
    %v167 = vmul.f32 %v140, %v156
    %v168 = vmul.f32 %v143, %v156
    %v169 = vmul.f32 %v146, %v156
    %v170 = vmul.f32 %v149, %v156
    %v171 = vmul.f32 %v152, %v156
    %v172 = vmul.f32 %v155, %v156
    %v173 = vsub.f32 %v91, %v157
    %v174 = vsub.f32 %v92, %v158
    %v175 = vsub.f32 %v93, %v159
    %v176 = vsub.f32 %v94, %v160
    %v177 = vsub.f32 %v95, %v161
    %v178 = vsub.f32 %v96, %v162
    %v179 = vsub.f32 %v97, %v163
    %v180 = vsub.f32 %v98, %v164
    %v181 = vsub.f32 %v99, %v165
    %v182 = vsub.f32 %v100, %v166
    %v183 = vsub.f32 %v101, %v167
    %v184 = vsub.f32 %v102, %v168
    %v185 = vsub.f32 %v103, %v169
    %v186 = vsub.f32 %v104, %v170
    %v187 = vsub.f32 %v105, %v171
    %v188 = vsub.f32 %v106, %v172
    %v189 = vmul.f32 %v173, %v173
    %v190 = vmul.f32 %v174, %v174
    %v191 = vmul.f32 %v175, %v175
    %v192 = vmul.f32 %v176, %v176
    %v193 = vmul.f32 %v177, %v177
    %v194 = vmul.f32 %v178, %v178
    %v195 = vmul.f32 %v179, %v179
    %v196 = vmul.f32 %v180, %v180
    %v197 = vmul.f32 %v181, %v181
    %v198 = vmul.f32 %v182, %v182
    %v199 = vmul.f32 %v183, %v183
    %v200 = vmul.f32 %v184, %v184
    %v201 = vmul.f32 %v185, %v185
    %v202 = vmul.f32 %v186, %v186
    %v203 = vmul.f32 %v187, %v187
    %v204 = vmul.f32 %v188, %v188
    %v205 = vsel %vm107, %v189, 0.0
    %206 = vadd.xlane.f32.xlu0 %v205
    %v207 = vpop.xlane.xlu0 %206
    %v208 = vsel %vm107, %v190, 0.0
    %209 = vadd.xlane.f32.xlu0 %v208
    %v210 = vpop.xlane.xlu0 %209
    %v211 = vsel %vm107, %v191, 0.0
    %212 = vadd.xlane.f32.xlu0 %v211
    %v213 = vpop.xlane.xlu0 %212
    %v214 = vsel %vm107, %v192, 0.0
    %215 = vadd.xlane.f32.xlu0 %v214
    %v216 = vpop.xlane.xlu0 %215
    %v217 = vsel %vm107, %v193, 0.0
    %218 = vadd.xlane.f32.xlu0 %v217
    %v219 = vpop.xlane.xlu0 %218
    %v220 = vsel %vm107, %v194, 0.0
    %221 = vadd.xlane.f32.xlu0 %v220
    %v222 = vpop.xlane.xlu0 %221
    %v223 = vsel %vm107, %v195, 0.0
    %224 = vadd.xlane.f32.xlu0 %v223
    %v225 = vpop.xlane.xlu0 %224
    %v226 = vsel %vm107, %v196, 0.0
    %227 = vadd.xlane.f32.xlu0 %v226
    %v228 = vpop.xlane.xlu0 %227
    %v229 = vsel %vm107, %v197, 0.0
    %230 = vadd.xlane.f32.xlu0 %v229
    %v231 = vpop.xlane.xlu0 %230
    %v232 = vsel %vm107, %v198, 0.0
    %233 = vadd.xlane.f32.xlu0 %v232
    %v234 = vpop.xlane.xlu0 %233
    %v235 = vsel %vm107, %v199, 0.0
    %236 = vadd.xlane.f32.xlu0 %v235
    %v237 = vpop.xlane.xlu0 %236
    %v238 = vsel %vm107, %v200, 0.0
    %239 = vadd.xlane.f32.xlu0 %v238
    %v240 = vpop.xlane.xlu0 %239
    %v241 = vsel %vm107, %v201, 0.0
    %242 = vadd.xlane.f32.xlu0 %v241
    %v243 = vpop.xlane.xlu0 %242
    %v244 = vsel %vm107, %v202, 0.0
    %245 = vadd.xlane.f32.xlu0 %v244
    %v246 = vpop.xlane.xlu0 %245
    %v247 = vsel %vm107, %v203, 0.0
    %248 = vadd.xlane.f32.xlu0 %v247
    %v249 = vpop.xlane.xlu0 %248
    %v250 = vsel %vm107, %v204, 0.0
    %251 = vadd.xlane.f32.xlu0 %v250
    %v252 = vpop.xlane.xlu0 %251
    %v253 = vmul.f32 %v207, %v156
    %v254 = vmul.f32 %v210, %v156
    %v255 = vmul.f32 %v213, %v156
    %v256 = vmul.f32 %v216, %v156
    %v257 = vmul.f32 %v219, %v156
    %v258 = vmul.f32 %v222, %v156
    %v259 = vmul.f32 %v225, %v156
    %v260 = vmul.f32 %v228, %v156
    %v261 = vmul.f32 %v231, %v156
    %v262 = vmul.f32 %v234, %v156
    %v263 = vmul.f32 %v237, %v156
    %v264 = vmul.f32 %v240, %v156
    %v265 = vmul.f32 %v243, %v156
    %v266 = vmul.f32 %v246, %v156
    %v267 = vmul.f32 %v249, %v156
    %v268 = vmul.f32 %v252, %v156
    %v269 = vadd.f32 %v253, 1e-05
    %v270 = vadd.f32 %v254, 1e-05
    %v271 = vadd.f32 %v255, 1e-05
    %v272 = vadd.f32 %v256, 1e-05
    %v273 = vadd.f32 %v257, 1e-05
    %v274 = vadd.f32 %v258, 1e-05
    %v275 = vadd.f32 %v259, 1e-05
    %v276 = vadd.f32 %v260, 1e-05
    %v277 = vadd.f32 %v261, 1e-05
    %v278 = vadd.f32 %v262, 1e-05
    %v279 = vadd.f32 %v263, 1e-05
    %v280 = vadd.f32 %v264, 1e-05
    %v281 = vadd.f32 %v265, 1e-05
    %v282 = vadd.f32 %v266, 1e-05
    %v283 = vadd.f32 %v267, 1e-05
    %v284 = vadd.f32 %v268, 1e-05
    %v285 = vrsqrt.pop %v269
    %v286 = vrsqrt.pop %v270
    %v287 = vrsqrt.pop %v271
    %v288 = vrsqrt.pop %v272
    %v289 = vrsqrt.pop %v273
    %v290 = vrsqrt.pop %v274
    %v291 = vrsqrt.pop %v275
    %v292 = vrsqrt.pop %v276
    %v293 = vrsqrt.pop %v277
    %v294 = vrsqrt.pop %v278
    %v295 = vrsqrt.pop %v279
    %v296 = vrsqrt.pop %v280
    %v297 = vrsqrt.pop %v281
    %v298 = vrsqrt.pop %v282
    %v299 = vrsqrt.pop %v283
    %v300 = vrsqrt.pop %v284
    %v301 = vmul.f32 %v173, %v285
    %v302 = vmul.f32 %v174, %v286
    %v303 = vmul.f32 %v175, %v287
    %v304 = vmul.f32 %v176, %v288
    %v305 = vmul.f32 %v177, %v289
    %v306 = vmul.f32 %v178, %v290
    %v307 = vmul.f32 %v179, %v291
    %v308 = vmul.f32 %v180, %v292
    %v309 = vmul.f32 %v181, %v293
    %v310 = vmul.f32 %v182, %v294
    %v311 = vmul.f32 %v183, %v295
    %v312 = vmul.f32 %v184, %v296
    %v313 = vmul.f32 %v185, %v297
    %v314 = vmul.f32 %v186, %v298
    %v315 = vmul.f32 %v187, %v299
    %v316 = vmul.f32 %v188, %v300
    %v317 = vld [vmem:[#allocation8] sm:$0x1]
    %v319 = vlaneseq
    %v320 = vshrl.u32 %v319, 7
    %v321 = vsub.s32 0, %v320
    %v322 = vrot.slane %v317, %v321
    %v324 = vmul.f32 %v301, %v322
    %v325 = vmul.f32 %v302, %v322
    %v326 = vmul.f32 %v303, %v322
    %v327 = vmul.f32 %v304, %v322
    %v328 = vmul.f32 %v305, %v322
    %v329 = vmul.f32 %v306, %v322
    %v330 = vmul.f32 %v307, %v322
    %v331 = vmul.f32 %v308, %v322
    %v332 = vmul.f32 %v309, %v322
    %v333 = vmul.f32 %v310, %v322
    %v334 = vmul.f32 %v311, %v322
    %v335 = vmul.f32 %v312, %v322
    %v336 = vmul.f32 %v313, %v322
    %v337 = vmul.f32 %v314, %v322
    %v338 = vmul.f32 %v315, %v322
    %v339 = vmul.f32 %v316, %v322
    %v340 = vld [vmem:[#allocation9] sm:$0x1]
    %v342 = vlaneseq
    %v343 = vshrl.u32 %v342, 7
    %v344 = vsub.s32 0, %v343
    %v345 = vrot.slane %v340, %v344
    %v347 = vadd.f32 %v324, %v345
    %v348 = vadd.f32 %v325, %v345
    %v349 = vadd.f32 %v326, %v345
    %v350 = vadd.f32 %v327, %v345
    %v351 = vadd.f32 %v328, %v345
    %v352 = vadd.f32 %v329, %v345
    %v353 = vadd.f32 %v330, %v345
    %v354 = vadd.f32 %v331, %v345
    %v355 = vadd.f32 %v332, %v345
    %v356 = vadd.f32 %v333, %v345
    %v357 = vadd.f32 %v334, %v345
    %v358 = vadd.f32 %v335, %v345
    %v359 = vadd.f32 %v336, %v345
    %v360 = vadd.f32 %v337, %v345
    %v361 = vadd.f32 %v338, %v345
    %v362 = vadd.f32 %v339, %v345
    %v363 = vpack.c.bf16 %v348, %v347
    %v364 = vpack.c.bf16 %v350, %v349
    %v365 = vpack.c.bf16 %v352, %v351
    %v366 = vpack.c.bf16 %v354, %v353
    %v367 = vpack.c.bf16 %v356, %v355
    %v368 = vpack.c.bf16 %v358, %v357
    %v369 = vpack.c.bf16 %v360, %v359
    %v370 = vpack.c.bf16 %v362, %v361
    %v371 = vld [vmem:[#allocation2] sm:$0xff]
    %v372 = vld [vmem:[#allocation2 + $0x8] sm:$0xff]
    %v373 = vld [vmem:[#allocation2 + $0x10] sm:$0xff]
    %v374 = vld [vmem:[#allocation2 + $0x18] sm:$0xff]
    %v375 = vld [vmem:[#allocation2 + $0x20] sm:$0xff]
    %v376 = vld [vmem:[#allocation2 + $0x28] sm:$0xff]
    %v377 = vld [vmem:[#allocation2 + $0x30] sm:$0xff]
    %v378 = vld [vmem:[#allocation2 + $0x38] sm:$0xff]
    %v379 = vld [vmem:[#allocation2 + $0x40] sm:$0xff]
    %v380 = vld [vmem:[#allocation2 + $0x48] sm:$0xff]
    %v381 = vld [vmem:[#allocation2 + $0x50] sm:$0xff]
    %v382 = vld [vmem:[#allocation2 + $0x58] sm:$0xff]
    %v383 = vld [vmem:[#allocation2 + $0x60] sm:$0xff]
    %v384 = vld [vmem:[#allocation2 + $0x68] sm:$0xff]
    %v385 = vld [vmem:[#allocation2 + $0x70] sm:$0xff]
    %v386 = vld [vmem:[#allocation2 + $0x78] sm:$0xff]
    %v387 = vld [vmem:[#allocation6] sm:$0xff]
    %v388 = vld [vmem:[#allocation6 + $0x8] sm:$0xff]
    %v389 = vld [vmem:[#allocation6 + $0x10] sm:$0xff]
    %v390 = vld [vmem:[#allocation6 + $0x18] sm:$0xff]
    %v391 = vpack.c.bf16 %v388, %v387
    %v392 = vpack.c.bf16 %v390, %v389
    %v394 = vsel %vm107, %v363, 0
    %v397 = vsel %vm107, %v364, 0
    %v400 = vsel %vm107, %v365, 0
    %v403 = vsel %vm107, %v366, 0
    %v406 = vsel %vm107, %v367, 0
    %v409 = vsel %vm107, %v368, 0
    %v412 = vsel %vm107, %v369, 0
    %v415 = vsel %vm107, %v370, 0
    %417 = vmatprep.subr.bf16.mxu0 0
    %418 = vmatpush1.bf16.msra.mxu0 %v391
    %419 = vmatprep.subr.bf16.mxu0 0
    %420 = vmatpush1.bf16.msra.mxu0 %v392
    %421 = vmatprep.subr.bf16.mxu0 0
    %422 = vmatpush1.bf16.msra.mxu0 0
    %423 = vmatprep.subr.bf16.mxu0 0
    %424 = vmatpush1.bf16.msra.mxu0 0
    %425 = vmatprep.subr.bf16.mxu0 0
    %426 = vmatpush1.bf16.msra.mxu0 0
    %427 = vmatprep.subr.bf16.mxu0 0
    %428 = vmatpush1.bf16.msra.mxu0 0
    %429 = vmatprep.subr.bf16.mxu0 0
    %430 = vmatpush1.bf16.msra.mxu0 0
    %431 = vmatprep.subr.bf16.mxu0 0
    %432 = vmatpush1.bf16.msra.mxu0 0
    %433 = vmatprep.subr.bf16.mxu0 0
    %434 = vmatpush1.bf16.msra.mxu0 0
    %435 = vmatprep.subr.bf16.mxu0 0
    %436 = vmatpush1.bf16.msra.mxu0 0
    %437 = vmatprep.subr.bf16.mxu0 0
    %438 = vmatpush1.bf16.msra.mxu0 0
    %439 = vmatprep.subr.bf16.mxu0 0
    %440 = vmatpush1.bf16.msra.mxu0 0
    %441 = vmatprep.subr.bf16.mxu0 0
    %442 = vmatpush1.bf16.msra.mxu0 0
    %443 = vmatprep.subr.bf16.mxu0 0
    %444 = vmatpush1.bf16.msra.mxu0 0
    %445 = vmatprep.subr.bf16.mxu0 0
    %446 = vmatpush1.bf16.msra.mxu0 0
    %447 = vmatprep.subr.bf16.mxu0 0
    %448 = vmatpush1.bf16.msra.mxu0 0
    %449 = vmatprep.mubr.bf16.mxu0 0
    %450 = vmatmul.mubr.bf16.gmra.mrb[0].mxu0 %v394
    %v451 = vpop.f32.mrb[0].mxu0
    %v452 = vadd.f32 0.0, %v451
    %v453 = vpop.f32.mrb[0].mxu0
    %v454 = vpop.f32.mrb[0].mxu0
    %v455 = vadd.f32 0.0, %v454
    %v456 = vpop.f32.mrb[0].mxu0
    %457 = vmatprep.mubr.bf16.mxu0 0
    %458 = vmatmul.mubr.bf16.gmra.mrb[0].mxu0 %v397
    %v459 = vpop.f32.mrb[0].mxu0
    %v460 = vadd.f32 0.0, %v459
    %v461 = vpop.f32.mrb[0].mxu0
    %v462 = vpop.f32.mrb[0].mxu0
    %v463 = vadd.f32 0.0, %v462
    %v464 = vpop.f32.mrb[0].mxu0
    %465 = vmatprep.mubr.bf16.mxu0 0
    %466 = vmatmul.mubr.bf16.gmra.mrb[0].mxu0 %v400
    %v467 = vpop.f32.mrb[0].mxu0
    %v468 = vadd.f32 0.0, %v467
    %v469 = vpop.f32.mrb[0].mxu0
    %v470 = vpop.f32.mrb[0].mxu0
    %v471 = vadd.f32 0.0, %v470
    %v472 = vpop.f32.mrb[0].mxu0
    %473 = vmatprep.mubr.bf16.mxu0 0
    %474 = vmatmul.mubr.bf16.gmra.mrb[0].mxu0 %v403
    %v475 = vpop.f32.mrb[0].mxu0
    %v476 = vadd.f32 0.0, %v475
    %v477 = vpop.f32.mrb[0].mxu0
    %v478 = vpop.f32.mrb[0].mxu0
    %v479 = vadd.f32 0.0, %v478
    %v480 = vpop.f32.mrb[0].mxu0
    %481 = vmatprep.mubr.bf16.mxu0 0
    %482 = vmatmul.mubr.bf16.gmra.mrb[0].mxu0 %v406
    %v483 = vpop.f32.mrb[0].mxu0
    %v484 = vadd.f32 0.0, %v483
    %v485 = vpop.f32.mrb[0].mxu0
    %v486 = vpop.f32.mrb[0].mxu0
    %v487 = vadd.f32 0.0, %v486
    %v488 = vpop.f32.mrb[0].mxu0
    %489 = vmatprep.mubr.bf16.mxu0 0
    %490 = vmatmul.mubr.bf16.gmra.mrb[0].mxu0 %v409
    %v491 = vpop.f32.mrb[0].mxu0
    %v492 = vadd.f32 0.0, %v491
    %v493 = vpop.f32.mrb[0].mxu0
    %v494 = vpop.f32.mrb[0].mxu0
    %v495 = vadd.f32 0.0, %v494
    %v496 = vpop.f32.mrb[0].mxu0
    %497 = vmatprep.mubr.bf16.mxu0 0
    %498 = vmatmul.mubr.bf16.gmra.mrb[0].mxu0 %v412
    %v499 = vpop.f32.mrb[0].mxu0
    %v500 = vadd.f32 0.0, %v499
    %v501 = vpop.f32.mrb[0].mxu0
    %v502 = vpop.f32.mrb[0].mxu0
    %v503 = vadd.f32 0.0, %v502
    %v504 = vpop.f32.mrb[0].mxu0
    %505 = vmatprep.mubr.bf16.mxu0 0
    %506 = vmatmul.mubr.bf16.gmra.mrb[0].mxu0 %v415
    %v507 = vpop.f32.mrb[0].mxu0
    %v508 = vadd.f32 0.0, %v507
    %v509 = vpop.f32.mrb[0].mxu0
    %v510 = vpop.f32.mrb[0].mxu0
    %v511 = vadd.f32 0.0, %v510
    %v512 = vpop.f32.mrb[0].mxu0
    %513 = vdwg.mxu0
    %v514 = vadd.f32 %v371, %v452
    %v515 = vadd.f32 %v372, %v455
    %v516 = vadd.f32 %v373, %v460
    %v517 = vadd.f32 %v374, %v463
    %v518 = vadd.f32 %v375, %v468
    %v519 = vadd.f32 %v376, %v471
    %v520 = vadd.f32 %v377, %v476
    %v521 = vadd.f32 %v378, %v479
    %v522 = vadd.f32 %v379, %v484
    %v523 = vadd.f32 %v380, %v487
    %v524 = vadd.f32 %v381, %v492
    %v525 = vadd.f32 %v382, %v495
    %v526 = vadd.f32 %v383, %v500
    %v527 = vadd.f32 %v384, %v503
    %v528 = vadd.f32 %v385, %v508
    %v529 = vadd.f32 %v386, %v511
    %vm530 = vcmask 785408
    %531 = vst.msk [vmem:[#allocation2] sm:$0xff] %vm530, %v514
    %532 = vst.msk [vmem:[#allocation2 + $0x8] sm:$0xff] %vm530, %v515
    %533 = vst.msk [vmem:[#allocation2 + $0x10] sm:$0xff] %vm530, %v516
    %534 = vst.msk [vmem:[#allocation2 + $0x18] sm:$0xff] %vm530, %v517
    %535 = vst.msk [vmem:[#allocation2 + $0x20] sm:$0xff] %vm530, %v518
    %536 = vst.msk [vmem:[#allocation2 + $0x28] sm:$0xff] %vm530, %v519
    %537 = vst.msk [vmem:[#allocation2 + $0x30] sm:$0xff] %vm530, %v520
    %538 = vst.msk [vmem:[#allocation2 + $0x38] sm:$0xff] %vm530, %v521
    %539 = vst.msk [vmem:[#allocation2 + $0x40] sm:$0xff] %vm530, %v522
    %540 = vst.msk [vmem:[#allocation2 + $0x48] sm:$0xff] %vm530, %v523
    %541 = vst.msk [vmem:[#allocation2 + $0x50] sm:$0xff] %vm530, %v524
    %542 = vst.msk [vmem:[#allocation2 + $0x58] sm:$0xff] %vm530, %v525
    %543 = vst.msk [vmem:[#allocation2 + $0x60] sm:$0xff] %vm530, %v526
    %544 = vst.msk [vmem:[#allocation2 + $0x68] sm:$0xff] %vm530, %v527
    %545 = vst.msk [vmem:[#allocation2 + $0x70] sm:$0xff] %vm530, %v528
    %546 = vst.msk [vmem:[#allocation2 + $0x78] sm:$0xff] %vm530, %v529
    // Predicated region
    $region38: #{_lambda_.12} parent=1 // pred_check
      %p547 = pneg %p70
    $region39: #{_lambda_.12} parent=1 // pred_check_branch
      %549 = sbr.rel (%p547) target = $region41
    $region40: #{_lambda_.12} parent=1 // pred_region
      %v550 = vld [vmem:[#allocation2] sm:$0xff]
      %v551 = vld [vmem:[#allocation2 + $0x8] sm:$0xff]
      %v552 = vld [vmem:[#allocation2 + $0x10] sm:$0xff]
      %v553 = vld [vmem:[#allocation2 + $0x18] sm:$0xff]
      %v554 = vld [vmem:[#allocation2 + $0x20] sm:$0xff]
      %v555 = vld [vmem:[#allocation2 + $0x28] sm:$0xff]
      %v556 = vld [vmem:[#allocation2 + $0x30] sm:$0xff]
      %v557 = vld [vmem:[#allocation2 + $0x38] sm:$0xff]
      %v558 = vld [vmem:[#allocation2 + $0x40] sm:$0xff]
      %v559 = vld [vmem:[#allocation2 + $0x48] sm:$0xff]
      %v560 = vld [vmem:[#allocation2 + $0x50] sm:$0xff]
      %v561 = vld [vmem:[#allocation2 + $0x58] sm:$0xff]
      %v562 = vld [vmem:[#allocation2 + $0x60] sm:$0xff]
      %v563 = vld [vmem:[#allocation2 + $0x68] sm:$0xff]
      %v564 = vld [vmem:[#allocation2 + $0x70] sm:$0xff]
      %v565 = vld [vmem:[#allocation2 + $0x78] sm:$0xff]
      %566 = vst.msk [vmem:[#allocation11] sm:$0xff] %vm530, %v550
      %567 = vst.msk [vmem:[#allocation11 + $0x8] sm:$0xff] %vm530, %v551
      %568 = vst.msk [vmem:[#allocation11 + $0x10] sm:$0xff] %vm530, %v552
      %569 = vst.msk [vmem:[#allocation11 + $0x18] sm:$0xff] %vm530, %v553
      %570 = vst.msk [vmem:[#allocation11 + $0x20] sm:$0xff] %vm530, %v554
      %571 = vst.msk [vmem:[#allocation11 + $0x28] sm:$0xff] %vm530, %v555
      %572 = vst.msk [vmem:[#allocation11 + $0x30] sm:$0xff] %vm530, %v556
      %573 = vst.msk [vmem:[#allocation11 + $0x38] sm:$0xff] %vm530, %v557
      %574 = vst.msk [vmem:[#allocation11 + $0x40] sm:$0xff] %vm530, %v558
      %575 = vst.msk [vmem:[#allocation11 + $0x48] sm:$0xff] %vm530, %v559
      %576 = vst.msk [vmem:[#allocation11 + $0x50] sm:$0xff] %vm530, %v560
      %577 = vst.msk [vmem:[#allocation11 + $0x58] sm:$0xff] %vm530, %v561
      %578 = vst.msk [vmem:[#allocation11 + $0x60] sm:$0xff] %vm530, %v562
      %579 = vst.msk [vmem:[#allocation11 + $0x68] sm:$0xff] %vm530, %v563
      %580 = vst.msk [vmem:[#allocation11 + $0x70] sm:$0xff] %vm530, %v564
      %581 = vst.msk [vmem:[#allocation11 + $0x78] sm:$0xff] %vm530, %v565
    $region41: #{_lambda_.12} parent=1 // pred_fallthru
      _
    // Predicated region
    $region42: #{_lambda_.12} parent=1 // pred_check
      _
    $region43: #{_lambda_.12} parent=1 // pred_check_branch
      %583 = sbr.rel (0) target = $region45
    $region44: #{_lambda_.12} parent=1 // pred_region
      %s585 = ssub.s32 2048, 2048
      %586 = vsyncadd [#allocation5], %s585
      %s587 = sshll.u32 [#allocation11], 4
      %s588 = int_to_ptr.vmem [resolvable:$true] %s587
      %593 = dma.vmem_to_hbm [thread:$0]  %s588, 2048, %s4, [#allocation5], 128, 128, 8
    $region45: #{_lambda_.12} parent=1 // pred_fallthru
      _
    // Predicated region
    $region46: #{_lambda_.12} parent=1 // pred_check
      _
    $region47: #{_lambda_.12} parent=1 // pred_check_branch
      %595 = sbr.rel (0) target = $region49
    $region48: #{_lambda_.12} parent=1 // pred_region
      %596 = dma.done [#allocation5], 2048
    $region49: #{_lambda_.12} parent=1 // pred_fallthru
      _
    %597 = vsyncpa [#allocation4], 1
    %598 = vsyncpa [#allocation7], 1
    %599 = vsyncpa [#allocation10], 1
    %600 = vsyncpa [#allocation5], 1

// kernel: _lambda_.15
$region0: #{_lambda_.15}
  #allocation0 [shape = 'u32[]', space=smem, size = 0x4, offset = 0x4, fixed_abs, tag = 'smem constant byte address 0x4 - core index']
  #allocation1 [shape = 'u32[144,128]{1,0:T(1,128)}', space=vmem, size = 0x12000, scoped, tag = 'internal scratch']
  #allocation2 [shape = 'f32[128,64]{1,0:T(8,128)}', space=vmem, size = 0x10000, scoped, tag = 'scratch operand']
  %s0 = inlined_call_operand.hbm [shape: f32[128,32], index: 0, kind: input, shape index: {}]
  %s1 = inlined_call_operand.hbm [shape: f32[32,64], index: 1, kind: input, shape index: {}]
  %s2 = inlined_call_operand.hbm [shape: f32[1,32], index: 2, kind: input, shape index: {}]
  %s3 = inlined_call_operand.hbm [shape: f32[1,32], index: 3, kind: input, shape index: {}]
  %s4 = inlined_call_operand.hbm [shape: f32[1,64], index: 4, kind: input, shape index: {}]
  %s5 = inlined_call_operand.hbm [shape: f32[128,64], index: 5, kind: output, shape index: {}]
  %s6 = sld [smem:[#allocation0]]
  $region58: #{_lambda_.15} parent=0
    _
  %s8 = ssub.s32 1, %s6
  %s9 = scalar_select 0, %s8, %s6
  $region1: #{_lambda_.15} parent=0
    #allocation3 [shape = 'u8[65536]{0}', space=vmem, size = 0x10000, scoped, tag = 'input window, operand 0, single buffered']
    #allocation4 [shape = 's32[1]{0}', space=sflag, size = 0x4, scoped, tag = 'scoped memory for _lambda_.15']
    #allocation5 [shape = 's32[1]{0}', space=sflag, size = 0x4, scoped, tag = 'scoped memory for _lambda_.15']
    #allocation6 [shape = 'u8[16384]{0}', space=vmem, size = 0x4000, scoped, tag = 'input window, operand 1, single buffered']
    #allocation7 [shape = 's32[1]{0}', space=sflag, size = 0x4, scoped, tag = 'scoped memory for _lambda_.15']
    #allocation8 [shape = 'u8[512]{0}', space=vmem, size = 0x400, scoped, tag = 'input window, operand 2, single buffered']
    #allocation9 [shape = 'u8[512]{0}', space=vmem, size = 0x400, scoped, tag = 'input window, operand 3, single buffered']
    #allocation10 [shape = 's32[1]{0}', space=sflag, size = 0x4, scoped, tag = 'scoped memory for _lambda_.15']
    #allocation11 [shape = 'u8[512]{0}', space=vmem, size = 0x400, scoped, tag = 'input window, operand 4, single buffered']
    #allocation12 [shape = 'u8[65536]{0}', space=vmem, size = 0x10000, scoped, tag = 'output window, operand 0, single buffered']
    %10 = vsyncpa [#allocation4], 0
    %11 = vsyncpa [#allocation7], 0
    %12 = vsyncpa [#allocation10], 0
    %13 = vsyncpa [#allocation5], 0
    // Predicated region
    $region2: #{_lambda_.15} parent=1 // pred_check
      _
    $region3: #{_lambda_.15} parent=1 // pred_check_branch
      %15 = sbr.rel (0) target = $region5
    $region4: #{_lambda_.15} parent=1 // pred_region
      %s17 = ssub.s32 2048, 2048
      %18 = vsyncadd [#allocation4], %s17
      %s19 = sshll.u32 [#allocation3], 4
      %s20 = int_to_ptr.vmem [resolvable:$true] %s19
      %25 = dma.hbm_to_vmem [thread:$0]  %s0, 2048, %s20, [#allocation4], 128, 128, 8
    $region5: #{_lambda_.15} parent=1 // pred_fallthru
      _
    // Predicated region
    $region6: #{_lambda_.15} parent=1 // pred_check
      _
    $region7: #{_lambda_.15} parent=1 // pred_check_branch
      %27 = sbr.rel (0) target = $region9
    $region8: #{_lambda_.15} parent=1 // pred_region
      %s29 = ssub.s32 512, 512
      %30 = vsyncadd [#allocation7], %s29
      %s31 = sshll.u32 [#allocation6], 4
      %s32 = int_to_ptr.vmem [resolvable:$true] %s31
      %37 = dma.hbm_to_vmem [thread:$0]  %s1, 512, %s32, [#allocation7], 128, 128, 8
    $region9: #{_lambda_.15} parent=1 // pred_fallthru
      _
    // Predicated region
    $region10: #{_lambda_.15} parent=1 // pred_check
      _
    $region11: #{_lambda_.15} parent=1 // pred_check_branch
      %39 = sbr.rel (0) target = $region13
    $region12: #{_lambda_.15} parent=1 // pred_region
      %s41 = ssub.s32 16, 16
      %42 = vsyncadd [#allocation7], %s41
      %s44 = sshll.u32 [#allocation8], 4
      %s45 = int_to_ptr.vmem [resolvable:$true] %s44
      %47 = dma.hbm_to_vmem [thread:$0]  %s2, 16, %s45, [#allocation7]
    $region13: #{_lambda_.15} parent=1 // pred_fallthru
      _
    // Predicated region
    $region14: #{_lambda_.15} parent=1 // pred_check
      _
    $region15: #{_lambda_.15} parent=1 // pred_check_branch
      %49 = sbr.rel (0) target = $region17
    $region16: #{_lambda_.15} parent=1 // pred_region
      %s51 = ssub.s32 16, 16
      %52 = vsyncadd [#allocation10], %s51
      %s54 = sshll.u32 [#allocation9], 4
      %s55 = int_to_ptr.vmem [resolvable:$true] %s54
      %57 = dma.hbm_to_vmem [thread:$0]  %s3, 16, %s55, [#allocation10]
    $region17: #{_lambda_.15} parent=1 // pred_fallthru
      _
    // Predicated region
    $region18: #{_lambda_.15} parent=1 // pred_check
      _
    $region19: #{_lambda_.15} parent=1 // pred_check_branch
      %59 = sbr.rel (0) target = $region21
    $region20: #{_lambda_.15} parent=1 // pred_region
      %s61 = ssub.s32 16, 16
      %62 = vsyncadd [#allocation10], %s61
      %s64 = sshll.u32 [#allocation11], 4
      %s65 = int_to_ptr.vmem [resolvable:$true] %s64
      %67 = dma.hbm_to_vmem [thread:$0]  %s4, 16, %s65, [#allocation10]
    $region21: #{_lambda_.15} parent=1 // pred_fallthru
      _
    // Predicated region
    $region22: #{_lambda_.15} parent=1 // pred_check
      _
    $region23: #{_lambda_.15} parent=1 // pred_check_branch
      %69 = sbr.rel (0) target = $region25
    $region24: #{_lambda_.15} parent=1 // pred_region
      %70 = dma.done [#allocation4], 2048
    $region25: #{_lambda_.15} parent=1 // pred_fallthru
      _
    // Predicated region
    $region26: #{_lambda_.15} parent=1 // pred_check
      _
    $region27: #{_lambda_.15} parent=1 // pred_check_branch
      %72 = sbr.rel (0) target = $region29
    $region28: #{_lambda_.15} parent=1 // pred_region
      %73 = dma.done [#allocation7], 512
    $region29: #{_lambda_.15} parent=1 // pred_fallthru
      _
    // Predicated region
    $region30: #{_lambda_.15} parent=1 // pred_check
      _
    $region31: #{_lambda_.15} parent=1 // pred_check_branch
      %75 = sbr.rel (0) target = $region33
    $region32: #{_lambda_.15} parent=1 // pred_region
      %76 = dma.done [#allocation7], 16
    $region33: #{_lambda_.15} parent=1 // pred_fallthru
      _
    // Predicated region
    $region34: #{_lambda_.15} parent=1 // pred_check
      _
    $region35: #{_lambda_.15} parent=1 // pred_check_branch
      %78 = sbr.rel (0) target = $region37
    $region36: #{_lambda_.15} parent=1 // pred_region
      %79 = dma.done [#allocation10], 16
    $region37: #{_lambda_.15} parent=1 // pred_fallthru
      _
    // Predicated region
    $region38: #{_lambda_.15} parent=1 // pred_check
      _
    $region39: #{_lambda_.15} parent=1 // pred_check_branch
      %81 = sbr.rel (0) target = $region41
    $region40: #{_lambda_.15} parent=1 // pred_region
      %82 = dma.done [#allocation10], 16
    $region41: #{_lambda_.15} parent=1 // pred_fallthru
      _
    %p84 = scmp.eq.s32.totalorder 0, 0
    // Predicated region
    $region42: #{_lambda_.15} parent=1 // pred_check
      %p85 = pneg %p84
    $region43: #{_lambda_.15} parent=1 // pred_check_branch
      %87 = sbr.rel (%p85) target = $region45
    $region44: #{_lambda_.15} parent=1 // pred_region
      %vm88 = vcmask 523264
      %89 = vst.msk [vmem:[#allocation2] sm:$0xff] %vm88, 0.0
      %90 = vst.msk [vmem:[#allocation2 + $0x8] sm:$0xff] %vm88, 0.0
      %91 = vst.msk [vmem:[#allocation2 + $0x10] sm:$0xff] %vm88, 0.0
      %92 = vst.msk [vmem:[#allocation2 + $0x18] sm:$0xff] %vm88, 0.0
      %93 = vst.msk [vmem:[#allocation2 + $0x20] sm:$0xff] %vm88, 0.0
      %94 = vst.msk [vmem:[#allocation2 + $0x28] sm:$0xff] %vm88, 0.0
      %95 = vst.msk [vmem:[#allocation2 + $0x30] sm:$0xff] %vm88, 0.0
      %96 = vst.msk [vmem:[#allocation2 + $0x38] sm:$0xff] %vm88, 0.0
      %97 = vst.msk [vmem:[#allocation2 + $0x40] sm:$0xff] %vm88, 0.0
      %98 = vst.msk [vmem:[#allocation2 + $0x48] sm:$0xff] %vm88, 0.0
      %99 = vst.msk [vmem:[#allocation2 + $0x50] sm:$0xff] %vm88, 0.0
      %100 = vst.msk [vmem:[#allocation2 + $0x58] sm:$0xff] %vm88, 0.0
      %101 = vst.msk [vmem:[#allocation2 + $0x60] sm:$0xff] %vm88, 0.0
      %102 = vst.msk [vmem:[#allocation2 + $0x68] sm:$0xff] %vm88, 0.0
      %103 = vst.msk [vmem:[#allocation2 + $0x70] sm:$0xff] %vm88, 0.0
      %104 = vst.msk [vmem:[#allocation2 + $0x78] sm:$0xff] %vm88, 0.0
    $region45: #{_lambda_.15} parent=1 // pred_fallthru
      _
    %v105 = vld [vmem:[#allocation3] sm:$0xff]
    %v106 = vld [vmem:[#allocation3 + $0x8] sm:$0xff]
    %v107 = vld [vmem:[#allocation3 + $0x10] sm:$0xff]
    %v108 = vld [vmem:[#allocation3 + $0x18] sm:$0xff]
    %v109 = vld [vmem:[#allocation3 + $0x20] sm:$0xff]
    %v110 = vld [vmem:[#allocation3 + $0x28] sm:$0xff]
    %v111 = vld [vmem:[#allocation3 + $0x30] sm:$0xff]
    %v112 = vld [vmem:[#allocation3 + $0x38] sm:$0xff]
    %v113 = vld [vmem:[#allocation3 + $0x40] sm:$0xff]
    %v114 = vld [vmem:[#allocation3 + $0x48] sm:$0xff]
    %v115 = vld [vmem:[#allocation3 + $0x50] sm:$0xff]
    %v116 = vld [vmem:[#allocation3 + $0x58] sm:$0xff]
    %v117 = vld [vmem:[#allocation3 + $0x60] sm:$0xff]
    %v118 = vld [vmem:[#allocation3 + $0x68] sm:$0xff]
    %v119 = vld [vmem:[#allocation3 + $0x70] sm:$0xff]
    %v120 = vld [vmem:[#allocation3 + $0x78] sm:$0xff]
    %vm121 = vcmask 261120
    %v122 = vsel %vm121, %v105, 0.0
    %123 = vadd.xlane.f32.xlu0 %v122
    %v124 = vpop.xlane.xlu0 %123
    %v125 = vsel %vm121, %v106, 0.0
    %126 = vadd.xlane.f32.xlu0 %v125
    %v127 = vpop.xlane.xlu0 %126
    %v128 = vsel %vm121, %v107, 0.0
    %129 = vadd.xlane.f32.xlu0 %v128
    %v130 = vpop.xlane.xlu0 %129
    %v131 = vsel %vm121, %v108, 0.0
    %132 = vadd.xlane.f32.xlu0 %v131
    %v133 = vpop.xlane.xlu0 %132
    %v134 = vsel %vm121, %v109, 0.0
    %135 = vadd.xlane.f32.xlu0 %v134
    %v136 = vpop.xlane.xlu0 %135
    %v137 = vsel %vm121, %v110, 0.0
    %138 = vadd.xlane.f32.xlu0 %v137
    %v139 = vpop.xlane.xlu0 %138
    %v140 = vsel %vm121, %v111, 0.0
    %141 = vadd.xlane.f32.xlu0 %v140
    %v142 = vpop.xlane.xlu0 %141
    %v143 = vsel %vm121, %v112, 0.0
    %144 = vadd.xlane.f32.xlu0 %v143
    %v145 = vpop.xlane.xlu0 %144
    %v146 = vsel %vm121, %v113, 0.0
    %147 = vadd.xlane.f32.xlu0 %v146
    %v148 = vpop.xlane.xlu0 %147
    %v149 = vsel %vm121, %v114, 0.0
    %150 = vadd.xlane.f32.xlu0 %v149
    %v151 = vpop.xlane.xlu0 %150
    %v152 = vsel %vm121, %v115, 0.0
    %153 = vadd.xlane.f32.xlu0 %v152
    %v154 = vpop.xlane.xlu0 %153
    %v155 = vsel %vm121, %v116, 0.0
    %156 = vadd.xlane.f32.xlu0 %v155
    %v157 = vpop.xlane.xlu0 %156
    %v158 = vsel %vm121, %v117, 0.0
    %159 = vadd.xlane.f32.xlu0 %v158
    %v160 = vpop.xlane.xlu0 %159
    %v161 = vsel %vm121, %v118, 0.0
    %162 = vadd.xlane.f32.xlu0 %v161
    %v163 = vpop.xlane.xlu0 %162
    %v164 = vsel %vm121, %v119, 0.0
    %165 = vadd.xlane.f32.xlu0 %v164
    %v166 = vpop.xlane.xlu0 %165
    %v167 = vsel %vm121, %v120, 0.0
    %168 = vadd.xlane.f32.xlu0 %v167
    %v169 = vpop.xlane.xlu0 %168
    %v170 = vrcp.pop 32.0
    %v171 = vmul.f32 %v124, %v170
    %v172 = vmul.f32 %v127, %v170
    %v173 = vmul.f32 %v130, %v170
    %v174 = vmul.f32 %v133, %v170
    %v175 = vmul.f32 %v136, %v170
    %v176 = vmul.f32 %v139, %v170
    %v177 = vmul.f32 %v142, %v170
    %v178 = vmul.f32 %v145, %v170
    %v179 = vmul.f32 %v148, %v170
    %v180 = vmul.f32 %v151, %v170
    %v181 = vmul.f32 %v154, %v170
    %v182 = vmul.f32 %v157, %v170
    %v183 = vmul.f32 %v160, %v170
    %v184 = vmul.f32 %v163, %v170
    %v185 = vmul.f32 %v166, %v170
    %v186 = vmul.f32 %v169, %v170
    %v187 = vsub.f32 %v105, %v171
    %v188 = vsub.f32 %v106, %v172
    %v189 = vsub.f32 %v107, %v173
    %v190 = vsub.f32 %v108, %v174
    %v191 = vsub.f32 %v109, %v175
    %v192 = vsub.f32 %v110, %v176
    %v193 = vsub.f32 %v111, %v177
    %v194 = vsub.f32 %v112, %v178
    %v195 = vsub.f32 %v113, %v179
    %v196 = vsub.f32 %v114, %v180
    %v197 = vsub.f32 %v115, %v181
    %v198 = vsub.f32 %v116, %v182
    %v199 = vsub.f32 %v117, %v183
    %v200 = vsub.f32 %v118, %v184
    %v201 = vsub.f32 %v119, %v185
    %v202 = vsub.f32 %v120, %v186
    %v203 = vmul.f32 %v187, %v187
    %v204 = vmul.f32 %v188, %v188
    %v205 = vmul.f32 %v189, %v189
    %v206 = vmul.f32 %v190, %v190
    %v207 = vmul.f32 %v191, %v191
    %v208 = vmul.f32 %v192, %v192
    %v209 = vmul.f32 %v193, %v193
    %v210 = vmul.f32 %v194, %v194
    %v211 = vmul.f32 %v195, %v195
    %v212 = vmul.f32 %v196, %v196
    %v213 = vmul.f32 %v197, %v197
    %v214 = vmul.f32 %v198, %v198
    %v215 = vmul.f32 %v199, %v199
    %v216 = vmul.f32 %v200, %v200
    %v217 = vmul.f32 %v201, %v201
    %v218 = vmul.f32 %v202, %v202
    %v219 = vsel %vm121, %v203, 0.0
    %220 = vadd.xlane.f32.xlu0 %v219
    %v221 = vpop.xlane.xlu0 %220
    %v222 = vsel %vm121, %v204, 0.0
    %223 = vadd.xlane.f32.xlu0 %v222
    %v224 = vpop.xlane.xlu0 %223
    %v225 = vsel %vm121, %v205, 0.0
    %226 = vadd.xlane.f32.xlu0 %v225
    %v227 = vpop.xlane.xlu0 %226
    %v228 = vsel %vm121, %v206, 0.0
    %229 = vadd.xlane.f32.xlu0 %v228
    %v230 = vpop.xlane.xlu0 %229
    %v231 = vsel %vm121, %v207, 0.0
    %232 = vadd.xlane.f32.xlu0 %v231
    %v233 = vpop.xlane.xlu0 %232
    %v234 = vsel %vm121, %v208, 0.0
    %235 = vadd.xlane.f32.xlu0 %v234
    %v236 = vpop.xlane.xlu0 %235
    %v237 = vsel %vm121, %v209, 0.0
    %238 = vadd.xlane.f32.xlu0 %v237
    %v239 = vpop.xlane.xlu0 %238
    %v240 = vsel %vm121, %v210, 0.0
    %241 = vadd.xlane.f32.xlu0 %v240
    %v242 = vpop.xlane.xlu0 %241
    %v243 = vsel %vm121, %v211, 0.0
    %244 = vadd.xlane.f32.xlu0 %v243
    %v245 = vpop.xlane.xlu0 %244
    %v246 = vsel %vm121, %v212, 0.0
    %247 = vadd.xlane.f32.xlu0 %v246
    %v248 = vpop.xlane.xlu0 %247
    %v249 = vsel %vm121, %v213, 0.0
    %250 = vadd.xlane.f32.xlu0 %v249
    %v251 = vpop.xlane.xlu0 %250
    %v252 = vsel %vm121, %v214, 0.0
    %253 = vadd.xlane.f32.xlu0 %v252
    %v254 = vpop.xlane.xlu0 %253
    %v255 = vsel %vm121, %v215, 0.0
    %256 = vadd.xlane.f32.xlu0 %v255
    %v257 = vpop.xlane.xlu0 %256
    %v258 = vsel %vm121, %v216, 0.0
    %259 = vadd.xlane.f32.xlu0 %v258
    %v260 = vpop.xlane.xlu0 %259
    %v261 = vsel %vm121, %v217, 0.0
    %262 = vadd.xlane.f32.xlu0 %v261
    %v263 = vpop.xlane.xlu0 %262
    %v264 = vsel %vm121, %v218, 0.0
    %265 = vadd.xlane.f32.xlu0 %v264
    %v266 = vpop.xlane.xlu0 %265
    %v267 = vmul.f32 %v221, %v170
    %v268 = vmul.f32 %v224, %v170
    %v269 = vmul.f32 %v227, %v170
    %v270 = vmul.f32 %v230, %v170
    %v271 = vmul.f32 %v233, %v170
    %v272 = vmul.f32 %v236, %v170
    %v273 = vmul.f32 %v239, %v170
    %v274 = vmul.f32 %v242, %v170
    %v275 = vmul.f32 %v245, %v170
    %v276 = vmul.f32 %v248, %v170
    %v277 = vmul.f32 %v251, %v170
    %v278 = vmul.f32 %v254, %v170
    %v279 = vmul.f32 %v257, %v170
    %v280 = vmul.f32 %v260, %v170
    %v281 = vmul.f32 %v263, %v170
    %v282 = vmul.f32 %v266, %v170
    %v283 = vadd.f32 %v267, 1e-05
    %v284 = vadd.f32 %v268, 1e-05
    %v285 = vadd.f32 %v269, 1e-05
    %v286 = vadd.f32 %v270, 1e-05
    %v287 = vadd.f32 %v271, 1e-05
    %v288 = vadd.f32 %v272, 1e-05
    %v289 = vadd.f32 %v273, 1e-05
    %v290 = vadd.f32 %v274, 1e-05
    %v291 = vadd.f32 %v275, 1e-05
    %v292 = vadd.f32 %v276, 1e-05
    %v293 = vadd.f32 %v277, 1e-05
    %v294 = vadd.f32 %v278, 1e-05
    %v295 = vadd.f32 %v279, 1e-05
    %v296 = vadd.f32 %v280, 1e-05
    %v297 = vadd.f32 %v281, 1e-05
    %v298 = vadd.f32 %v282, 1e-05
    %v299 = vrsqrt.pop %v283
    %v300 = vrsqrt.pop %v284
    %v301 = vrsqrt.pop %v285
    %v302 = vrsqrt.pop %v286
    %v303 = vrsqrt.pop %v287
    %v304 = vrsqrt.pop %v288
    %v305 = vrsqrt.pop %v289
    %v306 = vrsqrt.pop %v290
    %v307 = vrsqrt.pop %v291
    %v308 = vrsqrt.pop %v292
    %v309 = vrsqrt.pop %v293
    %v310 = vrsqrt.pop %v294
    %v311 = vrsqrt.pop %v295
    %v312 = vrsqrt.pop %v296
    %v313 = vrsqrt.pop %v297
    %v314 = vrsqrt.pop %v298
    %v315 = vmul.f32 %v187, %v299
    %v316 = vmul.f32 %v188, %v300
    %v317 = vmul.f32 %v189, %v301
    %v318 = vmul.f32 %v190, %v302
    %v319 = vmul.f32 %v191, %v303
    %v320 = vmul.f32 %v192, %v304
    %v321 = vmul.f32 %v193, %v305
    %v322 = vmul.f32 %v194, %v306
    %v323 = vmul.f32 %v195, %v307
    %v324 = vmul.f32 %v196, %v308
    %v325 = vmul.f32 %v197, %v309
    %v326 = vmul.f32 %v198, %v310
    %v327 = vmul.f32 %v199, %v311
    %v328 = vmul.f32 %v200, %v312
    %v329 = vmul.f32 %v201, %v313
    %v330 = vmul.f32 %v202, %v314
    %v331 = vld [vmem:[#allocation8] sm:$0x1]
    %v333 = vlaneseq
    %v334 = vshrl.u32 %v333, 7
    %v335 = vsub.s32 0, %v334
    %v336 = vrot.slane %v331, %v335
    %v338 = vmul.f32 %v315, %v336
    %v339 = vmul.f32 %v316, %v336
    %v340 = vmul.f32 %v317, %v336
    %v341 = vmul.f32 %v318, %v336
    %v342 = vmul.f32 %v319, %v336
    %v343 = vmul.f32 %v320, %v336
    %v344 = vmul.f32 %v321, %v336
    %v345 = vmul.f32 %v322, %v336
    %v346 = vmul.f32 %v323, %v336
    %v347 = vmul.f32 %v324, %v336
    %v348 = vmul.f32 %v325, %v336
    %v349 = vmul.f32 %v326, %v336
    %v350 = vmul.f32 %v327, %v336
    %v351 = vmul.f32 %v328, %v336
    %v352 = vmul.f32 %v329, %v336
    %v353 = vmul.f32 %v330, %v336
    %v354 = vld [vmem:[#allocation9] sm:$0x1]
    %v356 = vlaneseq
    %v357 = vshrl.u32 %v356, 7
    %v358 = vsub.s32 0, %v357
    %v359 = vrot.slane %v354, %v358
    %v361 = vadd.f32 %v338, %v359
    %v362 = vadd.f32 %v339, %v359
    %v363 = vadd.f32 %v340, %v359
    %v364 = vadd.f32 %v341, %v359
    %v365 = vadd.f32 %v342, %v359
    %v366 = vadd.f32 %v343, %v359
    %v367 = vadd.f32 %v344, %v359
    %v368 = vadd.f32 %v345, %v359
    %v369 = vadd.f32 %v346, %v359
    %v370 = vadd.f32 %v347, %v359
    %v371 = vadd.f32 %v348, %v359
    %v372 = vadd.f32 %v349, %v359
    %v373 = vadd.f32 %v350, %v359
    %v374 = vadd.f32 %v351, %v359
    %v375 = vadd.f32 %v352, %v359
    %v376 = vadd.f32 %v353, %v359
    %v377 = vpack.c.bf16 %v362, %v361
    %v378 = vpack.c.bf16 %v364, %v363
    %v379 = vpack.c.bf16 %v366, %v365
    %v380 = vpack.c.bf16 %v368, %v367
    %v381 = vpack.c.bf16 %v370, %v369
    %v382 = vpack.c.bf16 %v372, %v371
    %v383 = vpack.c.bf16 %v374, %v373
    %v384 = vpack.c.bf16 %v376, %v375
    %v385 = vld [vmem:[#allocation2] sm:$0xff]
    %v386 = vld [vmem:[#allocation2 + $0x8] sm:$0xff]
    %v387 = vld [vmem:[#allocation2 + $0x10] sm:$0xff]
    %v388 = vld [vmem:[#allocation2 + $0x18] sm:$0xff]
    %v389 = vld [vmem:[#allocation2 + $0x20] sm:$0xff]
    %v390 = vld [vmem:[#allocation2 + $0x28] sm:$0xff]
    %v391 = vld [vmem:[#allocation2 + $0x30] sm:$0xff]
    %v392 = vld [vmem:[#allocation2 + $0x38] sm:$0xff]
    %v393 = vld [vmem:[#allocation2 + $0x40] sm:$0xff]
    %v394 = vld [vmem:[#allocation2 + $0x48] sm:$0xff]
    %v395 = vld [vmem:[#allocation2 + $0x50] sm:$0xff]
    %v396 = vld [vmem:[#allocation2 + $0x58] sm:$0xff]
    %v397 = vld [vmem:[#allocation2 + $0x60] sm:$0xff]
    %v398 = vld [vmem:[#allocation2 + $0x68] sm:$0xff]
    %v399 = vld [vmem:[#allocation2 + $0x70] sm:$0xff]
    %v400 = vld [vmem:[#allocation2 + $0x78] sm:$0xff]
    %v401 = vld [vmem:[#allocation6] sm:$0xff]
    %v402 = vld [vmem:[#allocation6 + $0x8] sm:$0xff]
    %v403 = vld [vmem:[#allocation6 + $0x10] sm:$0xff]
    %v404 = vld [vmem:[#allocation6 + $0x18] sm:$0xff]
    %v405 = vpack.c.bf16 %v402, %v401
    %v406 = vpack.c.bf16 %v404, %v403
    %v408 = vsel %vm121, %v377, 0
    %v411 = vsel %vm121, %v378, 0
    %v414 = vsel %vm121, %v379, 0
    %v417 = vsel %vm121, %v380, 0
    %v420 = vsel %vm121, %v381, 0
    %v423 = vsel %vm121, %v382, 0
    %v426 = vsel %vm121, %v383, 0
    %v429 = vsel %vm121, %v384, 0
    %431 = vmatprep.subr.bf16.mxu0 0
    %432 = vmatpush1.bf16.msra.mxu0 %v405
    %433 = vmatprep.subr.bf16.mxu0 0
    %434 = vmatpush1.bf16.msra.mxu0 %v406
    %435 = vmatprep.subr.bf16.mxu0 0
    %436 = vmatpush1.bf16.msra.mxu0 0
    %437 = vmatprep.subr.bf16.mxu0 0
    %438 = vmatpush1.bf16.msra.mxu0 0
    %439 = vmatprep.subr.bf16.mxu0 0
    %440 = vmatpush1.bf16.msra.mxu0 0
    %441 = vmatprep.subr.bf16.mxu0 0
    %442 = vmatpush1.bf16.msra.mxu0 0
    %443 = vmatprep.subr.bf16.mxu0 0
    %444 = vmatpush1.bf16.msra.mxu0 0
    %445 = vmatprep.subr.bf16.mxu0 0
    %446 = vmatpush1.bf16.msra.mxu0 0
    %447 = vmatprep.subr.bf16.mxu0 0
    %448 = vmatpush1.bf16.msra.mxu0 0
    %449 = vmatprep.subr.bf16.mxu0 0
    %450 = vmatpush1.bf16.msra.mxu0 0
    %451 = vmatprep.subr.bf16.mxu0 0
    %452 = vmatpush1.bf16.msra.mxu0 0
    %453 = vmatprep.subr.bf16.mxu0 0
    %454 = vmatpush1.bf16.msra.mxu0 0
    %455 = vmatprep.subr.bf16.mxu0 0
    %456 = vmatpush1.bf16.msra.mxu0 0
    %457 = vmatprep.subr.bf16.mxu0 0
    %458 = vmatpush1.bf16.msra.mxu0 0
    %459 = vmatprep.subr.bf16.mxu0 0
    %460 = vmatpush1.bf16.msra.mxu0 0
    %461 = vmatprep.subr.bf16.mxu0 0
    %462 = vmatpush1.bf16.msra.mxu0 0
    %463 = vmatprep.mubr.bf16.mxu0 0
    %464 = vmatmul.mubr.bf16.gmra.mrb[0].mxu0 %v408
    %v465 = vpop.f32.mrb[0].mxu0
    %v466 = vadd.f32 0.0, %v465
    %v467 = vpop.f32.mrb[0].mxu0
    %v468 = vpop.f32.mrb[0].mxu0
    %v469 = vadd.f32 0.0, %v468
    %v470 = vpop.f32.mrb[0].mxu0
    %471 = vmatprep.mubr.bf16.mxu0 0
    %472 = vmatmul.mubr.bf16.gmra.mrb[0].mxu0 %v411
    %v473 = vpop.f32.mrb[0].mxu0
    %v474 = vadd.f32 0.0, %v473
    %v475 = vpop.f32.mrb[0].mxu0
    %v476 = vpop.f32.mrb[0].mxu0
    %v477 = vadd.f32 0.0, %v476
    %v478 = vpop.f32.mrb[0].mxu0
    %479 = vmatprep.mubr.bf16.mxu0 0
    %480 = vmatmul.mubr.bf16.gmra.mrb[0].mxu0 %v414
    %v481 = vpop.f32.mrb[0].mxu0
    %v482 = vadd.f32 0.0, %v481
    %v483 = vpop.f32.mrb[0].mxu0
    %v484 = vpop.f32.mrb[0].mxu0
    %v485 = vadd.f32 0.0, %v484
    %v486 = vpop.f32.mrb[0].mxu0
    %487 = vmatprep.mubr.bf16.mxu0 0
    %488 = vmatmul.mubr.bf16.gmra.mrb[0].mxu0 %v417
    %v489 = vpop.f32.mrb[0].mxu0
    %v490 = vadd.f32 0.0, %v489
    %v491 = vpop.f32.mrb[0].mxu0
    %v492 = vpop.f32.mrb[0].mxu0
    %v493 = vadd.f32 0.0, %v492
    %v494 = vpop.f32.mrb[0].mxu0
    %495 = vmatprep.mubr.bf16.mxu0 0
    %496 = vmatmul.mubr.bf16.gmra.mrb[0].mxu0 %v420
    %v497 = vpop.f32.mrb[0].mxu0
    %v498 = vadd.f32 0.0, %v497
    %v499 = vpop.f32.mrb[0].mxu0
    %v500 = vpop.f32.mrb[0].mxu0
    %v501 = vadd.f32 0.0, %v500
    %v502 = vpop.f32.mrb[0].mxu0
    %503 = vmatprep.mubr.bf16.mxu0 0
    %504 = vmatmul.mubr.bf16.gmra.mrb[0].mxu0 %v423
    %v505 = vpop.f32.mrb[0].mxu0
    %v506 = vadd.f32 0.0, %v505
    %v507 = vpop.f32.mrb[0].mxu0
    %v508 = vpop.f32.mrb[0].mxu0
    %v509 = vadd.f32 0.0, %v508
    %v510 = vpop.f32.mrb[0].mxu0
    %511 = vmatprep.mubr.bf16.mxu0 0
    %512 = vmatmul.mubr.bf16.gmra.mrb[0].mxu0 %v426
    %v513 = vpop.f32.mrb[0].mxu0
    %v514 = vadd.f32 0.0, %v513
    %v515 = vpop.f32.mrb[0].mxu0
    %v516 = vpop.f32.mrb[0].mxu0
    %v517 = vadd.f32 0.0, %v516
    %v518 = vpop.f32.mrb[0].mxu0
    %519 = vmatprep.mubr.bf16.mxu0 0
    %520 = vmatmul.mubr.bf16.gmra.mrb[0].mxu0 %v429
    %v521 = vpop.f32.mrb[0].mxu0
    %v522 = vadd.f32 0.0, %v521
    %v523 = vpop.f32.mrb[0].mxu0
    %v524 = vpop.f32.mrb[0].mxu0
    %v525 = vadd.f32 0.0, %v524
    %v526 = vpop.f32.mrb[0].mxu0
    %527 = vdwg.mxu0
    %v528 = vadd.f32 %v385, %v466
    %v529 = vadd.f32 %v386, %v469
    %v530 = vadd.f32 %v387, %v474
    %v531 = vadd.f32 %v388, %v477
    %v532 = vadd.f32 %v389, %v482
    %v533 = vadd.f32 %v390, %v485
    %v534 = vadd.f32 %v391, %v490
    %v535 = vadd.f32 %v392, %v493
    %v536 = vadd.f32 %v393, %v498
    %v537 = vadd.f32 %v394, %v501
    %v538 = vadd.f32 %v395, %v506
    %v539 = vadd.f32 %v396, %v509
    %v540 = vadd.f32 %v397, %v514
    %v541 = vadd.f32 %v398, %v517
    %v542 = vadd.f32 %v399, %v522
    %v543 = vadd.f32 %v400, %v525
    %vm544 = vcmask 523264
    %545 = vst.msk [vmem:[#allocation2] sm:$0xff] %vm544, %v528
    %546 = vst.msk [vmem:[#allocation2 + $0x8] sm:$0xff] %vm544, %v529
    %547 = vst.msk [vmem:[#allocation2 + $0x10] sm:$0xff] %vm544, %v530
    %548 = vst.msk [vmem:[#allocation2 + $0x18] sm:$0xff] %vm544, %v531
    %549 = vst.msk [vmem:[#allocation2 + $0x20] sm:$0xff] %vm544, %v532
    %550 = vst.msk [vmem:[#allocation2 + $0x28] sm:$0xff] %vm544, %v533
    %551 = vst.msk [vmem:[#allocation2 + $0x30] sm:$0xff] %vm544, %v534
    %552 = vst.msk [vmem:[#allocation2 + $0x38] sm:$0xff] %vm544, %v535
    %553 = vst.msk [vmem:[#allocation2 + $0x40] sm:$0xff] %vm544, %v536
    %554 = vst.msk [vmem:[#allocation2 + $0x48] sm:$0xff] %vm544, %v537
    %555 = vst.msk [vmem:[#allocation2 + $0x50] sm:$0xff] %vm544, %v538
    %556 = vst.msk [vmem:[#allocation2 + $0x58] sm:$0xff] %vm544, %v539
    %557 = vst.msk [vmem:[#allocation2 + $0x60] sm:$0xff] %vm544, %v540
    %558 = vst.msk [vmem:[#allocation2 + $0x68] sm:$0xff] %vm544, %v541
    %559 = vst.msk [vmem:[#allocation2 + $0x70] sm:$0xff] %vm544, %v542
    %560 = vst.msk [vmem:[#allocation2 + $0x78] sm:$0xff] %vm544, %v543
    // Predicated region
    $region46: #{_lambda_.15} parent=1 // pred_check
      %p561 = pneg %p84
    $region47: #{_lambda_.15} parent=1 // pred_check_branch
      %563 = sbr.rel (%p561) target = $region49
    $region48: #{_lambda_.15} parent=1 // pred_region
      %v564 = vld [vmem:[#allocation2] sm:$0xff]
      %v565 = vld [vmem:[#allocation2 + $0x8] sm:$0xff]
      %v566 = vld [vmem:[#allocation2 + $0x10] sm:$0xff]
      %v567 = vld [vmem:[#allocation2 + $0x18] sm:$0xff]
      %v568 = vld [vmem:[#allocation2 + $0x20] sm:$0xff]
      %v569 = vld [vmem:[#allocation2 + $0x28] sm:$0xff]
      %v570 = vld [vmem:[#allocation2 + $0x30] sm:$0xff]
      %v571 = vld [vmem:[#allocation2 + $0x38] sm:$0xff]
      %v572 = vld [vmem:[#allocation2 + $0x40] sm:$0xff]
      %v573 = vld [vmem:[#allocation2 + $0x48] sm:$0xff]
      %v574 = vld [vmem:[#allocation2 + $0x50] sm:$0xff]
      %v575 = vld [vmem:[#allocation2 + $0x58] sm:$0xff]
      %v576 = vld [vmem:[#allocation2 + $0x60] sm:$0xff]
      %v577 = vld [vmem:[#allocation2 + $0x68] sm:$0xff]
      %v578 = vld [vmem:[#allocation2 + $0x70] sm:$0xff]
      %v579 = vld [vmem:[#allocation2 + $0x78] sm:$0xff]
      %v580 = vld [vmem:[#allocation11] sm:$0x1]
      %v582 = vlaneseq
      %v583 = vshrl.u32 %v582, 7
      %v584 = vsub.s32 0, %v583
      %v585 = vrot.slane %v580, %v584
      %v587 = vadd.f32 %v564, %v585
      %v588 = vadd.f32 %v565, %v585
      %v589 = vadd.f32 %v566, %v585
      %v590 = vadd.f32 %v567, %v585
      %v591 = vadd.f32 %v568, %v585
      %v592 = vadd.f32 %v569, %v585
      %v593 = vadd.f32 %v570, %v585
      %v594 = vadd.f32 %v571, %v585
      %v595 = vadd.f32 %v572, %v585
      %v596 = vadd.f32 %v573, %v585
      %v597 = vadd.f32 %v574, %v585
      %v598 = vadd.f32 %v575, %v585
      %v599 = vadd.f32 %v576, %v585
      %v600 = vadd.f32 %v577, %v585
      %v601 = vadd.f32 %v578, %v585
      %v602 = vadd.f32 %v579, %v585
      %v603 = vmul.f32 %v587, 0.5
      %v604 = vmul.f32 %v588, 0.5
      %v605 = vmul.f32 %v589, 0.5
      %v606 = vmul.f32 %v590, 0.5
      %v607 = vmul.f32 %v591, 0.5
      %v608 = vmul.f32 %v592, 0.5
      %v609 = vmul.f32 %v593, 0.5
      %v610 = vmul.f32 %v594, 0.5
      %v611 = vmul.f32 %v595, 0.5
      %v612 = vmul.f32 %v596, 0.5
      %v613 = vmul.f32 %v597, 0.5
      %v614 = vmul.f32 %v598, 0.5
      %v615 = vmul.f32 %v599, 0.5
      %v616 = vmul.f32 %v600, 0.5
      %v617 = vmul.f32 %v601, 0.5
      %v618 = vmul.f32 %v602, 0.5
      %v619 = vmul.f32 %v587, 0.044715
      %v620 = vmul.f32 %v588, 0.044715
      %v621 = vmul.f32 %v589, 0.044715
      %v622 = vmul.f32 %v590, 0.044715
      %v623 = vmul.f32 %v591, 0.044715
      %v624 = vmul.f32 %v592, 0.044715
      %v625 = vmul.f32 %v593, 0.044715
      %v626 = vmul.f32 %v594, 0.044715
      %v627 = vmul.f32 %v595, 0.044715
      %v628 = vmul.f32 %v596, 0.044715
      %v629 = vmul.f32 %v597, 0.044715
      %v630 = vmul.f32 %v598, 0.044715
      %v631 = vmul.f32 %v599, 0.044715
      %v632 = vmul.f32 %v600, 0.044715
      %v633 = vmul.f32 %v601, 0.044715
      %v634 = vmul.f32 %v602, 0.044715
      %v635 = vmul.f32 %v619, %v587
      %v636 = vmul.f32 %v620, %v588
      %v637 = vmul.f32 %v621, %v589
      %v638 = vmul.f32 %v622, %v590
      %v639 = vmul.f32 %v623, %v591
      %v640 = vmul.f32 %v624, %v592
      %v641 = vmul.f32 %v625, %v593
      %v642 = vmul.f32 %v626, %v594
      %v643 = vmul.f32 %v627, %v595
      %v644 = vmul.f32 %v628, %v596
      %v645 = vmul.f32 %v629, %v597
      %v646 = vmul.f32 %v630, %v598
      %v647 = vmul.f32 %v631, %v599
      %v648 = vmul.f32 %v632, %v600
      %v649 = vmul.f32 %v633, %v601
      %v650 = vmul.f32 %v634, %v602
      %v651 = vmul.f32 %v635, %v587
      %v652 = vmul.f32 %v636, %v588
      %v653 = vmul.f32 %v637, %v589
      %v654 = vmul.f32 %v638, %v590
      %v655 = vmul.f32 %v639, %v591
      %v656 = vmul.f32 %v640, %v592
      %v657 = vmul.f32 %v641, %v593
      %v658 = vmul.f32 %v642, %v594
      %v659 = vmul.f32 %v643, %v595
      %v660 = vmul.f32 %v644, %v596
      %v661 = vmul.f32 %v645, %v597
      %v662 = vmul.f32 %v646, %v598
      %v663 = vmul.f32 %v647, %v599
      %v664 = vmul.f32 %v648, %v600
      %v665 = vmul.f32 %v649, %v601
      %v666 = vmul.f32 %v650, %v602
      %v667 = vadd.f32 %v587, %v651
      %v668 = vadd.f32 %v588, %v652
      %v669 = vadd.f32 %v589, %v653
      %v670 = vadd.f32 %v590, %v654
      %v671 = vadd.f32 %v591, %v655
      %v672 = vadd.f32 %v592, %v656
      %v673 = vadd.f32 %v593, %v657
      %v674 = vadd.f32 %v594, %v658
      %v675 = vadd.f32 %v595, %v659
      %v676 = vadd.f32 %v596, %v660
      %v677 = vadd.f32 %v597, %v661
      %v678 = vadd.f32 %v598, %v662
      %v679 = vadd.f32 %v599, %v663
      %v680 = vadd.f32 %v600, %v664
      %v681 = vadd.f32 %v601, %v665
      %v682 = vadd.f32 %v602, %v666
      %v683 = vmul.f32 %v667, 0.7978846
      %v684 = vmul.f32 %v668, 0.7978846
      %v685 = vmul.f32 %v669, 0.7978846
      %v686 = vmul.f32 %v670, 0.7978846
      %v687 = vmul.f32 %v671, 0.7978846
      %v688 = vmul.f32 %v672, 0.7978846
      %v689 = vmul.f32 %v673, 0.7978846
      %v690 = vmul.f32 %v674, 0.7978846
      %v691 = vmul.f32 %v675, 0.7978846
      %v692 = vmul.f32 %v676, 0.7978846
      %v693 = vmul.f32 %v677, 0.7978846
      %v694 = vmul.f32 %v678, 0.7978846
      %v695 = vmul.f32 %v679, 0.7978846
      %v696 = vmul.f32 %v680, 0.7978846
      %v697 = vmul.f32 %v681, 0.7978846
      %v698 = vmul.f32 %v682, 0.7978846
      %v699 = vtanh.pop %v683
      %v700 = vtanh.pop %v684
      %v701 = vtanh.pop %v685
      %v702 = vtanh.pop %v686
      %v703 = vtanh.pop %v687
      %v704 = vtanh.pop %v688
      %v705 = vtanh.pop %v689
      %v706 = vtanh.pop %v690
      %v707 = vtanh.pop %v691
      %v708 = vtanh.pop %v692
      %v709 = vtanh.pop %v693
      %v710 = vtanh.pop %v694
      %v711 = vtanh.pop %v695
      %v712 = vtanh.pop %v696
      %v713 = vtanh.pop %v697
      %v714 = vtanh.pop %v698
      %v715 = vadd.f32 %v699, 1.0
      %v716 = vadd.f32 %v700, 1.0
      %v717 = vadd.f32 %v701, 1.0
      %v718 = vadd.f32 %v702, 1.0
      %v719 = vadd.f32 %v703, 1.0
      %v720 = vadd.f32 %v704, 1.0
      %v721 = vadd.f32 %v705, 1.0
      %v722 = vadd.f32 %v706, 1.0
      %v723 = vadd.f32 %v707, 1.0
      %v724 = vadd.f32 %v708, 1.0
      %v725 = vadd.f32 %v709, 1.0
      %v726 = vadd.f32 %v710, 1.0
      %v727 = vadd.f32 %v711, 1.0
      %v728 = vadd.f32 %v712, 1.0
      %v729 = vadd.f32 %v713, 1.0
      %v730 = vadd.f32 %v714, 1.0
      %v731 = vmul.f32 %v603, %v715
      %v732 = vmul.f32 %v604, %v716
      %v733 = vmul.f32 %v605, %v717
      %v734 = vmul.f32 %v606, %v718
      %v735 = vmul.f32 %v607, %v719
      %v736 = vmul.f32 %v608, %v720
      %v737 = vmul.f32 %v609, %v721
      %v738 = vmul.f32 %v610, %v722
      %v739 = vmul.f32 %v611, %v723
      %v740 = vmul.f32 %v612, %v724
      %v741 = vmul.f32 %v613, %v725
      %v742 = vmul.f32 %v614, %v726
      %v743 = vmul.f32 %v615, %v727
      %v744 = vmul.f32 %v616, %v728
      %v745 = vmul.f32 %v617, %v729
      %v746 = vmul.f32 %v618, %v730
      %747 = vst.msk [vmem:[#allocation12] sm:$0xff] %vm544, %v731
      %748 = vst.msk [vmem:[#allocation12 + $0x8] sm:$0xff] %vm544, %v732
      %749 = vst.msk [vmem:[#allocation12 + $0x10] sm:$0xff] %vm544, %v733
      %750 = vst.msk [vmem:[#allocation12 + $0x18] sm:$0xff] %vm544, %v734
      %751 = vst.msk [vmem:[#allocation12 + $0x20] sm:$0xff] %vm544, %v735
      %752 = vst.msk [vmem:[#allocation12 + $0x28] sm:$0xff] %vm544, %v736
      %753 = vst.msk [vmem:[#allocation12 + $0x30] sm:$0xff] %vm544, %v737
      %754 = vst.msk [vmem:[#allocation12 + $0x38] sm:$0xff] %vm544, %v738
      %755 = vst.msk [vmem:[#allocation12 + $0x40] sm:$0xff] %vm544, %v739
      %756 = vst.msk [vmem:[#allocation12 + $0x48] sm:$0xff] %vm544, %v740
      %757 = vst.msk [vmem:[#allocation12 + $0x50] sm:$0xff] %vm544, %v741
      %758 = vst.msk [vmem:[#allocation12 + $0x58] sm:$0xff] %vm544, %v742
      %759 = vst.msk [vmem:[#allocation12 + $0x60] sm:$0xff] %vm544, %v743
      %760 = vst.msk [vmem:[#allocation12 + $0x68] sm:$0xff] %vm544, %v744
      %761 = vst.msk [vmem:[#allocation12 + $0x70] sm:$0xff] %vm544, %v745
      %762 = vst.msk [vmem:[#allocation12 + $0x78] sm:$0xff] %vm544, %v746
    $region49: #{_lambda_.15} parent=1 // pred_fallthru
      _
    // Predicated region
    $region50: #{_lambda_.15} parent=1 // pred_check
      _
    $region51: #{_lambda_.15} parent=1 // pred_check_branch
      %764 = sbr.rel (0) target = $region53
    $region52: #{_lambda_.15} parent=1 // pred_region
      %s766 = ssub.s32 2048, 2048
      %767 = vsyncadd [#allocation5], %s766
      %s768 = sshll.u32 [#allocation12], 4
      %s769 = int_to_ptr.vmem [resolvable:$true] %s768
      %774 = dma.vmem_to_hbm [thread:$0]  %s769, 2048, %s5, [#allocation5], 128, 128, 8
    $region53: #{_lambda_.15} parent=1 // pred_fallthru
      _
    // Predicated region
    $region54: #{_lambda_.15} parent=1 // pred_check
      _
    $region55: #{_lambda_.15} parent=1 // pred_check_branch
      %776 = sbr.rel (0) target = $region57
    $region56: #{_lambda_.15} parent=1 // pred_region
      %777 = dma.done [#allocation5], 2048
    $region57: #{_lambda_.15} parent=1 // pred_fallthru
      _
    %778 = vsyncpa [#allocation4], 1
    %779 = vsyncpa [#allocation7], 1
    %780 = vsyncpa [#allocation10], 1
    %781 = vsyncpa [#allocation5], 1

// kernel: _lambda_.16
$region0: #{_lambda_.16}
  #allocation0 [shape = 'u32[]', space=smem, size = 0x4, offset = 0x4, fixed_abs, tag = 'smem constant byte address 0x4 - core index']
  #allocation1 [shape = 'u32[144,128]{1,0:T(1,128)}', space=vmem, size = 0x12000, scoped, tag = 'internal scratch']
  #allocation2 [shape = 'f32[128,32]{1,0:T(8,128)}', space=vmem, size = 0x10000, scoped, tag = 'scratch operand']
  %s0 = inlined_call_operand.hbm [shape: f32[128,64], index: 0, kind: input, shape index: {}]
  %s1 = inlined_call_operand.hbm [shape: f32[64,32], index: 1, kind: input, shape index: {}]
  %s2 = inlined_call_operand.hbm [shape: f32[1,32], index: 2, kind: input, shape index: {}]
  %s3 = inlined_call_operand.hbm [shape: f32[128,32], index: 3, kind: input, shape index: {}]
  %s4 = inlined_call_operand.hbm [shape: f32[128,32], index: 4, kind: output, shape index: {}]
  %s5 = sld [smem:[#allocation0]]
  $region50: #{_lambda_.16} parent=0
    _
  %s7 = ssub.s32 1, %s5
  %s8 = scalar_select 0, %s7, %s5
  $region1: #{_lambda_.16} parent=0
    #allocation3 [shape = 'u8[65536]{0}', space=vmem, size = 0x10000, scoped, tag = 'input window, operand 0, single buffered']
    #allocation4 [shape = 's32[1]{0}', space=sflag, size = 0x4, scoped, tag = 'scoped memory for _lambda_.16']
    #allocation5 [shape = 's32[1]{0}', space=sflag, size = 0x4, scoped, tag = 'scoped memory for _lambda_.16']
    #allocation6 [shape = 'u8[32768]{0}', space=vmem, size = 0x8000, scoped, tag = 'input window, operand 1, single buffered']
    #allocation7 [shape = 's32[1]{0}', space=sflag, size = 0x4, scoped, tag = 'scoped memory for _lambda_.16']
    #allocation8 [shape = 'u8[512]{0}', space=vmem, size = 0x400, scoped, tag = 'input window, operand 2, single buffered']
    #allocation9 [shape = 'u8[65536]{0}', space=vmem, size = 0x10000, scoped, tag = 'input window, operand 3, single buffered']
    #allocation10 [shape = 's32[1]{0}', space=sflag, size = 0x4, scoped, tag = 'scoped memory for _lambda_.16']
    #allocation11 [shape = 'u8[65536]{0}', space=vmem, size = 0x10000, scoped, tag = 'output window, operand 0, single buffered']
    %9 = vsyncpa [#allocation4], 0
    %10 = vsyncpa [#allocation7], 0
    %11 = vsyncpa [#allocation10], 0
    %12 = vsyncpa [#allocation5], 0
    // Predicated region
    $region2: #{_lambda_.16} parent=1 // pred_check
      _
    $region3: #{_lambda_.16} parent=1 // pred_check_branch
      %14 = sbr.rel (0) target = $region5
    $region4: #{_lambda_.16} parent=1 // pred_region
      %s16 = ssub.s32 2048, 2048
      %17 = vsyncadd [#allocation4], %s16
      %s18 = sshll.u32 [#allocation3], 4
      %s19 = int_to_ptr.vmem [resolvable:$true] %s18
      %24 = dma.hbm_to_vmem [thread:$0]  %s0, 2048, %s19, [#allocation4], 128, 128, 8
    $region5: #{_lambda_.16} parent=1 // pred_fallthru
      _
    // Predicated region
    $region6: #{_lambda_.16} parent=1 // pred_check
      _
    $region7: #{_lambda_.16} parent=1 // pred_check_branch
      %26 = sbr.rel (0) target = $region9
    $region8: #{_lambda_.16} parent=1 // pred_region
      %s28 = ssub.s32 1024, 1024
      %29 = vsyncadd [#allocation7], %s28
      %s30 = sshll.u32 [#allocation6], 4
      %s31 = int_to_ptr.vmem [resolvable:$true] %s30
      %36 = dma.hbm_to_vmem [thread:$0]  %s1, 1024, %s31, [#allocation7], 128, 128, 8
    $region9: #{_lambda_.16} parent=1 // pred_fallthru
      _
    // Predicated region
    $region10: #{_lambda_.16} parent=1 // pred_check
      _
    $region11: #{_lambda_.16} parent=1 // pred_check_branch
      %38 = sbr.rel (0) target = $region13
    $region12: #{_lambda_.16} parent=1 // pred_region
      %s40 = ssub.s32 16, 16
      %41 = vsyncadd [#allocation7], %s40
      %s43 = sshll.u32 [#allocation8], 4
      %s44 = int_to_ptr.vmem [resolvable:$true] %s43
      %46 = dma.hbm_to_vmem [thread:$0]  %s2, 16, %s44, [#allocation7]
    $region13: #{_lambda_.16} parent=1 // pred_fallthru
      _
    // Predicated region
    $region14: #{_lambda_.16} parent=1 // pred_check
      _
    $region15: #{_lambda_.16} parent=1 // pred_check_branch
      %48 = sbr.rel (0) target = $region17
    $region16: #{_lambda_.16} parent=1 // pred_region
      %s50 = ssub.s32 2048, 2048
      %51 = vsyncadd [#allocation10], %s50
      %s52 = sshll.u32 [#allocation9], 4
      %s53 = int_to_ptr.vmem [resolvable:$true] %s52
      %58 = dma.hbm_to_vmem [thread:$0]  %s3, 2048, %s53, [#allocation10], 128, 128, 8
    $region17: #{_lambda_.16} parent=1 // pred_fallthru
      _
    // Predicated region
    $region18: #{_lambda_.16} parent=1 // pred_check
      _
    $region19: #{_lambda_.16} parent=1 // pred_check_branch
      %60 = sbr.rel (0) target = $region21
    $region20: #{_lambda_.16} parent=1 // pred_region
      %61 = dma.done [#allocation4], 2048
    $region21: #{_lambda_.16} parent=1 // pred_fallthru
      _
    // Predicated region
    $region22: #{_lambda_.16} parent=1 // pred_check
      _
    $region23: #{_lambda_.16} parent=1 // pred_check_branch
      %63 = sbr.rel (0) target = $region25
    $region24: #{_lambda_.16} parent=1 // pred_region
      %64 = dma.done [#allocation7], 1024
    $region25: #{_lambda_.16} parent=1 // pred_fallthru
      _
    // Predicated region
    $region26: #{_lambda_.16} parent=1 // pred_check
      _
    $region27: #{_lambda_.16} parent=1 // pred_check_branch
      %66 = sbr.rel (0) target = $region29
    $region28: #{_lambda_.16} parent=1 // pred_region
      %67 = dma.done [#allocation7], 16
    $region29: #{_lambda_.16} parent=1 // pred_fallthru
      _
    // Predicated region
    $region30: #{_lambda_.16} parent=1 // pred_check
      _
    $region31: #{_lambda_.16} parent=1 // pred_check_branch
      %69 = sbr.rel (0) target = $region33
    $region32: #{_lambda_.16} parent=1 // pred_region
      %70 = dma.done [#allocation10], 2048
    $region33: #{_lambda_.16} parent=1 // pred_fallthru
      _
    %p72 = scmp.eq.s32.totalorder 0, 0
    // Predicated region
    $region34: #{_lambda_.16} parent=1 // pred_check
      %p73 = pneg %p72
    $region35: #{_lambda_.16} parent=1 // pred_check_branch
      %75 = sbr.rel (%p73) target = $region37
    $region36: #{_lambda_.16} parent=1 // pred_region
      %vm76 = vcmask 261120
      %77 = vst.msk [vmem:[#allocation2] sm:$0xff] %vm76, 0.0
      %78 = vst.msk [vmem:[#allocation2 + $0x8] sm:$0xff] %vm76, 0.0
      %79 = vst.msk [vmem:[#allocation2 + $0x10] sm:$0xff] %vm76, 0.0
      %80 = vst.msk [vmem:[#allocation2 + $0x18] sm:$0xff] %vm76, 0.0
      %81 = vst.msk [vmem:[#allocation2 + $0x20] sm:$0xff] %vm76, 0.0
      %82 = vst.msk [vmem:[#allocation2 + $0x28] sm:$0xff] %vm76, 0.0
      %83 = vst.msk [vmem:[#allocation2 + $0x30] sm:$0xff] %vm76, 0.0
      %84 = vst.msk [vmem:[#allocation2 + $0x38] sm:$0xff] %vm76, 0.0
      %85 = vst.msk [vmem:[#allocation2 + $0x40] sm:$0xff] %vm76, 0.0
      %86 = vst.msk [vmem:[#allocation2 + $0x48] sm:$0xff] %vm76, 0.0
      %87 = vst.msk [vmem:[#allocation2 + $0x50] sm:$0xff] %vm76, 0.0
      %88 = vst.msk [vmem:[#allocation2 + $0x58] sm:$0xff] %vm76, 0.0
      %89 = vst.msk [vmem:[#allocation2 + $0x60] sm:$0xff] %vm76, 0.0
      %90 = vst.msk [vmem:[#allocation2 + $0x68] sm:$0xff] %vm76, 0.0
      %91 = vst.msk [vmem:[#allocation2 + $0x70] sm:$0xff] %vm76, 0.0
      %92 = vst.msk [vmem:[#allocation2 + $0x78] sm:$0xff] %vm76, 0.0
    $region37: #{_lambda_.16} parent=1 // pred_fallthru
      _
    %v93 = vld [vmem:[#allocation3] sm:$0xff]
    %v94 = vld [vmem:[#allocation3 + $0x8] sm:$0xff]
    %v95 = vld [vmem:[#allocation3 + $0x10] sm:$0xff]
    %v96 = vld [vmem:[#allocation3 + $0x18] sm:$0xff]
    %v97 = vld [vmem:[#allocation3 + $0x20] sm:$0xff]
    %v98 = vld [vmem:[#allocation3 + $0x28] sm:$0xff]
    %v99 = vld [vmem:[#allocation3 + $0x30] sm:$0xff]
    %v100 = vld [vmem:[#allocation3 + $0x38] sm:$0xff]
    %v101 = vld [vmem:[#allocation3 + $0x40] sm:$0xff]
    %v102 = vld [vmem:[#allocation3 + $0x48] sm:$0xff]
    %v103 = vld [vmem:[#allocation3 + $0x50] sm:$0xff]
    %v104 = vld [vmem:[#allocation3 + $0x58] sm:$0xff]
    %v105 = vld [vmem:[#allocation3 + $0x60] sm:$0xff]
    %v106 = vld [vmem:[#allocation3 + $0x68] sm:$0xff]
    %v107 = vld [vmem:[#allocation3 + $0x70] sm:$0xff]
    %v108 = vld [vmem:[#allocation3 + $0x78] sm:$0xff]
    %v109 = vpack.c.bf16 %v94, %v93
    %v110 = vpack.c.bf16 %v96, %v95
    %v111 = vpack.c.bf16 %v98, %v97
    %v112 = vpack.c.bf16 %v100, %v99
    %v113 = vpack.c.bf16 %v102, %v101
    %v114 = vpack.c.bf16 %v104, %v103
    %v115 = vpack.c.bf16 %v106, %v105
    %v116 = vpack.c.bf16 %v108, %v107
    %v117 = vld [vmem:[#allocation2] sm:$0xff]
    %v118 = vld [vmem:[#allocation2 + $0x8] sm:$0xff]
    %v119 = vld [vmem:[#allocation2 + $0x10] sm:$0xff]
    %v120 = vld [vmem:[#allocation2 + $0x18] sm:$0xff]
    %v121 = vld [vmem:[#allocation2 + $0x20] sm:$0xff]
    %v122 = vld [vmem:[#allocation2 + $0x28] sm:$0xff]
    %v123 = vld [vmem:[#allocation2 + $0x30] sm:$0xff]
    %v124 = vld [vmem:[#allocation2 + $0x38] sm:$0xff]
    %v125 = vld [vmem:[#allocation2 + $0x40] sm:$0xff]
    %v126 = vld [vmem:[#allocation2 + $0x48] sm:$0xff]
    %v127 = vld [vmem:[#allocation2 + $0x50] sm:$0xff]
    %v128 = vld [vmem:[#allocation2 + $0x58] sm:$0xff]
    %v129 = vld [vmem:[#allocation2 + $0x60] sm:$0xff]
    %v130 = vld [vmem:[#allocation2 + $0x68] sm:$0xff]
    %v131 = vld [vmem:[#allocation2 + $0x70] sm:$0xff]
    %v132 = vld [vmem:[#allocation2 + $0x78] sm:$0xff]
    %v133 = vld [vmem:[#allocation6] sm:$0xff]
    %v134 = vld [vmem:[#allocation6 + $0x8] sm:$0xff]
    %v135 = vld [vmem:[#allocation6 + $0x10] sm:$0xff]
    %v136 = vld [vmem:[#allocation6 + $0x18] sm:$0xff]
    %v137 = vld [vmem:[#allocation6 + $0x20] sm:$0xff]
    %v138 = vld [vmem:[#allocation6 + $0x28] sm:$0xff]
    %v139 = vld [vmem:[#allocation6 + $0x30] sm:$0xff]
    %v140 = vld [vmem:[#allocation6 + $0x38] sm:$0xff]
    %v141 = vpack.c.bf16 %v134, %v133
    %v142 = vpack.c.bf16 %v136, %v135
    %v143 = vpack.c.bf16 %v138, %v137
    %v144 = vpack.c.bf16 %v140, %v139
    %vm145 = vcmask 523264
    %v147 = vsel %vm145, %v109, 0
    %v150 = vsel %vm145, %v110, 0
    %v153 = vsel %vm145, %v111, 0
    %v156 = vsel %vm145, %v112, 0
    %v159 = vsel %vm145, %v113, 0
    %v162 = vsel %vm145, %v114, 0
    %v165 = vsel %vm145, %v115, 0
    %v168 = vsel %vm145, %v116, 0
    %170 = vmatprep.subr.bf16.mxu0 0
    %171 = vmatpush1.bf16.msra.mxu0 %v141
    %172 = vmatprep.subr.bf16.mxu0 0
    %173 = vmatpush1.bf16.msra.mxu0 %v142
    %174 = vmatprep.subr.bf16.mxu0 0
    %175 = vmatpush1.bf16.msra.mxu0 %v143
    %176 = vmatprep.subr.bf16.mxu0 0
    %177 = vmatpush1.bf16.msra.mxu0 %v144
    %178 = vmatprep.subr.bf16.mxu0 0
    %179 = vmatpush1.bf16.msra.mxu0 0
    %180 = vmatprep.subr.bf16.mxu0 0
    %181 = vmatpush1.bf16.msra.mxu0 0
    %182 = vmatprep.subr.bf16.mxu0 0
    %183 = vmatpush1.bf16.msra.mxu0 0
    %184 = vmatprep.subr.bf16.mxu0 0
    %185 = vmatpush1.bf16.msra.mxu0 0
    %186 = vmatprep.subr.bf16.mxu0 0
    %187 = vmatpush1.bf16.msra.mxu0 0
    %188 = vmatprep.subr.bf16.mxu0 0
    %189 = vmatpush1.bf16.msra.mxu0 0
    %190 = vmatprep.subr.bf16.mxu0 0
    %191 = vmatpush1.bf16.msra.mxu0 0
    %192 = vmatprep.subr.bf16.mxu0 0
    %193 = vmatpush1.bf16.msra.mxu0 0
    %194 = vmatprep.subr.bf16.mxu0 0
    %195 = vmatpush1.bf16.msra.mxu0 0
    %196 = vmatprep.subr.bf16.mxu0 0
    %197 = vmatpush1.bf16.msra.mxu0 0
    %198 = vmatprep.subr.bf16.mxu0 0
    %199 = vmatpush1.bf16.msra.mxu0 0
    %200 = vmatprep.subr.bf16.mxu0 0
    %201 = vmatpush1.bf16.msra.mxu0 0
    %202 = vmatprep.mubr.bf16.mxu0 0
    %203 = vmatmul.mubr.bf16.gmra.mrb[0].mxu0 %v147
    %v204 = vpop.f32.mrb[0].mxu0
    %v205 = vadd.f32 0.0, %v204
    %v206 = vpop.f32.mrb[0].mxu0
    %v207 = vpop.f32.mrb[0].mxu0
    %v208 = vadd.f32 0.0, %v207
    %v209 = vpop.f32.mrb[0].mxu0
    %210 = vmatprep.mubr.bf16.mxu0 0
    %211 = vmatmul.mubr.bf16.gmra.mrb[0].mxu0 %v150
    %v212 = vpop.f32.mrb[0].mxu0
    %v213 = vadd.f32 0.0, %v212
    %v214 = vpop.f32.mrb[0].mxu0
    %v215 = vpop.f32.mrb[0].mxu0
    %v216 = vadd.f32 0.0, %v215
    %v217 = vpop.f32.mrb[0].mxu0
    %218 = vmatprep.mubr.bf16.mxu0 0
    %219 = vmatmul.mubr.bf16.gmra.mrb[0].mxu0 %v153
    %v220 = vpop.f32.mrb[0].mxu0
    %v221 = vadd.f32 0.0, %v220
    %v222 = vpop.f32.mrb[0].mxu0
    %v223 = vpop.f32.mrb[0].mxu0
    %v224 = vadd.f32 0.0, %v223
    %v225 = vpop.f32.mrb[0].mxu0
    %226 = vmatprep.mubr.bf16.mxu0 0
    %227 = vmatmul.mubr.bf16.gmra.mrb[0].mxu0 %v156
    %v228 = vpop.f32.mrb[0].mxu0
    %v229 = vadd.f32 0.0, %v228
    %v230 = vpop.f32.mrb[0].mxu0
    %v231 = vpop.f32.mrb[0].mxu0
    %v232 = vadd.f32 0.0, %v231
    %v233 = vpop.f32.mrb[0].mxu0
    %234 = vmatprep.mubr.bf16.mxu0 0
    %235 = vmatmul.mubr.bf16.gmra.mrb[0].mxu0 %v159
    %v236 = vpop.f32.mrb[0].mxu0
    %v237 = vadd.f32 0.0, %v236
    %v238 = vpop.f32.mrb[0].mxu0
    %v239 = vpop.f32.mrb[0].mxu0
    %v240 = vadd.f32 0.0, %v239
    %v241 = vpop.f32.mrb[0].mxu0
    %242 = vmatprep.mubr.bf16.mxu0 0
    %243 = vmatmul.mubr.bf16.gmra.mrb[0].mxu0 %v162
    %v244 = vpop.f32.mrb[0].mxu0
    %v245 = vadd.f32 0.0, %v244
    %v246 = vpop.f32.mrb[0].mxu0
    %v247 = vpop.f32.mrb[0].mxu0
    %v248 = vadd.f32 0.0, %v247
    %v249 = vpop.f32.mrb[0].mxu0
    %250 = vmatprep.mubr.bf16.mxu0 0
    %251 = vmatmul.mubr.bf16.gmra.mrb[0].mxu0 %v165
    %v252 = vpop.f32.mrb[0].mxu0
    %v253 = vadd.f32 0.0, %v252
    %v254 = vpop.f32.mrb[0].mxu0
    %v255 = vpop.f32.mrb[0].mxu0
    %v256 = vadd.f32 0.0, %v255
    %v257 = vpop.f32.mrb[0].mxu0
    %258 = vmatprep.mubr.bf16.mxu0 0
    %259 = vmatmul.mubr.bf16.gmra.mrb[0].mxu0 %v168
    %v260 = vpop.f32.mrb[0].mxu0
    %v261 = vadd.f32 0.0, %v260
    %v262 = vpop.f32.mrb[0].mxu0
    %v263 = vpop.f32.mrb[0].mxu0
    %v264 = vadd.f32 0.0, %v263
    %v265 = vpop.f32.mrb[0].mxu0
    %266 = vdwg.mxu0
    %v267 = vadd.f32 %v117, %v205
    %v268 = vadd.f32 %v118, %v208
    %v269 = vadd.f32 %v119, %v213
    %v270 = vadd.f32 %v120, %v216
    %v271 = vadd.f32 %v121, %v221
    %v272 = vadd.f32 %v122, %v224
    %v273 = vadd.f32 %v123, %v229
    %v274 = vadd.f32 %v124, %v232
    %v275 = vadd.f32 %v125, %v237
    %v276 = vadd.f32 %v126, %v240
    %v277 = vadd.f32 %v127, %v245
    %v278 = vadd.f32 %v128, %v248
    %v279 = vadd.f32 %v129, %v253
    %v280 = vadd.f32 %v130, %v256
    %v281 = vadd.f32 %v131, %v261
    %v282 = vadd.f32 %v132, %v264
    %vm283 = vcmask 261120
    %284 = vst.msk [vmem:[#allocation2] sm:$0xff] %vm283, %v267
    %285 = vst.msk [vmem:[#allocation2 + $0x8] sm:$0xff] %vm283, %v268
    %286 = vst.msk [vmem:[#allocation2 + $0x10] sm:$0xff] %vm283, %v269
    %287 = vst.msk [vmem:[#allocation2 + $0x18] sm:$0xff] %vm283, %v270
    %288 = vst.msk [vmem:[#allocation2 + $0x20] sm:$0xff] %vm283, %v271
    %289 = vst.msk [vmem:[#allocation2 + $0x28] sm:$0xff] %vm283, %v272
    %290 = vst.msk [vmem:[#allocation2 + $0x30] sm:$0xff] %vm283, %v273
    %291 = vst.msk [vmem:[#allocation2 + $0x38] sm:$0xff] %vm283, %v274
    %292 = vst.msk [vmem:[#allocation2 + $0x40] sm:$0xff] %vm283, %v275
    %293 = vst.msk [vmem:[#allocation2 + $0x48] sm:$0xff] %vm283, %v276
    %294 = vst.msk [vmem:[#allocation2 + $0x50] sm:$0xff] %vm283, %v277
    %295 = vst.msk [vmem:[#allocation2 + $0x58] sm:$0xff] %vm283, %v278
    %296 = vst.msk [vmem:[#allocation2 + $0x60] sm:$0xff] %vm283, %v279
    %297 = vst.msk [vmem:[#allocation2 + $0x68] sm:$0xff] %vm283, %v280
    %298 = vst.msk [vmem:[#allocation2 + $0x70] sm:$0xff] %vm283, %v281
    %299 = vst.msk [vmem:[#allocation2 + $0x78] sm:$0xff] %vm283, %v282
    // Predicated region
    $region38: #{_lambda_.16} parent=1 // pred_check
      %p300 = pneg %p72
    $region39: #{_lambda_.16} parent=1 // pred_check_branch
      %302 = sbr.rel (%p300) target = $region41
    $region40: #{_lambda_.16} parent=1 // pred_region
      %v303 = vld [vmem:[#allocation2] sm:$0xff]
      %v304 = vld [vmem:[#allocation2 + $0x8] sm:$0xff]
      %v305 = vld [vmem:[#allocation2 + $0x10] sm:$0xff]
      %v306 = vld [vmem:[#allocation2 + $0x18] sm:$0xff]
      %v307 = vld [vmem:[#allocation2 + $0x20] sm:$0xff]
      %v308 = vld [vmem:[#allocation2 + $0x28] sm:$0xff]
      %v309 = vld [vmem:[#allocation2 + $0x30] sm:$0xff]
      %v310 = vld [vmem:[#allocation2 + $0x38] sm:$0xff]
      %v311 = vld [vmem:[#allocation2 + $0x40] sm:$0xff]
      %v312 = vld [vmem:[#allocation2 + $0x48] sm:$0xff]
      %v313 = vld [vmem:[#allocation2 + $0x50] sm:$0xff]
      %v314 = vld [vmem:[#allocation2 + $0x58] sm:$0xff]
      %v315 = vld [vmem:[#allocation2 + $0x60] sm:$0xff]
      %v316 = vld [vmem:[#allocation2 + $0x68] sm:$0xff]
      %v317 = vld [vmem:[#allocation2 + $0x70] sm:$0xff]
      %v318 = vld [vmem:[#allocation2 + $0x78] sm:$0xff]
      %v319 = vld [vmem:[#allocation8] sm:$0x1]
      %v321 = vlaneseq
      %v322 = vshrl.u32 %v321, 7
      %v323 = vsub.s32 0, %v322
      %v324 = vrot.slane %v319, %v323
      %v326 = vadd.f32 %v303, %v324
      %v327 = vadd.f32 %v304, %v324
      %v328 = vadd.f32 %v305, %v324
      %v329 = vadd.f32 %v306, %v324
      %v330 = vadd.f32 %v307, %v324
      %v331 = vadd.f32 %v308, %v324
      %v332 = vadd.f32 %v309, %v324
      %v333 = vadd.f32 %v310, %v324
      %v334 = vadd.f32 %v311, %v324
      %v335 = vadd.f32 %v312, %v324
      %v336 = vadd.f32 %v313, %v324
      %v337 = vadd.f32 %v314, %v324
      %v338 = vadd.f32 %v315, %v324
      %v339 = vadd.f32 %v316, %v324
      %v340 = vadd.f32 %v317, %v324
      %v341 = vadd.f32 %v318, %v324
      %v342 = vld [vmem:[#allocation9] sm:$0xff]
      %v343 = vld [vmem:[#allocation9 + $0x8] sm:$0xff]
      %v344 = vld [vmem:[#allocation9 + $0x10] sm:$0xff]
      %v345 = vld [vmem:[#allocation9 + $0x18] sm:$0xff]
      %v346 = vld [vmem:[#allocation9 + $0x20] sm:$0xff]
      %v347 = vld [vmem:[#allocation9 + $0x28] sm:$0xff]
      %v348 = vld [vmem:[#allocation9 + $0x30] sm:$0xff]
      %v349 = vld [vmem:[#allocation9 + $0x38] sm:$0xff]
      %v350 = vld [vmem:[#allocation9 + $0x40] sm:$0xff]
      %v351 = vld [vmem:[#allocation9 + $0x48] sm:$0xff]
      %v352 = vld [vmem:[#allocation9 + $0x50] sm:$0xff]
      %v353 = vld [vmem:[#allocation9 + $0x58] sm:$0xff]
      %v354 = vld [vmem:[#allocation9 + $0x60] sm:$0xff]
      %v355 = vld [vmem:[#allocation9 + $0x68] sm:$0xff]
      %v356 = vld [vmem:[#allocation9 + $0x70] sm:$0xff]
      %v357 = vld [vmem:[#allocation9 + $0x78] sm:$0xff]
      %v358 = vadd.f32 %v326, %v342
      %v359 = vadd.f32 %v327, %v343
      %v360 = vadd.f32 %v328, %v344
      %v361 = vadd.f32 %v329, %v345
      %v362 = vadd.f32 %v330, %v346
      %v363 = vadd.f32 %v331, %v347
      %v364 = vadd.f32 %v332, %v348
      %v365 = vadd.f32 %v333, %v349
      %v366 = vadd.f32 %v334, %v350
      %v367 = vadd.f32 %v335, %v351
      %v368 = vadd.f32 %v336, %v352
      %v369 = vadd.f32 %v337, %v353
      %v370 = vadd.f32 %v338, %v354
      %v371 = vadd.f32 %v339, %v355
      %v372 = vadd.f32 %v340, %v356
      %v373 = vadd.f32 %v341, %v357
      %374 = vst.msk [vmem:[#allocation11] sm:$0xff] %vm283, %v358
      %375 = vst.msk [vmem:[#allocation11 + $0x8] sm:$0xff] %vm283, %v359
      %376 = vst.msk [vmem:[#allocation11 + $0x10] sm:$0xff] %vm283, %v360
      %377 = vst.msk [vmem:[#allocation11 + $0x18] sm:$0xff] %vm283, %v361
      %378 = vst.msk [vmem:[#allocation11 + $0x20] sm:$0xff] %vm283, %v362
      %379 = vst.msk [vmem:[#allocation11 + $0x28] sm:$0xff] %vm283, %v363
      %380 = vst.msk [vmem:[#allocation11 + $0x30] sm:$0xff] %vm283, %v364
      %381 = vst.msk [vmem:[#allocation11 + $0x38] sm:$0xff] %vm283, %v365
      %382 = vst.msk [vmem:[#allocation11 + $0x40] sm:$0xff] %vm283, %v366
      %383 = vst.msk [vmem:[#allocation11 + $0x48] sm:$0xff] %vm283, %v367
      %384 = vst.msk [vmem:[#allocation11 + $0x50] sm:$0xff] %vm283, %v368
      %385 = vst.msk [vmem:[#allocation11 + $0x58] sm:$0xff] %vm283, %v369
      %386 = vst.msk [vmem:[#allocation11 + $0x60] sm:$0xff] %vm283, %v370
      %387 = vst.msk [vmem:[#allocation11 + $0x68] sm:$0xff] %vm283, %v371
      %388 = vst.msk [vmem:[#allocation11 + $0x70] sm:$0xff] %vm283, %v372
      %389 = vst.msk [vmem:[#allocation11 + $0x78] sm:$0xff] %vm283, %v373
    $region41: #{_lambda_.16} parent=1 // pred_fallthru
      _
    // Predicated region
    $region42: #{_lambda_.16} parent=1 // pred_check
      _
    $region43: #{_lambda_.16} parent=1 // pred_check_branch
      %391 = sbr.rel (0) target = $region45
    $region44: #{_lambda_.16} parent=1 // pred_region
      %s393 = ssub.s32 2048, 2048
      %394 = vsyncadd [#allocation5], %s393
      %s395 = sshll.u32 [#allocation11], 4
      %s396 = int_to_ptr.vmem [resolvable:$true] %s395
      %401 = dma.vmem_to_hbm [thread:$0]  %s396, 2048, %s4, [#allocation5], 128, 128, 8
    $region45: #{_lambda_.16} parent=1 // pred_fallthru
      _
    // Predicated region
    $region46: #{_lambda_.16} parent=1 // pred_check
      _
    $region47: #{_lambda_.16} parent=1 // pred_check_branch
      %403 = sbr.rel (0) target = $region49
    $region48: #{_lambda_.16} parent=1 // pred_region
      %404 = dma.done [#allocation5], 2048
    $region49: #{_lambda_.16} parent=1 // pred_fallthru
      _
    %405 = vsyncpa [#allocation4], 1
    %406 = vsyncpa [#allocation7], 1
    %407 = vsyncpa [#allocation10], 1
    %408 = vsyncpa [#allocation5], 1

</llo_original>
